<compile_context>
chip_gen: v7x
topology: tpu7x:2x2x1
jax: 0.10.0
libtpu: 0.0.40
codegen_flags: <defaults>
</compile_context>

<pallas_src>
import jax
import jax.numpy as jnp
from jax.experimental import pallas as pl
from jax.experimental.pallas import tpu as pltpu

NUM_CLASSES = 10
BN_EPS = 1e-5
HEAD_PAD = 128  # lane-dense padded width of the classification head
# (in_features, out_features) for the four Linear layers.
LAYER_DIMS = [(3072, 512), (512, 256), (256, 128), (128, NUM_CLASSES)]


def _mlp_kernel(
    x_ref,
    w1_ref, b1_ref,
    w2_ref, b2_ref,
    w3_ref, b3_ref,
    w4_ref, b4_ref,
    o_ref,
):
    """Fused (Linear+ReLU) x3 + Linear head for one batch tile.

    BN is pre-folded into W/b; Dropout is identity in eval mode. Dot operands
    are bf16 (MXU rate, halved weight/activation bytes); accumulation and all
    elementwise math are f32.
    """

    def linear(h_bf16, w_ref, b_ref):
        return (
            jnp.dot(h_bf16, w_ref[...], preferred_element_type=jnp.float32)
            + b_ref[...]
        )

    h = x_ref[...]                                    # (TB, 3072) bf16 stream
    h = jnp.maximum(linear(h, w1_ref, b1_ref), 0.0)   # (TB, 512) f32
    h = jnp.maximum(linear(h.astype(jnp.bfloat16), w2_ref, b2_ref), 0.0)  # 256
    h = jnp.maximum(linear(h.astype(jnp.bfloat16), w3_ref, b3_ref), 0.0)  # 128
    o_ref[...] = linear(h.astype(jnp.bfloat16), w4_ref, b4_ref).astype(o_ref.dtype)


def init_params(key):
    """PyTorch-equivalent parameters.

    Linear: kaiming_normal_ (fan_in, relu gain), zero bias; weights stored as
    (in_features, out_features). BatchNorm1d: gamma=1, beta=0, running mean=0,
    running var=1. Per-feature vectors kept as (1, F).
    """
    params = []
    keys = jax.random.split(key, len(LAYER_DIMS))
    for idx, (fan_in, fan_out) in enumerate(LAYER_DIMS):
        std = (2.0 / fan_in) ** 0.5
        w = std * jax.random.normal(keys[idx], (fan_in, fan_out), dtype=jnp.float32)
        b = jnp.zeros((1, fan_out), dtype=jnp.float32)
        layer = {"w": w, "b": b}
        if idx < len(LAYER_DIMS) - 1:  # first three blocks have BatchNorm1d
            layer["gamma"] = jnp.ones((1, fan_out), dtype=jnp.float32)
            layer["beta"] = jnp.zeros((1, fan_out), dtype=jnp.float32)
            layer["mean"] = jnp.zeros((1, fan_out), dtype=jnp.float32)
            layer["var"] = jnp.ones((1, fan_out), dtype=jnp.float32)
        params.append(layer)
    return params


def fold_bn_params(params):
    """Fold eval-mode BN into the Linear (in f32), pad the head to 128 lanes,
    then cast weights to bf16. Biases stay f32."""
    folded = []
    for idx, layer in enumerate(params):
        w = layer["w"].astype(jnp.float32)
        b = layer["b"].astype(jnp.float32)
        if idx < len(params) - 1:
            scale = layer["gamma"] * jax.lax.rsqrt(layer["var"] + BN_EPS)  # (1,out)
            w = w * scale
            b = (b - layer["mean"]) * scale + layer["beta"]
        else:
            pad = HEAD_PAD - w.shape[1]
            w = jnp.pad(w, ((0, 0), (0, pad)))
            b = jnp.pad(b, ((0, 0), (0, pad)))
        folded.append({"w": w.astype(jnp.bfloat16), "b": b})
    return folded


def _round_up(x, m):
    return (x + m - 1) // m * m


def _pick_batch_tile(batch):
    """Batch tile size.

    Large batches: 256-1024 rows per tile with at least two tiles (so the
    'parallel' batch axis can be split across both v7x TensorCores and the
    per-step overhead / DMA is amortized at ~85% of HBM roofline).
    Tiny batches: a single 16-aligned tile (bf16 sublane packing).
    """
    if batch < 512:
        return _round_up(batch, 16)
    half = _round_up((batch + 1) // 2, 256)
    return min(1024, half)


def _pick_vmem_limit():
    """48 MiB on v7x (64 MiB per-TC VMEM); 96 MiB on 128-MiB parts (v5e/v6e)."""
    try:
        info = pltpu.get_tpu_info()
        phys = getattr(info, "vmem_capacity_bytes", 64 * 1024 * 1024)
    except Exception:
        phys = 64 * 1024 * 1024
    if phys >= 128 * 1024 * 1024:
        return 96 * 1024 * 1024
    return 48 * 1024 * 1024


@jax.jit
def mlp_forward(x, folded_params):
    """x: (B, C, H, W) or (B, 3072). Returns (B, NUM_CLASSES) f32 logits."""
    batch = x.shape[0]
    in_feat = LAYER_DIMS[0][0]
    # x.view(x.size(0), -1); stream in bf16 (layer-1 dot consumes bf16 anyway).
    x2d = x.reshape(batch, -1).astype(jnp.bfloat16)
    assert x2d.shape[1] == in_feat, "flattened input must be 3072 features"

    tb = _pick_batch_tile(batch)
    padded_b = _round_up(batch, tb)
    if padded_b != batch:
        x2d = jnp.pad(x2d, ((0, padded_b - batch), (0, 0)))
    grid = (padded_b // tb,)

    flat_inputs = [x2d]
    in_specs = [pl.BlockSpec((tb, in_feat), lambda i: (i, 0))]
    for layer in folded_params:
        w, b = layer["w"], layer["b"]
        flat_inputs += [w, b]
        # Constant index_map -> weights/biases stay VMEM-resident across the
        # batch grid (DMA'd once). Buffered(1): no pointless double-buffering
        # of the resident blocks, freeing VMEM for the bigger activation tile.
        in_specs += [
            pl.BlockSpec(w.shape, lambda i: (0, 0),
                         pipeline_mode=pl.Buffered(buffer_count=1)),
            pl.BlockSpec(b.shape, lambda i: (0, 0),
                         pipeline_mode=pl.Buffered(buffer_count=1)),
        ]

    flops = 2 * padded_b * sum(fi * fo for fi, fo in LAYER_DIMS[:-1])
    flops += 2 * padded_b * LAYER_DIMS[-1][0] * HEAD_PAD
    weight_bytes = sum(
        l["w"].size * l["w"].dtype.itemsize + l["b"].size * l["b"].dtype.itemsize
        for l in folded_params
    )
    bytes_accessed = (
        weight_bytes + padded_b * in_feat * 2 + padded_b * HEAD_PAD * 4
    )

    out = pl.pallas_call(
        _mlp_kernel,
        out_shape=jax.ShapeDtypeStruct((padded_b, HEAD_PAD), jnp.float32),
        grid=grid,
        in_specs=in_specs,
        out_specs=pl.BlockSpec((tb, HEAD_PAD), lambda i: (i, 0)),
        compiler_params=pltpu.CompilerParams(
            dimension_semantics=("parallel",),
            vmem_limit_bytes=_pick_vmem_limit(),
        ),
        cost_estimate=pl.CostEstimate(
            flops=flops, transcendentals=0, bytes_accessed=bytes_accessed
        ),
    )(*flat_inputs)

    return out[:batch, :NUM_CLASSES]


def _reference_same_precision(x, folded_params):
    """Pure-JAX reference with the same bf16-dot / f32-accumulate precision."""
    h = x.reshape(x.shape[0], -1).astype(jnp.bfloat16)
    n = len(folded_params)
    acc = None
    for idx, layer in enumerate(folded_params):
        acc = (
            jnp.dot(h, layer["w"], preferred_element_type=jnp.float32)
            + layer["b"]
        )
        if idx < n - 1:
            h = jnp.maximum(acc, 0.0).astype(jnp.bfloat16)
    return acc[:, :NUM_CLASSES]


def _reference_f32(x, params):
    """Exact f32 eval-mode reference of the original (unfolded) module."""
    h = x.reshape(x.shape[0], -1).astype(jnp.float32)
    for idx, layer in enumerate(params):
        h = h @ layer["w"] + layer["b"]
        if idx < len(params) - 1:
            inv = jax.lax.rsqrt(layer["var"] + BN_EPS)
            h = (h - layer["mean"]) * inv * layer["gamma"] + layer["beta"]
            h = jnp.maximum(h, 0.0)
    return h


if __name__ == "__main__":
    key = jax.random.PRNGKey(0)
    key_x, key_p, key_big = jax.random.split(key, 3)

    params = init_params(key_p)
    folded = fold_bn_params(params)

    # CIFAR-like input: batch=4, 3x32x32 -> flattens to 3072 features.
    x = jax.random.normal(key_x, (4, 3, 32, 32), dtype=jnp.float32)
    out = jax.block_until_ready(mlp_forward(x, folded))
    assert out.shape == (4, NUM_CLASSES)

    # Tight check vs a same-precision (bf16-dot, f32-accum) pure-JAX reference.
    ref_same = _reference_same_precision(x, folded)
    assert jnp.allclose(out, ref_same, atol=1e-3, rtol=1e-3), \
        "mismatch vs same-precision JAX reference"

    # Loose check vs the exact f32 eval-mode module semantics (bf16 rounding).
    ref_f32 = _reference_f32(x, params)
    assert jnp.allclose(out, ref_f32, atol=1e-1, rtol=1e-1), \
        "mismatch vs f32 module reference"

    # Larger batch to exercise the perf-review path: TB=512, grid=(2,) with
    # single-buffered (Buffered(1)) VMEM-resident weights and bf16 input stream.
    xb = jax.random.normal(key_big, (1024, 3072), dtype=jnp.float32)
    out_b = jax.block_until_ready(mlp_forward(xb, folded))
    assert out_b.shape == (1024, NUM_CLASSES)
    ref_b = _reference_same_precision(xb, folded)
    assert jnp.allclose(out_b, ref_b, atol=1e-3, rtol=1e-3), \
        "mismatch vs same-precision JAX reference (large batch)"

    print("KERNEL_OK")
</pallas_src>

<mosaic_0001>
module attributes {stable_mosaic.version = 11 : i64} {
  func.func @_mlp_kernel(%arg0: i32, %arg1: memref<16x3072xbf16, #tpu.memory_space<vmem>>, %arg2: memref<3072x512xbf16, #tpu.memory_space<vmem>>, %arg3: memref<1x512xf32, #tpu.memory_space<vmem>>, %arg4: memref<512x256xbf16, #tpu.memory_space<vmem>>, %arg5: memref<1x256xf32, #tpu.memory_space<vmem>>, %arg6: memref<256x128xbf16, #tpu.memory_space<vmem>>, %arg7: memref<1x128xf32, #tpu.memory_space<vmem>>, %arg8: memref<128x128xbf16, #tpu.memory_space<vmem>>, %arg9: memref<1x128xf32, #tpu.memory_space<vmem>>, %arg10: memref<16x128xf32, #tpu.memory_space<vmem>>) attributes {dimension_semantics = [#tpu.dimension_semantics<parallel>], iteration_bounds = array<i64: 1>, scalar_prefetch = 0 : i64, scratch_operands = 0 : i64, tpu.core_type = #tpu.core_type<tc>, window_params = [{transform_indices = @transform_0, window_bounds = array<i64: 16, 3072>}, {pipeline_mode = #tpu.pipeline_mode<synchronous>, transform_indices = @transform_1, window_bounds = array<i64: 3072, 512>}, {pipeline_mode = #tpu.pipeline_mode<synchronous>, transform_indices = @transform_2, window_bounds = array<i64: 1, 512>}, {pipeline_mode = #tpu.pipeline_mode<synchronous>, transform_indices = @transform_3, window_bounds = array<i64: 512, 256>}, {pipeline_mode = #tpu.pipeline_mode<synchronous>, transform_indices = @transform_4, window_bounds = array<i64: 1, 256>}, {pipeline_mode = #tpu.pipeline_mode<synchronous>, transform_indices = @transform_5, window_bounds = array<i64: 256, 128>}, {pipeline_mode = #tpu.pipeline_mode<synchronous>, transform_indices = @transform_6, window_bounds = array<i64: 1, 128>}, {pipeline_mode = #tpu.pipeline_mode<synchronous>, transform_indices = @transform_7, window_bounds = array<i64: 128, 128>}, {pipeline_mode = #tpu.pipeline_mode<synchronous>, transform_indices = @transform_8, window_bounds = array<i64: 1, 128>}, {transform_indices = @transform_9, window_bounds = array<i64: 16, 128>}]} {
    %c0 = arith.constant 0 : index
    %c0_0 = arith.constant 0 : index
    %0 = vector.load %arg1[%c0, %c0_0] : memref<16x3072xbf16, #tpu.memory_space<vmem>>, vector<16x3072xbf16>
    %c0_1 = arith.constant 0 : index
    %c0_2 = arith.constant 0 : index
    %1 = vector.load %arg2[%c0_1, %c0_2] : memref<3072x512xbf16, #tpu.memory_space<vmem>>, vector<3072x512xbf16>
    %cst = arith.constant dense<0.000000e+00> : vector<16x512xf32>
    %2 = tpu.matmul %0, %1, %cst {dimension_numbers = #tpu.dot_dimension_numbers<[1], [0], [0], [1], [0, 0, 1, 1], [], []>} : vector<16x3072xbf16>, vector<3072x512xbf16>, vector<16x512xf32> -> vector<16x512xf32>
    %c0_3 = arith.constant 0 : index
    %c0_4 = arith.constant 0 : index
    %3 = vector.load %arg3[%c0_3, %c0_4] : memref<1x512xf32, #tpu.memory_space<vmem>>, vector<1x512xf32>
    %4 = vector.broadcast %3 : vector<1x512xf32> to vector<16x512xf32>
    %5 = arith.addf %2, %4 : vector<16x512xf32>
    %cst_5 = arith.constant 0.000000e+00 : f32
    %6 = vector.broadcast %cst_5 : f32 to vector<16x512xf32>
    %7 = arith.maximumf %5, %6 : vector<16x512xf32>
    %8 = arith.truncf %7 : vector<16x512xf32> to vector<16x512xbf16>
    %c0_6 = arith.constant 0 : index
    %c0_7 = arith.constant 0 : index
    %9 = vector.load %arg4[%c0_6, %c0_7] : memref<512x256xbf16, #tpu.memory_space<vmem>>, vector<512x256xbf16>
    %cst_8 = arith.constant dense<0.000000e+00> : vector<16x256xf32>
    %10 = tpu.matmul %8, %9, %cst_8 {dimension_numbers = #tpu.dot_dimension_numbers<[1], [0], [0], [1], [0, 0, 1, 1], [], []>} : vector<16x512xbf16>, vector<512x256xbf16>, vector<16x256xf32> -> vector<16x256xf32>
    %c0_9 = arith.constant 0 : index
    %c0_10 = arith.constant 0 : index
    %11 = vector.load %arg5[%c0_9, %c0_10] : memref<1x256xf32, #tpu.memory_space<vmem>>, vector<1x256xf32>
    %12 = vector.broadcast %11 : vector<1x256xf32> to vector<16x256xf32>
    %13 = arith.addf %10, %12 : vector<16x256xf32>
    %cst_11 = arith.constant 0.000000e+00 : f32
    %14 = vector.broadcast %cst_11 : f32 to vector<16x256xf32>
    %15 = arith.maximumf %13, %14 : vector<16x256xf32>
    %16 = arith.truncf %15 : vector<16x256xf32> to vector<16x256xbf16>
    %c0_12 = arith.constant 0 : index
    %c0_13 = arith.constant 0 : index
    %17 = vector.load %arg6[%c0_12, %c0_13] : memref<256x128xbf16, #tpu.memory_space<vmem>>, vector<256x128xbf16>
    %cst_14 = arith.constant dense<0.000000e+00> : vector<16x128xf32>
    %18 = tpu.matmul %16, %17, %cst_14 {dimension_numbers = #tpu.dot_dimension_numbers<[1], [0], [0], [1], [0, 0, 1, 1], [], []>} : vector<16x256xbf16>, vector<256x128xbf16>, vector<16x128xf32> -> vector<16x128xf32>
    %c0_15 = arith.constant 0 : index
    %c0_16 = arith.constant 0 : index
    %19 = vector.load %arg7[%c0_15, %c0_16] : memref<1x128xf32, #tpu.memory_space<vmem>>, vector<1x128xf32>
    %20 = vector.broadcast %19 : vector<1x128xf32> to vector<16x128xf32>
    %21 = arith.addf %18, %20 : vector<16x128xf32>
    %cst_17 = arith.constant 0.000000e+00 : f32
    %22 = vector.broadcast %cst_17 : f32 to vector<16x128xf32>
    %23 = arith.maximumf %21, %22 : vector<16x128xf32>
    %24 = arith.truncf %23 : vector<16x128xf32> to vector<16x128xbf16>
    %c0_18 = arith.constant 0 : index
    %c0_19 = arith.constant 0 : index
    %25 = vector.load %arg8[%c0_18, %c0_19] : memref<128x128xbf16, #tpu.memory_space<vmem>>, vector<128x128xbf16>
    %cst_20 = arith.constant dense<0.000000e+00> : vector<16x128xf32>
    %26 = tpu.matmul %24, %25, %cst_20 {dimension_numbers = #tpu.dot_dimension_numbers<[1], [0], [0], [1], [0, 0, 1, 1], [], []>} : vector<16x128xbf16>, vector<128x128xbf16>, vector<16x128xf32> -> vector<16x128xf32>
    %c0_21 = arith.constant 0 : index
    %c0_22 = arith.constant 0 : index
    %27 = vector.load %arg9[%c0_21, %c0_22] : memref<1x128xf32, #tpu.memory_space<vmem>>, vector<1x128xf32>
    %28 = vector.broadcast %27 : vector<1x128xf32> to vector<16x128xf32>
    %29 = arith.addf %26, %28 : vector<16x128xf32>
    %c0_23 = arith.constant 0 : index
    %c0_24 = arith.constant 0 : index
    %30 = vector.load %arg10[%c0_23, %c0_24] : memref<16x128xf32, #tpu.memory_space<vmem>>, vector<16x128xf32>
    tpu.vector_store %arg10[%c0_23, %c0_24], %29 {strides = array<i32>} : memref<16x128xf32, #tpu.memory_space<vmem>>, vector<16x128xf32>,
    return
  }
  func.func @transform_0(%arg0: i32) -> (i32, i32) {
    %c0_i32 = arith.constant 0 : i32
    %c0_i32_0 = arith.constant 0 : i32
    return %arg0, %c0_i32 : i32, i32
  }
  func.func @transform_1(%arg0: i32) -> (i32, i32) {
    %c0_i32 = arith.constant 0 : i32
    %c0_i32_0 = arith.constant 0 : i32
    %c0_i32_1 = arith.constant 0 : i32
    return %c0_i32, %c0_i32_0 : i32, i32
  }
  func.func @transform_2(%arg0: i32) -> (i32, i32) {
    %c0_i32 = arith.constant 0 : i32
    %c0_i32_0 = arith.constant 0 : i32
    %c0_i32_1 = arith.constant 0 : i32
    return %c0_i32, %c0_i32_0 : i32, i32
  }
  func.func @transform_3(%arg0: i32) -> (i32, i32) {
    %c0_i32 = arith.constant 0 : i32
    %c0_i32_0 = arith.constant 0 : i32
    %c0_i32_1 = arith.constant 0 : i32
    return %c0_i32, %c0_i32_0 : i32, i32
  }
  func.func @transform_4(%arg0: i32) -> (i32, i32) {
    %c0_i32 = arith.constant 0 : i32
    %c0_i32_0 = arith.constant 0 : i32
    %c0_i32_1 = arith.constant 0 : i32
    return %c0_i32, %c0_i32_0 : i32, i32
  }
  func.func @transform_5(%arg0: i32) -> (i32, i32) {
    %c0_i32 = arith.constant 0 : i32
    %c0_i32_0 = arith.constant 0 : i32
    %c0_i32_1 = arith.constant 0 : i32
    return %c0_i32, %c0_i32_0 : i32, i32
  }
  func.func @transform_6(%arg0: i32) -> (i32, i32) {
    %c0_i32 = arith.constant 0 : i32
    %c0_i32_0 = arith.constant 0 : i32
    %c0_i32_1 = arith.constant 0 : i32
    return %c0_i32, %c0_i32_0 : i32, i32
  }
  func.func @transform_7(%arg0: i32) -> (i32, i32) {
    %c0_i32 = arith.constant 0 : i32
    %c0_i32_0 = arith.constant 0 : i32
    %c0_i32_1 = arith.constant 0 : i32
    return %c0_i32, %c0_i32_0 : i32, i32
  }
  func.func @transform_8(%arg0: i32) -> (i32, i32) {
    %c0_i32 = arith.constant 0 : i32
    %c0_i32_0 = arith.constant 0 : i32
    %c0_i32_1 = arith.constant 0 : i32
    return %c0_i32, %c0_i32_0 : i32, i32
  }
  func.func @transform_9(%arg0: i32) -> (i32, i32) {
    %c0_i32 = arith.constant 0 : i32
    %c0_i32_0 = arith.constant 0 : i32
    return %arg0, %c0_i32 : i32, i32
  }
}

</mosaic_0001>

<llo_original>
// kernel: mlp_forward.1
$region0: #{mlp_forward.1}
  #allocation0 [shape = 'u32[]', space=smem, size = 0x4, offset = 0x4, fixed_abs, tag = 'smem constant byte address 0x4 - core index']
  #allocation1 [shape = 'u32[144,128]{1,0:T(1,128)}', space=vmem, size = 0x12000, scoped, tag = 'internal scratch']
  %s0 = inlined_call_operand.vmem [shape: bf16[16,3072], index: 0, kind: input, shape index: {}]
  %s1 = inlined_call_operand.hbm [shape: bf16[3072,512], index: 1, kind: input, shape index: {}]
  %s2 = inlined_call_operand.hbm [shape: f32[1,512], index: 2, kind: input, shape index: {}]
  %s3 = inlined_call_operand.hbm [shape: bf16[512,256], index: 3, kind: input, shape index: {}]
  %s4 = inlined_call_operand.hbm [shape: f32[1,256], index: 4, kind: input, shape index: {}]
  %s5 = inlined_call_operand.hbm [shape: bf16[256,128], index: 5, kind: input, shape index: {}]
  %s6 = inlined_call_operand.hbm [shape: f32[1,128], index: 6, kind: input, shape index: {}]
  %s7 = inlined_call_operand.hbm [shape: bf16[128,128], index: 7, kind: input, shape index: {}]
  %s8 = inlined_call_operand.hbm [shape: f32[1,128], index: 8, kind: input, shape index: {}]
  %s9 = inlined_call_operand.vmem [shape: f32[16,128], index: 9, kind: output, shape index: {}]
  %s10 = sld [smem:[#allocation0]]
  $region78: #{mlp_forward.1} parent=0
    _
  %s12 = ssub.s32 1, %s10
  %s13 = scalar_select 0, %s12, %s10
  $region1: #{mlp_forward.1} parent=0
    #allocation2 [shape = 'u8[3145728]{0}', space=vmem, size = 0x300000, scoped, tag = 'input window, operand 1, single buffered']
    #allocation3 [shape = 's32[1]{0}', space=sflag, size = 0x4, scoped, tag = 'scoped memory for mlp_forward.1']
    #allocation4 [shape = 'u8[2048]{0}', space=vmem, size = 0x800, scoped, tag = 'input window, operand 2, single buffered']
    #allocation5 [shape = 's32[1]{0}', space=sflag, size = 0x4, scoped, tag = 'scoped memory for mlp_forward.1']
    #allocation6 [shape = 'u8[262144]{0}', space=vmem, size = 0x40000, scoped, tag = 'input window, operand 3, single buffered']
    #allocation7 [shape = 'u8[1024]{0}', space=vmem, size = 0x400, scoped, tag = 'input window, operand 4, single buffered']
    #allocation8 [shape = 's32[1]{0}', space=sflag, size = 0x4, scoped, tag = 'scoped memory for mlp_forward.1']
    #allocation9 [shape = 'u8[65536]{0}', space=vmem, size = 0x10000, scoped, tag = 'input window, operand 5, single buffered']
    #allocation10 [shape = 'u8[512]{0}', space=vmem, size = 0x400, scoped, tag = 'input window, operand 6, single buffered']
    #allocation11 [shape = 's32[1]{0}', space=sflag, size = 0x4, scoped, tag = 'scoped memory for mlp_forward.1']
    #allocation12 [shape = 'u8[32768]{0}', space=vmem, size = 0x8000, scoped, tag = 'input window, operand 7, single buffered']
    #allocation13 [shape = 'u8[512]{0}', space=vmem, size = 0x400, scoped, tag = 'input window, operand 8, single buffered']
    #allocation14 [shape = 's32[1]{0}', space=sflag, size = 0x4, scoped, tag = 'scoped memory for mlp_forward.1']
    %14 = vsyncpa [#allocation3], 0
    %15 = vsyncpa [#allocation5], 0
    %16 = vsyncpa [#allocation8], 0
    %17 = vsyncpa [#allocation11], 0
    %18 = vsyncpa [#allocation14], 0
    // Predicated region
    $region2: #{mlp_forward.1} parent=1 // pred_check
      _
    $region3: #{mlp_forward.1} parent=1 // pred_check_branch
      %20 = sbr.rel (0) target = $region5
    $region4: #{mlp_forward.1} parent=1 // pred_region
      _
    $region5: #{mlp_forward.1} parent=1 // pred_fallthru
      _
    // Predicated region
    $region6: #{mlp_forward.1} parent=1 // pred_check
      _
    $region7: #{mlp_forward.1} parent=1 // pred_check_branch
      %22 = sbr.rel (0) target = $region9
    $region8: #{mlp_forward.1} parent=1 // pred_region
      %s24 = ssub.s32 98304, 98304
      %25 = vsyncadd [#allocation3], %s24
      %s26 = sshll.u32 [#allocation2], 4
      %s27 = int_to_ptr.vmem [resolvable:$true] %s26
      %32 = dma.hbm_to_vmem [thread:$0]  %s1, 98304, %s27, [#allocation3], 256, 256, 16
    $region9: #{mlp_forward.1} parent=1 // pred_fallthru
      _
    // Predicated region
    $region10: #{mlp_forward.1} parent=1 // pred_check
      _
    $region11: #{mlp_forward.1} parent=1 // pred_check_branch
      %34 = sbr.rel (0) target = $region13
    $region12: #{mlp_forward.1} parent=1 // pred_region
      %s36 = ssub.s32 64, 64
      %37 = vsyncadd [#allocation5], %s36
      %s39 = sshll.u32 [#allocation4], 4
      %s40 = int_to_ptr.vmem [resolvable:$true] %s39
      %42 = dma.hbm_to_vmem [thread:$0]  %s2, 64, %s40, [#allocation5]
    $region13: #{mlp_forward.1} parent=1 // pred_fallthru
      _
    // Predicated region
    $region14: #{mlp_forward.1} parent=1 // pred_check
      _
    $region15: #{mlp_forward.1} parent=1 // pred_check_branch
      %44 = sbr.rel (0) target = $region17
    $region16: #{mlp_forward.1} parent=1 // pred_region
      %s46 = ssub.s32 8192, 8192
      %47 = vsyncadd [#allocation5], %s46
      %s48 = sshll.u32 [#allocation6], 4
      %s49 = int_to_ptr.vmem [resolvable:$true] %s48
      %54 = dma.hbm_to_vmem [thread:$0]  %s3, 8192, %s49, [#allocation5], 128, 128, 8
    $region17: #{mlp_forward.1} parent=1 // pred_fallthru
      _
    // Predicated region
    $region18: #{mlp_forward.1} parent=1 // pred_check
      _
    $region19: #{mlp_forward.1} parent=1 // pred_check_branch
      %56 = sbr.rel (0) target = $region21
    $region20: #{mlp_forward.1} parent=1 // pred_region
      %s58 = ssub.s32 32, 32
      %59 = vsyncadd [#allocation8], %s58
      %s61 = sshll.u32 [#allocation7], 4
      %s62 = int_to_ptr.vmem [resolvable:$true] %s61
      %64 = dma.hbm_to_vmem [thread:$0]  %s4, 32, %s62, [#allocation8]
    $region21: #{mlp_forward.1} parent=1 // pred_fallthru
      _
    // Predicated region
    $region22: #{mlp_forward.1} parent=1 // pred_check
      _
    $region23: #{mlp_forward.1} parent=1 // pred_check_branch
      %66 = sbr.rel (0) target = $region25
    $region24: #{mlp_forward.1} parent=1 // pred_region
      %s68 = ssub.s32 2048, 2048
      %69 = vsyncadd [#allocation8], %s68
      %s70 = sshll.u32 [#allocation9], 4
      %s71 = int_to_ptr.vmem [resolvable:$true] %s70
      %76 = dma.hbm_to_vmem [thread:$0]  %s5, 2048, %s71, [#allocation8], 64, 64, 4
    $region25: #{mlp_forward.1} parent=1 // pred_fallthru
      _
    // Predicated region
    $region26: #{mlp_forward.1} parent=1 // pred_check
      _
    $region27: #{mlp_forward.1} parent=1 // pred_check_branch
      %78 = sbr.rel (0) target = $region29
    $region28: #{mlp_forward.1} parent=1 // pred_region
      %s80 = ssub.s32 16, 16
      %81 = vsyncadd [#allocation11], %s80
      %s83 = sshll.u32 [#allocation10], 4
      %s84 = int_to_ptr.vmem [resolvable:$true] %s83
      %86 = dma.hbm_to_vmem [thread:$0]  %s6, 16, %s84, [#allocation11]
    $region29: #{mlp_forward.1} parent=1 // pred_fallthru
      _
    // Predicated region
    $region30: #{mlp_forward.1} parent=1 // pred_check
      _
    $region31: #{mlp_forward.1} parent=1 // pred_check_branch
      %88 = sbr.rel (0) target = $region33
    $region32: #{mlp_forward.1} parent=1 // pred_region
      %s90 = ssub.s32 1024, 1024
      %91 = vsyncadd [#allocation11], %s90
      %s92 = sshll.u32 [#allocation12], 4
      %s93 = int_to_ptr.vmem [resolvable:$true] %s92
      %98 = dma.hbm_to_vmem [thread:$0]  %s7, 1024, %s93, [#allocation11], 64, 64, 4
    $region33: #{mlp_forward.1} parent=1 // pred_fallthru
      _
    // Predicated region
    $region34: #{mlp_forward.1} parent=1 // pred_check
      _
    $region35: #{mlp_forward.1} parent=1 // pred_check_branch
      %100 = sbr.rel (0) target = $region37
    $region36: #{mlp_forward.1} parent=1 // pred_region
      %s102 = ssub.s32 16, 16
      %103 = vsyncadd [#allocation14], %s102
      %s105 = sshll.u32 [#allocation13], 4
      %s106 = int_to_ptr.vmem [resolvable:$true] %s105
      %108 = dma.hbm_to_vmem [thread:$0]  %s8, 16, %s106, [#allocation14]
    $region37: #{mlp_forward.1} parent=1 // pred_fallthru
      _
    // Predicated region
    $region38: #{mlp_forward.1} parent=1 // pred_check
      _
    $region39: #{mlp_forward.1} parent=1 // pred_check_branch
      %110 = sbr.rel (0) target = $region41
    $region40: #{mlp_forward.1} parent=1 // pred_region
      %111 = dma.done [#allocation3], 98304
    $region41: #{mlp_forward.1} parent=1 // pred_fallthru
      _
    // Predicated region
    $region42: #{mlp_forward.1} parent=1 // pred_check
      _
    $region43: #{mlp_forward.1} parent=1 // pred_check_branch
      %113 = sbr.rel (0) target = $region45
    $region44: #{mlp_forward.1} parent=1 // pred_region
      %114 = dma.done [#allocation5], 64
    $region45: #{mlp_forward.1} parent=1 // pred_fallthru
      _
    // Predicated region
    $region46: #{mlp_forward.1} parent=1 // pred_check
      _
    $region47: #{mlp_forward.1} parent=1 // pred_check_branch
      %116 = sbr.rel (0) target = $region49
    $region48: #{mlp_forward.1} parent=1 // pred_region
      %117 = dma.done [#allocation5], 8192
    $region49: #{mlp_forward.1} parent=1 // pred_fallthru
      _
    // Predicated region
    $region50: #{mlp_forward.1} parent=1 // pred_check
      _
    $region51: #{mlp_forward.1} parent=1 // pred_check_branch
      %119 = sbr.rel (0) target = $region53
    $region52: #{mlp_forward.1} parent=1 // pred_region
      %120 = dma.done [#allocation8], 32
    $region53: #{mlp_forward.1} parent=1 // pred_fallthru
      _
    // Predicated region
    $region54: #{mlp_forward.1} parent=1 // pred_check
      _
    $region55: #{mlp_forward.1} parent=1 // pred_check_branch
      %122 = sbr.rel (0) target = $region57
    $region56: #{mlp_forward.1} parent=1 // pred_region
      %123 = dma.done [#allocation8], 2048
    $region57: #{mlp_forward.1} parent=1 // pred_fallthru
      _
    // Predicated region
    $region58: #{mlp_forward.1} parent=1 // pred_check
      _
    $region59: #{mlp_forward.1} parent=1 // pred_check_branch
      %125 = sbr.rel (0) target = $region61
    $region60: #{mlp_forward.1} parent=1 // pred_region
      %126 = dma.done [#allocation11], 16
    $region61: #{mlp_forward.1} parent=1 // pred_fallthru
      _
    // Predicated region
    $region62: #{mlp_forward.1} parent=1 // pred_check
      _
    $region63: #{mlp_forward.1} parent=1 // pred_check_branch
      %128 = sbr.rel (0) target = $region65
    $region64: #{mlp_forward.1} parent=1 // pred_region
      %129 = dma.done [#allocation11], 1024
    $region65: #{mlp_forward.1} parent=1 // pred_fallthru
      _
    // Predicated region
    $region66: #{mlp_forward.1} parent=1 // pred_check
      _
    $region67: #{mlp_forward.1} parent=1 // pred_check_branch
      %131 = sbr.rel (0) target = $region69
    $region68: #{mlp_forward.1} parent=1 // pred_region
      %132 = dma.done [#allocation14], 16
    $region69: #{mlp_forward.1} parent=1 // pred_fallthru
      _
    %v134 = vld [vmem:[%s0] sm:$0xff]
    %v135 = vld [vmem:[%s0 + $0x8] sm:$0xff]
    %v136 = vld [vmem:[%s0 + $0x10] sm:$0xff]
    %v137 = vld [vmem:[%s0 + $0x18] sm:$0xff]
    %v138 = vld [vmem:[%s0 + $0x20] sm:$0xff]
    %v139 = vld [vmem:[%s0 + $0x28] sm:$0xff]
    %v140 = vld [vmem:[%s0 + $0x30] sm:$0xff]
    %v141 = vld [vmem:[%s0 + $0x38] sm:$0xff]
    %v142 = vld [vmem:[%s0 + $0x40] sm:$0xff]
    %v143 = vld [vmem:[%s0 + $0x48] sm:$0xff]
    %v144 = vld [vmem:[%s0 + $0x50] sm:$0xff]
    %v145 = vld [vmem:[%s0 + $0x58] sm:$0xff]
    %v146 = vld [vmem:[%s0 + $0x60] sm:$0xff]
    %v147 = vld [vmem:[%s0 + $0x68] sm:$0xff]
    %v148 = vld [vmem:[%s0 + $0x70] sm:$0xff]
    %v149 = vld [vmem:[%s0 + $0x78] sm:$0xff]
    %v150 = vld [vmem:[%s0 + $0x80] sm:$0xff]
    %v151 = vld [vmem:[%s0 + $0x88] sm:$0xff]
    %v152 = vld [vmem:[%s0 + $0x90] sm:$0xff]
    %v153 = vld [vmem:[%s0 + $0x98] sm:$0xff]
    %v154 = vld [vmem:[%s0 + $0xa0] sm:$0xff]
    %v155 = vld [vmem:[%s0 + $0xa8] sm:$0xff]
    %v156 = vld [vmem:[%s0 + $0xb0] sm:$0xff]
    %v157 = vld [vmem:[%s0 + $0xb8] sm:$0xff]
    %v158 = vld [vmem:[#allocation2] sm:$0xff]
    %v159 = vld [vmem:[#allocation2 + $0x8] sm:$0xff]
    %v160 = vld [vmem:[#allocation2 + $0x10] sm:$0xff]
    %v161 = vld [vmem:[#allocation2 + $0x18] sm:$0xff]
    %v162 = vld [vmem:[#allocation2 + $0x20] sm:$0xff]
    %v163 = vld [vmem:[#allocation2 + $0x28] sm:$0xff]
    %v164 = vld [vmem:[#allocation2 + $0x30] sm:$0xff]
    %v165 = vld [vmem:[#allocation2 + $0x38] sm:$0xff]
    %v166 = vld [vmem:[#allocation2 + $0x40] sm:$0xff]
    %v167 = vld [vmem:[#allocation2 + $0x48] sm:$0xff]
    %v168 = vld [vmem:[#allocation2 + $0x50] sm:$0xff]
    %v169 = vld [vmem:[#allocation2 + $0x58] sm:$0xff]
    %v170 = vld [vmem:[#allocation2 + $0x60] sm:$0xff]
    %v171 = vld [vmem:[#allocation2 + $0x68] sm:$0xff]
    %v172 = vld [vmem:[#allocation2 + $0x70] sm:$0xff]
    %v173 = vld [vmem:[#allocation2 + $0x78] sm:$0xff]
    %v174 = vld [vmem:[#allocation2 + $0x80] sm:$0xff]
    %v175 = vld [vmem:[#allocation2 + $0x88] sm:$0xff]
    %v176 = vld [vmem:[#allocation2 + $0x90] sm:$0xff]
    %v177 = vld [vmem:[#allocation2 + $0x98] sm:$0xff]
    %v178 = vld [vmem:[#allocation2 + $0xa0] sm:$0xff]
    %v179 = vld [vmem:[#allocation2 + $0xa8] sm:$0xff]
    %v180 = vld [vmem:[#allocation2 + $0xb0] sm:$0xff]
    %v181 = vld [vmem:[#allocation2 + $0xb8] sm:$0xff]
    %v182 = vld [vmem:[#allocation2 + $0xc0] sm:$0xff]
    %v183 = vld [vmem:[#allocation2 + $0xc8] sm:$0xff]
    %v184 = vld [vmem:[#allocation2 + $0xd0] sm:$0xff]
    %v185 = vld [vmem:[#allocation2 + $0xd8] sm:$0xff]
    %v186 = vld [vmem:[#allocation2 + $0xe0] sm:$0xff]
    %v187 = vld [vmem:[#allocation2 + $0xe8] sm:$0xff]
    %v188 = vld [vmem:[#allocation2 + $0xf0] sm:$0xff]
    %v189 = vld [vmem:[#allocation2 + $0xf8] sm:$0xff]
    %v190 = vld [vmem:[#allocation2 + $0x100] sm:$0xff]
    %v191 = vld [vmem:[#allocation2 + $0x108] sm:$0xff]
    %v192 = vld [vmem:[#allocation2 + $0x110] sm:$0xff]
    %v193 = vld [vmem:[#allocation2 + $0x118] sm:$0xff]
    %v194 = vld [vmem:[#allocation2 + $0x120] sm:$0xff]
    %v195 = vld [vmem:[#allocation2 + $0x128] sm:$0xff]
    %v196 = vld [vmem:[#allocation2 + $0x130] sm:$0xff]
    %v197 = vld [vmem:[#allocation2 + $0x138] sm:$0xff]
    %v198 = vld [vmem:[#allocation2 + $0x140] sm:$0xff]
    %v199 = vld [vmem:[#allocation2 + $0x148] sm:$0xff]
    %v200 = vld [vmem:[#allocation2 + $0x150] sm:$0xff]
    %v201 = vld [vmem:[#allocation2 + $0x158] sm:$0xff]
    %v202 = vld [vmem:[#allocation2 + $0x160] sm:$0xff]
    %v203 = vld [vmem:[#allocation2 + $0x168] sm:$0xff]
    %v204 = vld [vmem:[#allocation2 + $0x170] sm:$0xff]
    %v205 = vld [vmem:[#allocation2 + $0x178] sm:$0xff]
    %v206 = vld [vmem:[#allocation2 + $0x180] sm:$0xff]
    %v207 = vld [vmem:[#allocation2 + $0x188] sm:$0xff]
    %v208 = vld [vmem:[#allocation2 + $0x190] sm:$0xff]
    %v209 = vld [vmem:[#allocation2 + $0x198] sm:$0xff]
    %v210 = vld [vmem:[#allocation2 + $0x1a0] sm:$0xff]
    %v211 = vld [vmem:[#allocation2 + $0x1a8] sm:$0xff]
    %v212 = vld [vmem:[#allocation2 + $0x1b0] sm:$0xff]
    %v213 = vld [vmem:[#allocation2 + $0x1b8] sm:$0xff]
    %v214 = vld [vmem:[#allocation2 + $0x1c0] sm:$0xff]
    %v215 = vld [vmem:[#allocation2 + $0x1c8] sm:$0xff]
    %v216 = vld [vmem:[#allocation2 + $0x1d0] sm:$0xff]
    %v217 = vld [vmem:[#allocation2 + $0x1d8] sm:$0xff]
    %v218 = vld [vmem:[#allocation2 + $0x1e0] sm:$0xff]
    %v219 = vld [vmem:[#allocation2 + $0x1e8] sm:$0xff]
    %v220 = vld [vmem:[#allocation2 + $0x1f0] sm:$0xff]
    %v221 = vld [vmem:[#allocation2 + $0x1f8] sm:$0xff]
    %v222 = vld [vmem:[#allocation2 + $0x200] sm:$0xff]
    %v223 = vld [vmem:[#allocation2 + $0x208] sm:$0xff]
    %v224 = vld [vmem:[#allocation2 + $0x210] sm:$0xff]
    %v225 = vld [vmem:[#allocation2 + $0x218] sm:$0xff]
    %v226 = vld [vmem:[#allocation2 + $0x220] sm:$0xff]
    %v227 = vld [vmem:[#allocation2 + $0x228] sm:$0xff]
    %v228 = vld [vmem:[#allocation2 + $0x230] sm:$0xff]
    %v229 = vld [vmem:[#allocation2 + $0x238] sm:$0xff]
    %v230 = vld [vmem:[#allocation2 + $0x240] sm:$0xff]
    %v231 = vld [vmem:[#allocation2 + $0x248] sm:$0xff]
    %v232 = vld [vmem:[#allocation2 + $0x250] sm:$0xff]
    %v233 = vld [vmem:[#allocation2 + $0x258] sm:$0xff]
    %v234 = vld [vmem:[#allocation2 + $0x260] sm:$0xff]
    %v235 = vld [vmem:[#allocation2 + $0x268] sm:$0xff]
    %v236 = vld [vmem:[#allocation2 + $0x270] sm:$0xff]
    %v237 = vld [vmem:[#allocation2 + $0x278] sm:$0xff]
    %v238 = vld [vmem:[#allocation2 + $0x280] sm:$0xff]
    %v239 = vld [vmem:[#allocation2 + $0x288] sm:$0xff]
    %v240 = vld [vmem:[#allocation2 + $0x290] sm:$0xff]
    %v241 = vld [vmem:[#allocation2 + $0x298] sm:$0xff]
    %v242 = vld [vmem:[#allocation2 + $0x2a0] sm:$0xff]
    %v243 = vld [vmem:[#allocation2 + $0x2a8] sm:$0xff]
    %v244 = vld [vmem:[#allocation2 + $0x2b0] sm:$0xff]
    %v245 = vld [vmem:[#allocation2 + $0x2b8] sm:$0xff]
    %v246 = vld [vmem:[#allocation2 + $0x2c0] sm:$0xff]
    %v247 = vld [vmem:[#allocation2 + $0x2c8] sm:$0xff]
    %v248 = vld [vmem:[#allocation2 + $0x2d0] sm:$0xff]
    %v249 = vld [vmem:[#allocation2 + $0x2d8] sm:$0xff]
    %v250 = vld [vmem:[#allocation2 + $0x2e0] sm:$0xff]
    %v251 = vld [vmem:[#allocation2 + $0x2e8] sm:$0xff]
    %v252 = vld [vmem:[#allocation2 + $0x2f0] sm:$0xff]
    %v253 = vld [vmem:[#allocation2 + $0x2f8] sm:$0xff]
    %v254 = vld [vmem:[#allocation2 + $0x300] sm:$0xff]
    %v255 = vld [vmem:[#allocation2 + $0x308] sm:$0xff]
    %v256 = vld [vmem:[#allocation2 + $0x310] sm:$0xff]
    %v257 = vld [vmem:[#allocation2 + $0x318] sm:$0xff]
    %v258 = vld [vmem:[#allocation2 + $0x320] sm:$0xff]
    %v259 = vld [vmem:[#allocation2 + $0x328] sm:$0xff]
    %v260 = vld [vmem:[#allocation2 + $0x330] sm:$0xff]
    %v261 = vld [vmem:[#allocation2 + $0x338] sm:$0xff]
    %v262 = vld [vmem:[#allocation2 + $0x340] sm:$0xff]
    %v263 = vld [vmem:[#allocation2 + $0x348] sm:$0xff]
    %v264 = vld [vmem:[#allocation2 + $0x350] sm:$0xff]
    %v265 = vld [vmem:[#allocation2 + $0x358] sm:$0xff]
    %v266 = vld [vmem:[#allocation2 + $0x360] sm:$0xff]
    %v267 = vld [vmem:[#allocation2 + $0x368] sm:$0xff]
    %v268 = vld [vmem:[#allocation2 + $0x370] sm:$0xff]
    %v269 = vld [vmem:[#allocation2 + $0x378] sm:$0xff]
    %v270 = vld [vmem:[#allocation2 + $0x380] sm:$0xff]
    %v271 = vld [vmem:[#allocation2 + $0x388] sm:$0xff]
    %v272 = vld [vmem:[#allocation2 + $0x390] sm:$0xff]
    %v273 = vld [vmem:[#allocation2 + $0x398] sm:$0xff]
    %v274 = vld [vmem:[#allocation2 + $0x3a0] sm:$0xff]
    %v275 = vld [vmem:[#allocation2 + $0x3a8] sm:$0xff]
    %v276 = vld [vmem:[#allocation2 + $0x3b0] sm:$0xff]
    %v277 = vld [vmem:[#allocation2 + $0x3b8] sm:$0xff]
    %v278 = vld [vmem:[#allocation2 + $0x3c0] sm:$0xff]
    %v279 = vld [vmem:[#allocation2 + $0x3c8] sm:$0xff]
    %v280 = vld [vmem:[#allocation2 + $0x3d0] sm:$0xff]
    %v281 = vld [vmem:[#allocation2 + $0x3d8] sm:$0xff]
    %v282 = vld [vmem:[#allocation2 + $0x3e0] sm:$0xff]
    %v283 = vld [vmem:[#allocation2 + $0x3e8] sm:$0xff]
    %v284 = vld [vmem:[#allocation2 + $0x3f0] sm:$0xff]
    %v285 = vld [vmem:[#allocation2 + $0x3f8] sm:$0xff]
    %v286 = vld [vmem:[#allocation2 + $0x400] sm:$0xff]
    %v287 = vld [vmem:[#allocation2 + $0x408] sm:$0xff]
    %v288 = vld [vmem:[#allocation2 + $0x410] sm:$0xff]
    %v289 = vld [vmem:[#allocation2 + $0x418] sm:$0xff]
    %v290 = vld [vmem:[#allocation2 + $0x420] sm:$0xff]
    %v291 = vld [vmem:[#allocation2 + $0x428] sm:$0xff]
    %v292 = vld [vmem:[#allocation2 + $0x430] sm:$0xff]
    %v293 = vld [vmem:[#allocation2 + $0x438] sm:$0xff]
    %v294 = vld [vmem:[#allocation2 + $0x440] sm:$0xff]
    %v295 = vld [vmem:[#allocation2 + $0x448] sm:$0xff]
    %v296 = vld [vmem:[#allocation2 + $0x450] sm:$0xff]
    %v297 = vld [vmem:[#allocation2 + $0x458] sm:$0xff]
    %v298 = vld [vmem:[#allocation2 + $0x460] sm:$0xff]
    %v299 = vld [vmem:[#allocation2 + $0x468] sm:$0xff]
    %v300 = vld [vmem:[#allocation2 + $0x470] sm:$0xff]
    %v301 = vld [vmem:[#allocation2 + $0x478] sm:$0xff]
    %v302 = vld [vmem:[#allocation2 + $0x480] sm:$0xff]
    %v303 = vld [vmem:[#allocation2 + $0x488] sm:$0xff]
    %v304 = vld [vmem:[#allocation2 + $0x490] sm:$0xff]
    %v305 = vld [vmem:[#allocation2 + $0x498] sm:$0xff]
    %v306 = vld [vmem:[#allocation2 + $0x4a0] sm:$0xff]
    %v307 = vld [vmem:[#allocation2 + $0x4a8] sm:$0xff]
    %v308 = vld [vmem:[#allocation2 + $0x4b0] sm:$0xff]
    %v309 = vld [vmem:[#allocation2 + $0x4b8] sm:$0xff]
    %v310 = vld [vmem:[#allocation2 + $0x4c0] sm:$0xff]
    %v311 = vld [vmem:[#allocation2 + $0x4c8] sm:$0xff]
    %v312 = vld [vmem:[#allocation2 + $0x4d0] sm:$0xff]
    %v313 = vld [vmem:[#allocation2 + $0x4d8] sm:$0xff]
    %v314 = vld [vmem:[#allocation2 + $0x4e0] sm:$0xff]
    %v315 = vld [vmem:[#allocation2 + $0x4e8] sm:$0xff]
    %v316 = vld [vmem:[#allocation2 + $0x4f0] sm:$0xff]
    %v317 = vld [vmem:[#allocation2 + $0x4f8] sm:$0xff]
    %v318 = vld [vmem:[#allocation2 + $0x500] sm:$0xff]
    %v319 = vld [vmem:[#allocation2 + $0x508] sm:$0xff]
    %v320 = vld [vmem:[#allocation2 + $0x510] sm:$0xff]
    %v321 = vld [vmem:[#allocation2 + $0x518] sm:$0xff]
    %v322 = vld [vmem:[#allocation2 + $0x520] sm:$0xff]
    %v323 = vld [vmem:[#allocation2 + $0x528] sm:$0xff]
    %v324 = vld [vmem:[#allocation2 + $0x530] sm:$0xff]
    %v325 = vld [vmem:[#allocation2 + $0x538] sm:$0xff]
    %v326 = vld [vmem:[#allocation2 + $0x540] sm:$0xff]
    %v327 = vld [vmem:[#allocation2 + $0x548] sm:$0xff]
    %v328 = vld [vmem:[#allocation2 + $0x550] sm:$0xff]
    %v329 = vld [vmem:[#allocation2 + $0x558] sm:$0xff]
    %v330 = vld [vmem:[#allocation2 + $0x560] sm:$0xff]
    %v331 = vld [vmem:[#allocation2 + $0x568] sm:$0xff]
    %v332 = vld [vmem:[#allocation2 + $0x570] sm:$0xff]
    %v333 = vld [vmem:[#allocation2 + $0x578] sm:$0xff]
    %v334 = vld [vmem:[#allocation2 + $0x580] sm:$0xff]
    %v335 = vld [vmem:[#allocation2 + $0x588] sm:$0xff]
    %v336 = vld [vmem:[#allocation2 + $0x590] sm:$0xff]
    %v337 = vld [vmem:[#allocation2 + $0x598] sm:$0xff]
    %v338 = vld [vmem:[#allocation2 + $0x5a0] sm:$0xff]
    %v339 = vld [vmem:[#allocation2 + $0x5a8] sm:$0xff]
    %v340 = vld [vmem:[#allocation2 + $0x5b0] sm:$0xff]
    %v341 = vld [vmem:[#allocation2 + $0x5b8] sm:$0xff]
    %v342 = vld [vmem:[#allocation2 + $0x5c0] sm:$0xff]
    %v343 = vld [vmem:[#allocation2 + $0x5c8] sm:$0xff]
    %v344 = vld [vmem:[#allocation2 + $0x5d0] sm:$0xff]
    %v345 = vld [vmem:[#allocation2 + $0x5d8] sm:$0xff]
    %v346 = vld [vmem:[#allocation2 + $0x5e0] sm:$0xff]
    %v347 = vld [vmem:[#allocation2 + $0x5e8] sm:$0xff]
    %v348 = vld [vmem:[#allocation2 + $0x5f0] sm:$0xff]
    %v349 = vld [vmem:[#allocation2 + $0x5f8] sm:$0xff]
    %v350 = vld [vmem:[#allocation2 + $0x600] sm:$0xff]
    %v351 = vld [vmem:[#allocation2 + $0x608] sm:$0xff]
    %v352 = vld [vmem:[#allocation2 + $0x610] sm:$0xff]
    %v353 = vld [vmem:[#allocation2 + $0x618] sm:$0xff]
    %v354 = vld [vmem:[#allocation2 + $0x620] sm:$0xff]
    %v355 = vld [vmem:[#allocation2 + $0x628] sm:$0xff]
    %v356 = vld [vmem:[#allocation2 + $0x630] sm:$0xff]
    %v357 = vld [vmem:[#allocation2 + $0x638] sm:$0xff]
    %v358 = vld [vmem:[#allocation2 + $0x640] sm:$0xff]
    %v359 = vld [vmem:[#allocation2 + $0x648] sm:$0xff]
    %v360 = vld [vmem:[#allocation2 + $0x650] sm:$0xff]
    %v361 = vld [vmem:[#allocation2 + $0x658] sm:$0xff]
    %v362 = vld [vmem:[#allocation2 + $0x660] sm:$0xff]
    %v363 = vld [vmem:[#allocation2 + $0x668] sm:$0xff]
    %v364 = vld [vmem:[#allocation2 + $0x670] sm:$0xff]
    %v365 = vld [vmem:[#allocation2 + $0x678] sm:$0xff]
    %v366 = vld [vmem:[#allocation2 + $0x680] sm:$0xff]
    %v367 = vld [vmem:[#allocation2 + $0x688] sm:$0xff]
    %v368 = vld [vmem:[#allocation2 + $0x690] sm:$0xff]
    %v369 = vld [vmem:[#allocation2 + $0x698] sm:$0xff]
    %v370 = vld [vmem:[#allocation2 + $0x6a0] sm:$0xff]
    %v371 = vld [vmem:[#allocation2 + $0x6a8] sm:$0xff]
    %v372 = vld [vmem:[#allocation2 + $0x6b0] sm:$0xff]
    %v373 = vld [vmem:[#allocation2 + $0x6b8] sm:$0xff]
    %v374 = vld [vmem:[#allocation2 + $0x6c0] sm:$0xff]
    %v375 = vld [vmem:[#allocation2 + $0x6c8] sm:$0xff]
    %v376 = vld [vmem:[#allocation2 + $0x6d0] sm:$0xff]
    %v377 = vld [vmem:[#allocation2 + $0x6d8] sm:$0xff]
    %v378 = vld [vmem:[#allocation2 + $0x6e0] sm:$0xff]
    %v379 = vld [vmem:[#allocation2 + $0x6e8] sm:$0xff]
    %v380 = vld [vmem:[#allocation2 + $0x6f0] sm:$0xff]
    %v381 = vld [vmem:[#allocation2 + $0x6f8] sm:$0xff]
    %v382 = vld [vmem:[#allocation2 + $0x700] sm:$0xff]
    %v383 = vld [vmem:[#allocation2 + $0x708] sm:$0xff]
    %v384 = vld [vmem:[#allocation2 + $0x710] sm:$0xff]
    %v385 = vld [vmem:[#allocation2 + $0x718] sm:$0xff]
    %v386 = vld [vmem:[#allocation2 + $0x720] sm:$0xff]
    %v387 = vld [vmem:[#allocation2 + $0x728] sm:$0xff]
    %v388 = vld [vmem:[#allocation2 + $0x730] sm:$0xff]
    %v389 = vld [vmem:[#allocation2 + $0x738] sm:$0xff]
    %v390 = vld [vmem:[#allocation2 + $0x740] sm:$0xff]
    %v391 = vld [vmem:[#allocation2 + $0x748] sm:$0xff]
    %v392 = vld [vmem:[#allocation2 + $0x750] sm:$0xff]
    %v393 = vld [vmem:[#allocation2 + $0x758] sm:$0xff]
    %v394 = vld [vmem:[#allocation2 + $0x760] sm:$0xff]
    %v395 = vld [vmem:[#allocation2 + $0x768] sm:$0xff]
    %v396 = vld [vmem:[#allocation2 + $0x770] sm:$0xff]
    %v397 = vld [vmem:[#allocation2 + $0x778] sm:$0xff]
    %v398 = vld [vmem:[#allocation2 + $0x780] sm:$0xff]
    %v399 = vld [vmem:[#allocation2 + $0x788] sm:$0xff]
    %v400 = vld [vmem:[#allocation2 + $0x790] sm:$0xff]
    %v401 = vld [vmem:[#allocation2 + $0x798] sm:$0xff]
    %v402 = vld [vmem:[#allocation2 + $0x7a0] sm:$0xff]
    %v403 = vld [vmem:[#allocation2 + $0x7a8] sm:$0xff]
    %v404 = vld [vmem:[#allocation2 + $0x7b0] sm:$0xff]
    %v405 = vld [vmem:[#allocation2 + $0x7b8] sm:$0xff]
    %v406 = vld [vmem:[#allocation2 + $0x7c0] sm:$0xff]
    %v407 = vld [vmem:[#allocation2 + $0x7c8] sm:$0xff]
    %v408 = vld [vmem:[#allocation2 + $0x7d0] sm:$0xff]
    %v409 = vld [vmem:[#allocation2 + $0x7d8] sm:$0xff]
    %v410 = vld [vmem:[#allocation2 + $0x7e0] sm:$0xff]
    %v411 = vld [vmem:[#allocation2 + $0x7e8] sm:$0xff]
    %v412 = vld [vmem:[#allocation2 + $0x7f0] sm:$0xff]
    %v413 = vld [vmem:[#allocation2 + $0x7f8] sm:$0xff]
    %v414 = vld [vmem:[#allocation2 + $0x800] sm:$0xff]
    %v415 = vld [vmem:[#allocation2 + $0x808] sm:$0xff]
    %v416 = vld [vmem:[#allocation2 + $0x810] sm:$0xff]
    %v417 = vld [vmem:[#allocation2 + $0x818] sm:$0xff]
    %v418 = vld [vmem:[#allocation2 + $0x820] sm:$0xff]
    %v419 = vld [vmem:[#allocation2 + $0x828] sm:$0xff]
    %v420 = vld [vmem:[#allocation2 + $0x830] sm:$0xff]
    %v421 = vld [vmem:[#allocation2 + $0x838] sm:$0xff]
    %v422 = vld [vmem:[#allocation2 + $0x840] sm:$0xff]
    %v423 = vld [vmem:[#allocation2 + $0x848] sm:$0xff]
    %v424 = vld [vmem:[#allocation2 + $0x850] sm:$0xff]
    %v425 = vld [vmem:[#allocation2 + $0x858] sm:$0xff]
    %v426 = vld [vmem:[#allocation2 + $0x860] sm:$0xff]
    %v427 = vld [vmem:[#allocation2 + $0x868] sm:$0xff]
    %v428 = vld [vmem:[#allocation2 + $0x870] sm:$0xff]
    %v429 = vld [vmem:[#allocation2 + $0x878] sm:$0xff]
    %v430 = vld [vmem:[#allocation2 + $0x880] sm:$0xff]
    %v431 = vld [vmem:[#allocation2 + $0x888] sm:$0xff]
    %v432 = vld [vmem:[#allocation2 + $0x890] sm:$0xff]
    %v433 = vld [vmem:[#allocation2 + $0x898] sm:$0xff]
    %v434 = vld [vmem:[#allocation2 + $0x8a0] sm:$0xff]
    %v435 = vld [vmem:[#allocation2 + $0x8a8] sm:$0xff]
    %v436 = vld [vmem:[#allocation2 + $0x8b0] sm:$0xff]
    %v437 = vld [vmem:[#allocation2 + $0x8b8] sm:$0xff]
    %v438 = vld [vmem:[#allocation2 + $0x8c0] sm:$0xff]
    %v439 = vld [vmem:[#allocation2 + $0x8c8] sm:$0xff]
    %v440 = vld [vmem:[#allocation2 + $0x8d0] sm:$0xff]
    %v441 = vld [vmem:[#allocation2 + $0x8d8] sm:$0xff]
    %v442 = vld [vmem:[#allocation2 + $0x8e0] sm:$0xff]
    %v443 = vld [vmem:[#allocation2 + $0x8e8] sm:$0xff]
    %v444 = vld [vmem:[#allocation2 + $0x8f0] sm:$0xff]
    %v445 = vld [vmem:[#allocation2 + $0x8f8] sm:$0xff]
    %v446 = vld [vmem:[#allocation2 + $0x900] sm:$0xff]
    %v447 = vld [vmem:[#allocation2 + $0x908] sm:$0xff]
    %v448 = vld [vmem:[#allocation2 + $0x910] sm:$0xff]
    %v449 = vld [vmem:[#allocation2 + $0x918] sm:$0xff]
    %v450 = vld [vmem:[#allocation2 + $0x920] sm:$0xff]
    %v451 = vld [vmem:[#allocation2 + $0x928] sm:$0xff]
    %v452 = vld [vmem:[#allocation2 + $0x930] sm:$0xff]
    %v453 = vld [vmem:[#allocation2 + $0x938] sm:$0xff]
    %v454 = vld [vmem:[#allocation2 + $0x940] sm:$0xff]
    %v455 = vld [vmem:[#allocation2 + $0x948] sm:$0xff]
    %v456 = vld [vmem:[#allocation2 + $0x950] sm:$0xff]
    %v457 = vld [vmem:[#allocation2 + $0x958] sm:$0xff]
    %v458 = vld [vmem:[#allocation2 + $0x960] sm:$0xff]
    %v459 = vld [vmem:[#allocation2 + $0x968] sm:$0xff]
    %v460 = vld [vmem:[#allocation2 + $0x970] sm:$0xff]
    %v461 = vld [vmem:[#allocation2 + $0x978] sm:$0xff]
    %v462 = vld [vmem:[#allocation2 + $0x980] sm:$0xff]
    %v463 = vld [vmem:[#allocation2 + $0x988] sm:$0xff]
    %v464 = vld [vmem:[#allocation2 + $0x990] sm:$0xff]
    %v465 = vld [vmem:[#allocation2 + $0x998] sm:$0xff]
    %v466 = vld [vmem:[#allocation2 + $0x9a0] sm:$0xff]
    %v467 = vld [vmem:[#allocation2 + $0x9a8] sm:$0xff]
    %v468 = vld [vmem:[#allocation2 + $0x9b0] sm:$0xff]
    %v469 = vld [vmem:[#allocation2 + $0x9b8] sm:$0xff]
    %v470 = vld [vmem:[#allocation2 + $0x9c0] sm:$0xff]
    %v471 = vld [vmem:[#allocation2 + $0x9c8] sm:$0xff]
    %v472 = vld [vmem:[#allocation2 + $0x9d0] sm:$0xff]
    %v473 = vld [vmem:[#allocation2 + $0x9d8] sm:$0xff]
    %v474 = vld [vmem:[#allocation2 + $0x9e0] sm:$0xff]
    %v475 = vld [vmem:[#allocation2 + $0x9e8] sm:$0xff]
    %v476 = vld [vmem:[#allocation2 + $0x9f0] sm:$0xff]
    %v477 = vld [vmem:[#allocation2 + $0x9f8] sm:$0xff]
    %v478 = vld [vmem:[#allocation2 + $0xa00] sm:$0xff]
    %v479 = vld [vmem:[#allocation2 + $0xa08] sm:$0xff]
    %v480 = vld [vmem:[#allocation2 + $0xa10] sm:$0xff]
    %v481 = vld [vmem:[#allocation2 + $0xa18] sm:$0xff]
    %v482 = vld [vmem:[#allocation2 + $0xa20] sm:$0xff]
    %v483 = vld [vmem:[#allocation2 + $0xa28] sm:$0xff]
    %v484 = vld [vmem:[#allocation2 + $0xa30] sm:$0xff]
    %v485 = vld [vmem:[#allocation2 + $0xa38] sm:$0xff]
    %v486 = vld [vmem:[#allocation2 + $0xa40] sm:$0xff]
    %v487 = vld [vmem:[#allocation2 + $0xa48] sm:$0xff]
    %v488 = vld [vmem:[#allocation2 + $0xa50] sm:$0xff]
    %v489 = vld [vmem:[#allocation2 + $0xa58] sm:$0xff]
    %v490 = vld [vmem:[#allocation2 + $0xa60] sm:$0xff]
    %v491 = vld [vmem:[#allocation2 + $0xa68] sm:$0xff]
    %v492 = vld [vmem:[#allocation2 + $0xa70] sm:$0xff]
    %v493 = vld [vmem:[#allocation2 + $0xa78] sm:$0xff]
    %v494 = vld [vmem:[#allocation2 + $0xa80] sm:$0xff]
    %v495 = vld [vmem:[#allocation2 + $0xa88] sm:$0xff]
    %v496 = vld [vmem:[#allocation2 + $0xa90] sm:$0xff]
    %v497 = vld [vmem:[#allocation2 + $0xa98] sm:$0xff]
    %v498 = vld [vmem:[#allocation2 + $0xaa0] sm:$0xff]
    %v499 = vld [vmem:[#allocation2 + $0xaa8] sm:$0xff]
    %v500 = vld [vmem:[#allocation2 + $0xab0] sm:$0xff]
    %v501 = vld [vmem:[#allocation2 + $0xab8] sm:$0xff]
    %v502 = vld [vmem:[#allocation2 + $0xac0] sm:$0xff]
    %v503 = vld [vmem:[#allocation2 + $0xac8] sm:$0xff]
    %v504 = vld [vmem:[#allocation2 + $0xad0] sm:$0xff]
    %v505 = vld [vmem:[#allocation2 + $0xad8] sm:$0xff]
    %v506 = vld [vmem:[#allocation2 + $0xae0] sm:$0xff]
    %v507 = vld [vmem:[#allocation2 + $0xae8] sm:$0xff]
    %v508 = vld [vmem:[#allocation2 + $0xaf0] sm:$0xff]
    %v509 = vld [vmem:[#allocation2 + $0xaf8] sm:$0xff]
    %v510 = vld [vmem:[#allocation2 + $0xb00] sm:$0xff]
    %v511 = vld [vmem:[#allocation2 + $0xb08] sm:$0xff]
    %v512 = vld [vmem:[#allocation2 + $0xb10] sm:$0xff]
    %v513 = vld [vmem:[#allocation2 + $0xb18] sm:$0xff]
    %v514 = vld [vmem:[#allocation2 + $0xb20] sm:$0xff]
    %v515 = vld [vmem:[#allocation2 + $0xb28] sm:$0xff]
    %v516 = vld [vmem:[#allocation2 + $0xb30] sm:$0xff]
    %v517 = vld [vmem:[#allocation2 + $0xb38] sm:$0xff]
    %v518 = vld [vmem:[#allocation2 + $0xb40] sm:$0xff]
    %v519 = vld [vmem:[#allocation2 + $0xb48] sm:$0xff]
    %v520 = vld [vmem:[#allocation2 + $0xb50] sm:$0xff]
    %v521 = vld [vmem:[#allocation2 + $0xb58] sm:$0xff]
    %v522 = vld [vmem:[#allocation2 + $0xb60] sm:$0xff]
    %v523 = vld [vmem:[#allocation2 + $0xb68] sm:$0xff]
    %v524 = vld [vmem:[#allocation2 + $0xb70] sm:$0xff]
    %v525 = vld [vmem:[#allocation2 + $0xb78] sm:$0xff]
    %v526 = vld [vmem:[#allocation2 + $0xb80] sm:$0xff]
    %v527 = vld [vmem:[#allocation2 + $0xb88] sm:$0xff]
    %v528 = vld [vmem:[#allocation2 + $0xb90] sm:$0xff]
    %v529 = vld [vmem:[#allocation2 + $0xb98] sm:$0xff]
    %v530 = vld [vmem:[#allocation2 + $0xba0] sm:$0xff]
    %v531 = vld [vmem:[#allocation2 + $0xba8] sm:$0xff]
    %v532 = vld [vmem:[#allocation2 + $0xbb0] sm:$0xff]
    %v533 = vld [vmem:[#allocation2 + $0xbb8] sm:$0xff]
    %v534 = vld [vmem:[#allocation2 + $0xbc0] sm:$0xff]
    %v535 = vld [vmem:[#allocation2 + $0xbc8] sm:$0xff]
    %v536 = vld [vmem:[#allocation2 + $0xbd0] sm:$0xff]
    %v537 = vld [vmem:[#allocation2 + $0xbd8] sm:$0xff]
    %v538 = vld [vmem:[#allocation2 + $0xbe0] sm:$0xff]
    %v539 = vld [vmem:[#allocation2 + $0xbe8] sm:$0xff]
    %v540 = vld [vmem:[#allocation2 + $0xbf0] sm:$0xff]
    %v541 = vld [vmem:[#allocation2 + $0xbf8] sm:$0xff]
    %v542 = vld [vmem:[#allocation2 + $0xc00] sm:$0xff]
    %v543 = vld [vmem:[#allocation2 + $0xc08] sm:$0xff]
    %v544 = vld [vmem:[#allocation2 + $0xc10] sm:$0xff]
    %v545 = vld [vmem:[#allocation2 + $0xc18] sm:$0xff]
    %v546 = vld [vmem:[#allocation2 + $0xc20] sm:$0xff]
    %v547 = vld [vmem:[#allocation2 + $0xc28] sm:$0xff]
    %v548 = vld [vmem:[#allocation2 + $0xc30] sm:$0xff]
    %v549 = vld [vmem:[#allocation2 + $0xc38] sm:$0xff]
    %v550 = vld [vmem:[#allocation2 + $0xc40] sm:$0xff]
    %v551 = vld [vmem:[#allocation2 + $0xc48] sm:$0xff]
    %v552 = vld [vmem:[#allocation2 + $0xc50] sm:$0xff]
    %v553 = vld [vmem:[#allocation2 + $0xc58] sm:$0xff]
    %v554 = vld [vmem:[#allocation2 + $0xc60] sm:$0xff]
    %v555 = vld [vmem:[#allocation2 + $0xc68] sm:$0xff]
    %v556 = vld [vmem:[#allocation2 + $0xc70] sm:$0xff]
    %v557 = vld [vmem:[#allocation2 + $0xc78] sm:$0xff]
    %v558 = vld [vmem:[#allocation2 + $0xc80] sm:$0xff]
    %v559 = vld [vmem:[#allocation2 + $0xc88] sm:$0xff]
    %v560 = vld [vmem:[#allocation2 + $0xc90] sm:$0xff]
    %v561 = vld [vmem:[#allocation2 + $0xc98] sm:$0xff]
    %v562 = vld [vmem:[#allocation2 + $0xca0] sm:$0xff]
    %v563 = vld [vmem:[#allocation2 + $0xca8] sm:$0xff]
    %v564 = vld [vmem:[#allocation2 + $0xcb0] sm:$0xff]
    %v565 = vld [vmem:[#allocation2 + $0xcb8] sm:$0xff]
    %v566 = vld [vmem:[#allocation2 + $0xcc0] sm:$0xff]
    %v567 = vld [vmem:[#allocation2 + $0xcc8] sm:$0xff]
    %v568 = vld [vmem:[#allocation2 + $0xcd0] sm:$0xff]
    %v569 = vld [vmem:[#allocation2 + $0xcd8] sm:$0xff]
    %v570 = vld [vmem:[#allocation2 + $0xce0] sm:$0xff]
    %v571 = vld [vmem:[#allocation2 + $0xce8] sm:$0xff]
    %v572 = vld [vmem:[#allocation2 + $0xcf0] sm:$0xff]
    %v573 = vld [vmem:[#allocation2 + $0xcf8] sm:$0xff]
    %v574 = vld [vmem:[#allocation2 + $0xd00] sm:$0xff]
    %v575 = vld [vmem:[#allocation2 + $0xd08] sm:$0xff]
    %v576 = vld [vmem:[#allocation2 + $0xd10] sm:$0xff]
    %v577 = vld [vmem:[#allocation2 + $0xd18] sm:$0xff]
    %v578 = vld [vmem:[#allocation2 + $0xd20] sm:$0xff]
    %v579 = vld [vmem:[#allocation2 + $0xd28] sm:$0xff]
    %v580 = vld [vmem:[#allocation2 + $0xd30] sm:$0xff]
    %v581 = vld [vmem:[#allocation2 + $0xd38] sm:$0xff]
    %v582 = vld [vmem:[#allocation2 + $0xd40] sm:$0xff]
    %v583 = vld [vmem:[#allocation2 + $0xd48] sm:$0xff]
    %v584 = vld [vmem:[#allocation2 + $0xd50] sm:$0xff]
    %v585 = vld [vmem:[#allocation2 + $0xd58] sm:$0xff]
    %v586 = vld [vmem:[#allocation2 + $0xd60] sm:$0xff]
    %v587 = vld [vmem:[#allocation2 + $0xd68] sm:$0xff]
    %v588 = vld [vmem:[#allocation2 + $0xd70] sm:$0xff]
    %v589 = vld [vmem:[#allocation2 + $0xd78] sm:$0xff]
    %v590 = vld [vmem:[#allocation2 + $0xd80] sm:$0xff]
    %v591 = vld [vmem:[#allocation2 + $0xd88] sm:$0xff]
    %v592 = vld [vmem:[#allocation2 + $0xd90] sm:$0xff]
    %v593 = vld [vmem:[#allocation2 + $0xd98] sm:$0xff]
    %v594 = vld [vmem:[#allocation2 + $0xda0] sm:$0xff]
    %v595 = vld [vmem:[#allocation2 + $0xda8] sm:$0xff]
    %v596 = vld [vmem:[#allocation2 + $0xdb0] sm:$0xff]
    %v597 = vld [vmem:[#allocation2 + $0xdb8] sm:$0xff]
    %v598 = vld [vmem:[#allocation2 + $0xdc0] sm:$0xff]
    %v599 = vld [vmem:[#allocation2 + $0xdc8] sm:$0xff]
    %v600 = vld [vmem:[#allocation2 + $0xdd0] sm:$0xff]
    %v601 = vld [vmem:[#allocation2 + $0xdd8] sm:$0xff]
    %v602 = vld [vmem:[#allocation2 + $0xde0] sm:$0xff]
    %v603 = vld [vmem:[#allocation2 + $0xde8] sm:$0xff]
    %v604 = vld [vmem:[#allocation2 + $0xdf0] sm:$0xff]
    %v605 = vld [vmem:[#allocation2 + $0xdf8] sm:$0xff]
    %v606 = vld [vmem:[#allocation2 + $0xe00] sm:$0xff]
    %v607 = vld [vmem:[#allocation2 + $0xe08] sm:$0xff]
    %v608 = vld [vmem:[#allocation2 + $0xe10] sm:$0xff]
    %v609 = vld [vmem:[#allocation2 + $0xe18] sm:$0xff]
    %v610 = vld [vmem:[#allocation2 + $0xe20] sm:$0xff]
    %v611 = vld [vmem:[#allocation2 + $0xe28] sm:$0xff]
    %v612 = vld [vmem:[#allocation2 + $0xe30] sm:$0xff]
    %v613 = vld [vmem:[#allocation2 + $0xe38] sm:$0xff]
    %v614 = vld [vmem:[#allocation2 + $0xe40] sm:$0xff]
    %v615 = vld [vmem:[#allocation2 + $0xe48] sm:$0xff]
    %v616 = vld [vmem:[#allocation2 + $0xe50] sm:$0xff]
    %v617 = vld [vmem:[#allocation2 + $0xe58] sm:$0xff]
    %v618 = vld [vmem:[#allocation2 + $0xe60] sm:$0xff]
    %v619 = vld [vmem:[#allocation2 + $0xe68] sm:$0xff]
    %v620 = vld [vmem:[#allocation2 + $0xe70] sm:$0xff]
    %v621 = vld [vmem:[#allocation2 + $0xe78] sm:$0xff]
    %v622 = vld [vmem:[#allocation2 + $0xe80] sm:$0xff]
    %v623 = vld [vmem:[#allocation2 + $0xe88] sm:$0xff]
    %v624 = vld [vmem:[#allocation2 + $0xe90] sm:$0xff]
    %v625 = vld [vmem:[#allocation2 + $0xe98] sm:$0xff]
    %v626 = vld [vmem:[#allocation2 + $0xea0] sm:$0xff]
    %v627 = vld [vmem:[#allocation2 + $0xea8] sm:$0xff]
    %v628 = vld [vmem:[#allocation2 + $0xeb0] sm:$0xff]
    %v629 = vld [vmem:[#allocation2 + $0xeb8] sm:$0xff]
    %v630 = vld [vmem:[#allocation2 + $0xec0] sm:$0xff]
    %v631 = vld [vmem:[#allocation2 + $0xec8] sm:$0xff]
    %v632 = vld [vmem:[#allocation2 + $0xed0] sm:$0xff]
    %v633 = vld [vmem:[#allocation2 + $0xed8] sm:$0xff]
    %v634 = vld [vmem:[#allocation2 + $0xee0] sm:$0xff]
    %v635 = vld [vmem:[#allocation2 + $0xee8] sm:$0xff]
    %v636 = vld [vmem:[#allocation2 + $0xef0] sm:$0xff]
    %v637 = vld [vmem:[#allocation2 + $0xef8] sm:$0xff]
    %v638 = vld [vmem:[#allocation2 + $0xf00] sm:$0xff]
    %v639 = vld [vmem:[#allocation2 + $0xf08] sm:$0xff]
    %v640 = vld [vmem:[#allocation2 + $0xf10] sm:$0xff]
    %v641 = vld [vmem:[#allocation2 + $0xf18] sm:$0xff]
    %v642 = vld [vmem:[#allocation2 + $0xf20] sm:$0xff]
    %v643 = vld [vmem:[#allocation2 + $0xf28] sm:$0xff]
    %v644 = vld [vmem:[#allocation2 + $0xf30] sm:$0xff]
    %v645 = vld [vmem:[#allocation2 + $0xf38] sm:$0xff]
    %v646 = vld [vmem:[#allocation2 + $0xf40] sm:$0xff]
    %v647 = vld [vmem:[#allocation2 + $0xf48] sm:$0xff]
    %v648 = vld [vmem:[#allocation2 + $0xf50] sm:$0xff]
    %v649 = vld [vmem:[#allocation2 + $0xf58] sm:$0xff]
    %v650 = vld [vmem:[#allocation2 + $0xf60] sm:$0xff]
    %v651 = vld [vmem:[#allocation2 + $0xf68] sm:$0xff]
    %v652 = vld [vmem:[#allocation2 + $0xf70] sm:$0xff]
    %v653 = vld [vmem:[#allocation2 + $0xf78] sm:$0xff]
    %v654 = vld [vmem:[#allocation2 + $0xf80] sm:$0xff]
    %v655 = vld [vmem:[#allocation2 + $0xf88] sm:$0xff]
    %v656 = vld [vmem:[#allocation2 + $0xf90] sm:$0xff]
    %v657 = vld [vmem:[#allocation2 + $0xf98] sm:$0xff]
    %v658 = vld [vmem:[#allocation2 + $0xfa0] sm:$0xff]
    %v659 = vld [vmem:[#allocation2 + $0xfa8] sm:$0xff]
    %v660 = vld [vmem:[#allocation2 + $0xfb0] sm:$0xff]
    %v661 = vld [vmem:[#allocation2 + $0xfb8] sm:$0xff]
    %v662 = vld [vmem:[#allocation2 + $0xfc0] sm:$0xff]
    %v663 = vld [vmem:[#allocation2 + $0xfc8] sm:$0xff]
    %v664 = vld [vmem:[#allocation2 + $0xfd0] sm:$0xff]
    %v665 = vld [vmem:[#allocation2 + $0xfd8] sm:$0xff]
    %v666 = vld [vmem:[#allocation2 + $0xfe0] sm:$0xff]
    %v667 = vld [vmem:[#allocation2 + $0xfe8] sm:$0xff]
    %v668 = vld [vmem:[#allocation2 + $0xff0] sm:$0xff]
    %v669 = vld [vmem:[#allocation2 + $0xff8] sm:$0xff]
    %v670 = vld [vmem:[#allocation2 + $0x1000] sm:$0xff]
    %v671 = vld [vmem:[#allocation2 + $0x1008] sm:$0xff]
    %v672 = vld [vmem:[#allocation2 + $0x1010] sm:$0xff]
    %v673 = vld [vmem:[#allocation2 + $0x1018] sm:$0xff]
    %v674 = vld [vmem:[#allocation2 + $0x1020] sm:$0xff]
    %v675 = vld [vmem:[#allocation2 + $0x1028] sm:$0xff]
    %v676 = vld [vmem:[#allocation2 + $0x1030] sm:$0xff]
    %v677 = vld [vmem:[#allocation2 + $0x1038] sm:$0xff]
    %v678 = vld [vmem:[#allocation2 + $0x1040] sm:$0xff]
    %v679 = vld [vmem:[#allocation2 + $0x1048] sm:$0xff]
    %v680 = vld [vmem:[#allocation2 + $0x1050] sm:$0xff]
    %v681 = vld [vmem:[#allocation2 + $0x1058] sm:$0xff]
    %v682 = vld [vmem:[#allocation2 + $0x1060] sm:$0xff]
    %v683 = vld [vmem:[#allocation2 + $0x1068] sm:$0xff]
    %v684 = vld [vmem:[#allocation2 + $0x1070] sm:$0xff]
    %v685 = vld [vmem:[#allocation2 + $0x1078] sm:$0xff]
    %v686 = vld [vmem:[#allocation2 + $0x1080] sm:$0xff]
    %v687 = vld [vmem:[#allocation2 + $0x1088] sm:$0xff]
    %v688 = vld [vmem:[#allocation2 + $0x1090] sm:$0xff]
    %v689 = vld [vmem:[#allocation2 + $0x1098] sm:$0xff]
    %v690 = vld [vmem:[#allocation2 + $0x10a0] sm:$0xff]
    %v691 = vld [vmem:[#allocation2 + $0x10a8] sm:$0xff]
    %v692 = vld [vmem:[#allocation2 + $0x10b0] sm:$0xff]
    %v693 = vld [vmem:[#allocation2 + $0x10b8] sm:$0xff]
    %v694 = vld [vmem:[#allocation2 + $0x10c0] sm:$0xff]
    %v695 = vld [vmem:[#allocation2 + $0x10c8] sm:$0xff]
    %v696 = vld [vmem:[#allocation2 + $0x10d0] sm:$0xff]
    %v697 = vld [vmem:[#allocation2 + $0x10d8] sm:$0xff]
    %v698 = vld [vmem:[#allocation2 + $0x10e0] sm:$0xff]
    %v699 = vld [vmem:[#allocation2 + $0x10e8] sm:$0xff]
    %v700 = vld [vmem:[#allocation2 + $0x10f0] sm:$0xff]
    %v701 = vld [vmem:[#allocation2 + $0x10f8] sm:$0xff]
    %v702 = vld [vmem:[#allocation2 + $0x1100] sm:$0xff]
    %v703 = vld [vmem:[#allocation2 + $0x1108] sm:$0xff]
    %v704 = vld [vmem:[#allocation2 + $0x1110] sm:$0xff]
    %v705 = vld [vmem:[#allocation2 + $0x1118] sm:$0xff]
    %v706 = vld [vmem:[#allocation2 + $0x1120] sm:$0xff]
    %v707 = vld [vmem:[#allocation2 + $0x1128] sm:$0xff]
    %v708 = vld [vmem:[#allocation2 + $0x1130] sm:$0xff]
    %v709 = vld [vmem:[#allocation2 + $0x1138] sm:$0xff]
    %v710 = vld [vmem:[#allocation2 + $0x1140] sm:$0xff]
    %v711 = vld [vmem:[#allocation2 + $0x1148] sm:$0xff]
    %v712 = vld [vmem:[#allocation2 + $0x1150] sm:$0xff]
    %v713 = vld [vmem:[#allocation2 + $0x1158] sm:$0xff]
    %v714 = vld [vmem:[#allocation2 + $0x1160] sm:$0xff]
    %v715 = vld [vmem:[#allocation2 + $0x1168] sm:$0xff]
    %v716 = vld [vmem:[#allocation2 + $0x1170] sm:$0xff]
    %v717 = vld [vmem:[#allocation2 + $0x1178] sm:$0xff]
    %v718 = vld [vmem:[#allocation2 + $0x1180] sm:$0xff]
    %v719 = vld [vmem:[#allocation2 + $0x1188] sm:$0xff]
    %v720 = vld [vmem:[#allocation2 + $0x1190] sm:$0xff]
    %v721 = vld [vmem:[#allocation2 + $0x1198] sm:$0xff]
    %v722 = vld [vmem:[#allocation2 + $0x11a0] sm:$0xff]
    %v723 = vld [vmem:[#allocation2 + $0x11a8] sm:$0xff]
    %v724 = vld [vmem:[#allocation2 + $0x11b0] sm:$0xff]
    %v725 = vld [vmem:[#allocation2 + $0x11b8] sm:$0xff]
    %v726 = vld [vmem:[#allocation2 + $0x11c0] sm:$0xff]
    %v727 = vld [vmem:[#allocation2 + $0x11c8] sm:$0xff]
    %v728 = vld [vmem:[#allocation2 + $0x11d0] sm:$0xff]
    %v729 = vld [vmem:[#allocation2 + $0x11d8] sm:$0xff]
    %v730 = vld [vmem:[#allocation2 + $0x11e0] sm:$0xff]
    %v731 = vld [vmem:[#allocation2 + $0x11e8] sm:$0xff]
    %v732 = vld [vmem:[#allocation2 + $0x11f0] sm:$0xff]
    %v733 = vld [vmem:[#allocation2 + $0x11f8] sm:$0xff]
    %v734 = vld [vmem:[#allocation2 + $0x1200] sm:$0xff]
    %v735 = vld [vmem:[#allocation2 + $0x1208] sm:$0xff]
    %v736 = vld [vmem:[#allocation2 + $0x1210] sm:$0xff]
    %v737 = vld [vmem:[#allocation2 + $0x1218] sm:$0xff]
    %v738 = vld [vmem:[#allocation2 + $0x1220] sm:$0xff]
    %v739 = vld [vmem:[#allocation2 + $0x1228] sm:$0xff]
    %v740 = vld [vmem:[#allocation2 + $0x1230] sm:$0xff]
    %v741 = vld [vmem:[#allocation2 + $0x1238] sm:$0xff]
    %v742 = vld [vmem:[#allocation2 + $0x1240] sm:$0xff]
    %v743 = vld [vmem:[#allocation2 + $0x1248] sm:$0xff]
    %v744 = vld [vmem:[#allocation2 + $0x1250] sm:$0xff]
    %v745 = vld [vmem:[#allocation2 + $0x1258] sm:$0xff]
    %v746 = vld [vmem:[#allocation2 + $0x1260] sm:$0xff]
    %v747 = vld [vmem:[#allocation2 + $0x1268] sm:$0xff]
    %v748 = vld [vmem:[#allocation2 + $0x1270] sm:$0xff]
    %v749 = vld [vmem:[#allocation2 + $0x1278] sm:$0xff]
    %v750 = vld [vmem:[#allocation2 + $0x1280] sm:$0xff]
    %v751 = vld [vmem:[#allocation2 + $0x1288] sm:$0xff]
    %v752 = vld [vmem:[#allocation2 + $0x1290] sm:$0xff]
    %v753 = vld [vmem:[#allocation2 + $0x1298] sm:$0xff]
    %v754 = vld [vmem:[#allocation2 + $0x12a0] sm:$0xff]
    %v755 = vld [vmem:[#allocation2 + $0x12a8] sm:$0xff]
    %v756 = vld [vmem:[#allocation2 + $0x12b0] sm:$0xff]
    %v757 = vld [vmem:[#allocation2 + $0x12b8] sm:$0xff]
    %v758 = vld [vmem:[#allocation2 + $0x12c0] sm:$0xff]
    %v759 = vld [vmem:[#allocation2 + $0x12c8] sm:$0xff]
    %v760 = vld [vmem:[#allocation2 + $0x12d0] sm:$0xff]
    %v761 = vld [vmem:[#allocation2 + $0x12d8] sm:$0xff]
    %v762 = vld [vmem:[#allocation2 + $0x12e0] sm:$0xff]
    %v763 = vld [vmem:[#allocation2 + $0x12e8] sm:$0xff]
    %v764 = vld [vmem:[#allocation2 + $0x12f0] sm:$0xff]
    %v765 = vld [vmem:[#allocation2 + $0x12f8] sm:$0xff]
    %v766 = vld [vmem:[#allocation2 + $0x1300] sm:$0xff]
    %v767 = vld [vmem:[#allocation2 + $0x1308] sm:$0xff]
    %v768 = vld [vmem:[#allocation2 + $0x1310] sm:$0xff]
    %v769 = vld [vmem:[#allocation2 + $0x1318] sm:$0xff]
    %v770 = vld [vmem:[#allocation2 + $0x1320] sm:$0xff]
    %v771 = vld [vmem:[#allocation2 + $0x1328] sm:$0xff]
    %v772 = vld [vmem:[#allocation2 + $0x1330] sm:$0xff]
    %v773 = vld [vmem:[#allocation2 + $0x1338] sm:$0xff]
    %v774 = vld [vmem:[#allocation2 + $0x1340] sm:$0xff]
    %v775 = vld [vmem:[#allocation2 + $0x1348] sm:$0xff]
    %v776 = vld [vmem:[#allocation2 + $0x1350] sm:$0xff]
    %v777 = vld [vmem:[#allocation2 + $0x1358] sm:$0xff]
    %v778 = vld [vmem:[#allocation2 + $0x1360] sm:$0xff]
    %v779 = vld [vmem:[#allocation2 + $0x1368] sm:$0xff]
    %v780 = vld [vmem:[#allocation2 + $0x1370] sm:$0xff]
    %v781 = vld [vmem:[#allocation2 + $0x1378] sm:$0xff]
    %v782 = vld [vmem:[#allocation2 + $0x1380] sm:$0xff]
    %v783 = vld [vmem:[#allocation2 + $0x1388] sm:$0xff]
    %v784 = vld [vmem:[#allocation2 + $0x1390] sm:$0xff]
    %v785 = vld [vmem:[#allocation2 + $0x1398] sm:$0xff]
    %v786 = vld [vmem:[#allocation2 + $0x13a0] sm:$0xff]
    %v787 = vld [vmem:[#allocation2 + $0x13a8] sm:$0xff]
    %v788 = vld [vmem:[#allocation2 + $0x13b0] sm:$0xff]
    %v789 = vld [vmem:[#allocation2 + $0x13b8] sm:$0xff]
    %v790 = vld [vmem:[#allocation2 + $0x13c0] sm:$0xff]
    %v791 = vld [vmem:[#allocation2 + $0x13c8] sm:$0xff]
    %v792 = vld [vmem:[#allocation2 + $0x13d0] sm:$0xff]
    %v793 = vld [vmem:[#allocation2 + $0x13d8] sm:$0xff]
    %v794 = vld [vmem:[#allocation2 + $0x13e0] sm:$0xff]
    %v795 = vld [vmem:[#allocation2 + $0x13e8] sm:$0xff]
    %v796 = vld [vmem:[#allocation2 + $0x13f0] sm:$0xff]
    %v797 = vld [vmem:[#allocation2 + $0x13f8] sm:$0xff]
    %v798 = vld [vmem:[#allocation2 + $0x1400] sm:$0xff]
    %v799 = vld [vmem:[#allocation2 + $0x1408] sm:$0xff]
    %v800 = vld [vmem:[#allocation2 + $0x1410] sm:$0xff]
    %v801 = vld [vmem:[#allocation2 + $0x1418] sm:$0xff]
    %v802 = vld [vmem:[#allocation2 + $0x1420] sm:$0xff]
    %v803 = vld [vmem:[#allocation2 + $0x1428] sm:$0xff]
    %v804 = vld [vmem:[#allocation2 + $0x1430] sm:$0xff]
    %v805 = vld [vmem:[#allocation2 + $0x1438] sm:$0xff]
    %v806 = vld [vmem:[#allocation2 + $0x1440] sm:$0xff]
    %v807 = vld [vmem:[#allocation2 + $0x1448] sm:$0xff]
    %v808 = vld [vmem:[#allocation2 + $0x1450] sm:$0xff]
    %v809 = vld [vmem:[#allocation2 + $0x1458] sm:$0xff]
    %v810 = vld [vmem:[#allocation2 + $0x1460] sm:$0xff]
    %v811 = vld [vmem:[#allocation2 + $0x1468] sm:$0xff]
    %v812 = vld [vmem:[#allocation2 + $0x1470] sm:$0xff]
    %v813 = vld [vmem:[#allocation2 + $0x1478] sm:$0xff]
    %v814 = vld [vmem:[#allocation2 + $0x1480] sm:$0xff]
    %v815 = vld [vmem:[#allocation2 + $0x1488] sm:$0xff]
    %v816 = vld [vmem:[#allocation2 + $0x1490] sm:$0xff]
    %v817 = vld [vmem:[#allocation2 + $0x1498] sm:$0xff]
    %v818 = vld [vmem:[#allocation2 + $0x14a0] sm:$0xff]
    %v819 = vld [vmem:[#allocation2 + $0x14a8] sm:$0xff]
    %v820 = vld [vmem:[#allocation2 + $0x14b0] sm:$0xff]
    %v821 = vld [vmem:[#allocation2 + $0x14b8] sm:$0xff]
    %v822 = vld [vmem:[#allocation2 + $0x14c0] sm:$0xff]
    %v823 = vld [vmem:[#allocation2 + $0x14c8] sm:$0xff]
    %v824 = vld [vmem:[#allocation2 + $0x14d0] sm:$0xff]
    %v825 = vld [vmem:[#allocation2 + $0x14d8] sm:$0xff]
    %v826 = vld [vmem:[#allocation2 + $0x14e0] sm:$0xff]
    %v827 = vld [vmem:[#allocation2 + $0x14e8] sm:$0xff]
    %v828 = vld [vmem:[#allocation2 + $0x14f0] sm:$0xff]
    %v829 = vld [vmem:[#allocation2 + $0x14f8] sm:$0xff]
    %v830 = vld [vmem:[#allocation2 + $0x1500] sm:$0xff]
    %v831 = vld [vmem:[#allocation2 + $0x1508] sm:$0xff]
    %v832 = vld [vmem:[#allocation2 + $0x1510] sm:$0xff]
    %v833 = vld [vmem:[#allocation2 + $0x1518] sm:$0xff]
    %v834 = vld [vmem:[#allocation2 + $0x1520] sm:$0xff]
    %v835 = vld [vmem:[#allocation2 + $0x1528] sm:$0xff]
    %v836 = vld [vmem:[#allocation2 + $0x1530] sm:$0xff]
    %v837 = vld [vmem:[#allocation2 + $0x1538] sm:$0xff]
    %v838 = vld [vmem:[#allocation2 + $0x1540] sm:$0xff]
    %v839 = vld [vmem:[#allocation2 + $0x1548] sm:$0xff]
    %v840 = vld [vmem:[#allocation2 + $0x1550] sm:$0xff]
    %v841 = vld [vmem:[#allocation2 + $0x1558] sm:$0xff]
    %v842 = vld [vmem:[#allocation2 + $0x1560] sm:$0xff]
    %v843 = vld [vmem:[#allocation2 + $0x1568] sm:$0xff]
    %v844 = vld [vmem:[#allocation2 + $0x1570] sm:$0xff]
    %v845 = vld [vmem:[#allocation2 + $0x1578] sm:$0xff]
    %v846 = vld [vmem:[#allocation2 + $0x1580] sm:$0xff]
    %v847 = vld [vmem:[#allocation2 + $0x1588] sm:$0xff]
    %v848 = vld [vmem:[#allocation2 + $0x1590] sm:$0xff]
    %v849 = vld [vmem:[#allocation2 + $0x1598] sm:$0xff]
    %v850 = vld [vmem:[#allocation2 + $0x15a0] sm:$0xff]
    %v851 = vld [vmem:[#allocation2 + $0x15a8] sm:$0xff]
    %v852 = vld [vmem:[#allocation2 + $0x15b0] sm:$0xff]
    %v853 = vld [vmem:[#allocation2 + $0x15b8] sm:$0xff]
    %v854 = vld [vmem:[#allocation2 + $0x15c0] sm:$0xff]
    %v855 = vld [vmem:[#allocation2 + $0x15c8] sm:$0xff]
    %v856 = vld [vmem:[#allocation2 + $0x15d0] sm:$0xff]
    %v857 = vld [vmem:[#allocation2 + $0x15d8] sm:$0xff]
    %v858 = vld [vmem:[#allocation2 + $0x15e0] sm:$0xff]
    %v859 = vld [vmem:[#allocation2 + $0x15e8] sm:$0xff]
    %v860 = vld [vmem:[#allocation2 + $0x15f0] sm:$0xff]
    %v861 = vld [vmem:[#allocation2 + $0x15f8] sm:$0xff]
    %v862 = vld [vmem:[#allocation2 + $0x1600] sm:$0xff]
    %v863 = vld [vmem:[#allocation2 + $0x1608] sm:$0xff]
    %v864 = vld [vmem:[#allocation2 + $0x1610] sm:$0xff]
    %v865 = vld [vmem:[#allocation2 + $0x1618] sm:$0xff]
    %v866 = vld [vmem:[#allocation2 + $0x1620] sm:$0xff]
    %v867 = vld [vmem:[#allocation2 + $0x1628] sm:$0xff]
    %v868 = vld [vmem:[#allocation2 + $0x1630] sm:$0xff]
    %v869 = vld [vmem:[#allocation2 + $0x1638] sm:$0xff]
    %v870 = vld [vmem:[#allocation2 + $0x1640] sm:$0xff]
    %v871 = vld [vmem:[#allocation2 + $0x1648] sm:$0xff]
    %v872 = vld [vmem:[#allocation2 + $0x1650] sm:$0xff]
    %v873 = vld [vmem:[#allocation2 + $0x1658] sm:$0xff]
    %v874 = vld [vmem:[#allocation2 + $0x1660] sm:$0xff]
    %v875 = vld [vmem:[#allocation2 + $0x1668] sm:$0xff]
    %v876 = vld [vmem:[#allocation2 + $0x1670] sm:$0xff]
    %v877 = vld [vmem:[#allocation2 + $0x1678] sm:$0xff]
    %v878 = vld [vmem:[#allocation2 + $0x1680] sm:$0xff]
    %v879 = vld [vmem:[#allocation2 + $0x1688] sm:$0xff]
    %v880 = vld [vmem:[#allocation2 + $0x1690] sm:$0xff]
    %v881 = vld [vmem:[#allocation2 + $0x1698] sm:$0xff]
    %v882 = vld [vmem:[#allocation2 + $0x16a0] sm:$0xff]
    %v883 = vld [vmem:[#allocation2 + $0x16a8] sm:$0xff]
    %v884 = vld [vmem:[#allocation2 + $0x16b0] sm:$0xff]
    %v885 = vld [vmem:[#allocation2 + $0x16b8] sm:$0xff]
    %v886 = vld [vmem:[#allocation2 + $0x16c0] sm:$0xff]
    %v887 = vld [vmem:[#allocation2 + $0x16c8] sm:$0xff]
    %v888 = vld [vmem:[#allocation2 + $0x16d0] sm:$0xff]
    %v889 = vld [vmem:[#allocation2 + $0x16d8] sm:$0xff]
    %v890 = vld [vmem:[#allocation2 + $0x16e0] sm:$0xff]
    %v891 = vld [vmem:[#allocation2 + $0x16e8] sm:$0xff]
    %v892 = vld [vmem:[#allocation2 + $0x16f0] sm:$0xff]
    %v893 = vld [vmem:[#allocation2 + $0x16f8] sm:$0xff]
    %v894 = vld [vmem:[#allocation2 + $0x1700] sm:$0xff]
    %v895 = vld [vmem:[#allocation2 + $0x1708] sm:$0xff]
    %v896 = vld [vmem:[#allocation2 + $0x1710] sm:$0xff]
    %v897 = vld [vmem:[#allocation2 + $0x1718] sm:$0xff]
    %v898 = vld [vmem:[#allocation2 + $0x1720] sm:$0xff]
    %v899 = vld [vmem:[#allocation2 + $0x1728] sm:$0xff]
    %v900 = vld [vmem:[#allocation2 + $0x1730] sm:$0xff]
    %v901 = vld [vmem:[#allocation2 + $0x1738] sm:$0xff]
    %v902 = vld [vmem:[#allocation2 + $0x1740] sm:$0xff]
    %v903 = vld [vmem:[#allocation2 + $0x1748] sm:$0xff]
    %v904 = vld [vmem:[#allocation2 + $0x1750] sm:$0xff]
    %v905 = vld [vmem:[#allocation2 + $0x1758] sm:$0xff]
    %v906 = vld [vmem:[#allocation2 + $0x1760] sm:$0xff]
    %v907 = vld [vmem:[#allocation2 + $0x1768] sm:$0xff]
    %v908 = vld [vmem:[#allocation2 + $0x1770] sm:$0xff]
    %v909 = vld [vmem:[#allocation2 + $0x1778] sm:$0xff]
    %v910 = vld [vmem:[#allocation2 + $0x1780] sm:$0xff]
    %v911 = vld [vmem:[#allocation2 + $0x1788] sm:$0xff]
    %v912 = vld [vmem:[#allocation2 + $0x1790] sm:$0xff]
    %v913 = vld [vmem:[#allocation2 + $0x1798] sm:$0xff]
    %v914 = vld [vmem:[#allocation2 + $0x17a0] sm:$0xff]
    %v915 = vld [vmem:[#allocation2 + $0x17a8] sm:$0xff]
    %v916 = vld [vmem:[#allocation2 + $0x17b0] sm:$0xff]
    %v917 = vld [vmem:[#allocation2 + $0x17b8] sm:$0xff]
    %v918 = vld [vmem:[#allocation2 + $0x17c0] sm:$0xff]
    %v919 = vld [vmem:[#allocation2 + $0x17c8] sm:$0xff]
    %v920 = vld [vmem:[#allocation2 + $0x17d0] sm:$0xff]
    %v921 = vld [vmem:[#allocation2 + $0x17d8] sm:$0xff]
    %v922 = vld [vmem:[#allocation2 + $0x17e0] sm:$0xff]
    %v923 = vld [vmem:[#allocation2 + $0x17e8] sm:$0xff]
    %v924 = vld [vmem:[#allocation2 + $0x17f0] sm:$0xff]
    %v925 = vld [vmem:[#allocation2 + $0x17f8] sm:$0xff]
    %v926 = vld [vmem:[#allocation4] sm:$0xf]
    %v928 = vlaneseq
    %v929 = vshrl.u32 %v928, 7
    %v930 = vsub.s32 0, %v929
    %v931 = vrot.slane %v926, %v930
    %v932 = vlaneseq
    %v933 = vshrl.u32 %v932, 7
    %v934 = vsub.s32 1, %v933
    %v935 = vrot.slane %v926, %v934
    %v936 = vlaneseq
    %v937 = vshrl.u32 %v936, 7
    %v938 = vsub.s32 2, %v937
    %v939 = vrot.slane %v926, %v938
    %v940 = vlaneseq
    %v941 = vshrl.u32 %v940, 7
    %v942 = vsub.s32 3, %v941
    %v943 = vrot.slane %v926, %v942
    %v972 = vunpack.c.l.b16 %v134
    %v973 = vunpack.c.h.b16 %v134
    %v974 = vunpack.c.l.b16 %v135
    %v975 = vunpack.c.h.b16 %v135
    %v976 = vunpack.c.l.b16 %v136
    %v977 = vunpack.c.h.b16 %v136
    %v978 = vunpack.c.l.b16 %v137
    %v979 = vunpack.c.h.b16 %v137
    %v980 = vunpack.c.l.b16 %v138
    %v981 = vunpack.c.h.b16 %v138
    %v982 = vunpack.c.l.b16 %v139
    %v983 = vunpack.c.h.b16 %v139
    %v984 = vunpack.c.l.b16 %v140
    %v985 = vunpack.c.h.b16 %v140
    %v986 = vunpack.c.l.b16 %v141
    %v987 = vunpack.c.h.b16 %v141
    %v988 = vunpack.c.l.b16 %v142
    %v989 = vunpack.c.h.b16 %v142
    %v990 = vunpack.c.l.b16 %v143
    %v991 = vunpack.c.h.b16 %v143
    %v992 = vunpack.c.l.b16 %v144
    %v993 = vunpack.c.h.b16 %v144
    %v994 = vunpack.c.l.b16 %v145
    %v995 = vunpack.c.h.b16 %v145
    %v996 = vunpack.c.l.b16 %v146
    %v997 = vunpack.c.h.b16 %v146
    %v998 = vunpack.c.l.b16 %v147
    %v999 = vunpack.c.h.b16 %v147
    %v1000 = vunpack.c.l.b16 %v148
    %v1001 = vunpack.c.h.b16 %v148
    %v1002 = vunpack.c.l.b16 %v149
    %v1003 = vunpack.c.h.b16 %v149
    %v1004 = vunpack.c.l.b16 %v150
    %v1005 = vunpack.c.h.b16 %v150
    %v1006 = vunpack.c.l.b16 %v151
    %v1007 = vunpack.c.h.b16 %v151
    %v1008 = vunpack.c.l.b16 %v152
    %v1009 = vunpack.c.h.b16 %v152
    %v1010 = vunpack.c.l.b16 %v153
    %v1011 = vunpack.c.h.b16 %v153
    %v1012 = vunpack.c.l.b16 %v154
    %v1013 = vunpack.c.h.b16 %v154
    %v1014 = vunpack.c.l.b16 %v155
    %v1015 = vunpack.c.h.b16 %v155
    %v1016 = vunpack.c.l.b16 %v156
    %v1017 = vunpack.c.h.b16 %v156
    %v1018 = vunpack.c.l.b16 %v157
    %v1019 = vunpack.c.h.b16 %v157
    %v1020 = vpack.c.b16 %v996, %v972
    %v1021 = vpack.c.b16 %v997, %v973
    %v1022 = vpack.c.b16 %v998, %v974
    %v1023 = vpack.c.b16 %v999, %v975
    %v1024 = vpack.c.b16 %v1000, %v976
    %v1025 = vpack.c.b16 %v1001, %v977
    %v1026 = vpack.c.b16 %v1002, %v978
    %v1027 = vpack.c.b16 %v1003, %v979
    %v1028 = vpack.c.b16 %v1004, %v980
    %v1029 = vpack.c.b16 %v1005, %v981
    %v1030 = vpack.c.b16 %v1006, %v982
    %v1031 = vpack.c.b16 %v1007, %v983
    %v1032 = vpack.c.b16 %v1008, %v984
    %v1033 = vpack.c.b16 %v1009, %v985
    %v1034 = vpack.c.b16 %v1010, %v986
    %v1035 = vpack.c.b16 %v1011, %v987
    %v1036 = vpack.c.b16 %v1012, %v988
    %v1037 = vpack.c.b16 %v1013, %v989
    %v1038 = vpack.c.b16 %v1014, %v990
    %v1039 = vpack.c.b16 %v1015, %v991
    %v1040 = vpack.c.b16 %v1016, %v992
    %v1041 = vpack.c.b16 %v1017, %v993
    %v1042 = vpack.c.b16 %v1018, %v994
    %v1043 = vpack.c.b16 %v1019, %v995
    %v1836 = vunpack.c.l.b16 %v158
    %v1837 = vunpack.c.h.b16 %v158
    %v1838 = vunpack.c.l.b16 %v159
    %v1839 = vunpack.c.h.b16 %v159
    %v1840 = vunpack.c.l.b16 %v160
    %v1841 = vunpack.c.h.b16 %v160
    %v1842 = vunpack.c.l.b16 %v161
    %v1843 = vunpack.c.h.b16 %v161
    %v1844 = vunpack.c.l.b16 %v162
    %v1845 = vunpack.c.h.b16 %v162
    %v1846 = vunpack.c.l.b16 %v163
    %v1847 = vunpack.c.h.b16 %v163
    %v1848 = vunpack.c.l.b16 %v164
    %v1849 = vunpack.c.h.b16 %v164
    %v1850 = vunpack.c.l.b16 %v165
    %v1851 = vunpack.c.h.b16 %v165
    %v1852 = vunpack.c.l.b16 %v166
    %v1853 = vunpack.c.h.b16 %v166
    %v1854 = vunpack.c.l.b16 %v167
    %v1855 = vunpack.c.h.b16 %v167
    %v1856 = vunpack.c.l.b16 %v168
    %v1857 = vunpack.c.h.b16 %v168
    %v1858 = vunpack.c.l.b16 %v169
    %v1859 = vunpack.c.h.b16 %v169
    %v1860 = vunpack.c.l.b16 %v170
    %v1861 = vunpack.c.h.b16 %v170
    %v1862 = vunpack.c.l.b16 %v171
    %v1863 = vunpack.c.h.b16 %v171
    %v1864 = vunpack.c.l.b16 %v172
    %v1865 = vunpack.c.h.b16 %v172
    %v1866 = vunpack.c.l.b16 %v173
    %v1867 = vunpack.c.h.b16 %v173
    %v1868 = vunpack.c.l.b16 %v174
    %v1869 = vunpack.c.h.b16 %v174
    %v1870 = vunpack.c.l.b16 %v175
    %v1871 = vunpack.c.h.b16 %v175
    %v1872 = vunpack.c.l.b16 %v176
    %v1873 = vunpack.c.h.b16 %v176
    %v1874 = vunpack.c.l.b16 %v177
    %v1875 = vunpack.c.h.b16 %v177
    %v1876 = vunpack.c.l.b16 %v178
    %v1877 = vunpack.c.h.b16 %v178
    %v1878 = vunpack.c.l.b16 %v179
    %v1879 = vunpack.c.h.b16 %v179
    %v1880 = vunpack.c.l.b16 %v180
    %v1881 = vunpack.c.h.b16 %v180
    %v1882 = vunpack.c.l.b16 %v181
    %v1883 = vunpack.c.h.b16 %v181
    %v1884 = vunpack.c.l.b16 %v182
    %v1885 = vunpack.c.h.b16 %v182
    %v1886 = vunpack.c.l.b16 %v183
    %v1887 = vunpack.c.h.b16 %v183
    %v1888 = vunpack.c.l.b16 %v184
    %v1889 = vunpack.c.h.b16 %v184
    %v1890 = vunpack.c.l.b16 %v185
    %v1891 = vunpack.c.h.b16 %v185
    %v1892 = vunpack.c.l.b16 %v186
    %v1893 = vunpack.c.h.b16 %v186
    %v1894 = vunpack.c.l.b16 %v187
    %v1895 = vunpack.c.h.b16 %v187
    %v1896 = vunpack.c.l.b16 %v188
    %v1897 = vunpack.c.h.b16 %v188
    %v1898 = vunpack.c.l.b16 %v189
    %v1899 = vunpack.c.h.b16 %v189
    %v1900 = vunpack.c.l.b16 %v190
    %v1901 = vunpack.c.h.b16 %v190
    %v1902 = vunpack.c.l.b16 %v191
    %v1903 = vunpack.c.h.b16 %v191
    %v1904 = vunpack.c.l.b16 %v192
    %v1905 = vunpack.c.h.b16 %v192
    %v1906 = vunpack.c.l.b16 %v193
    %v1907 = vunpack.c.h.b16 %v193
    %v1908 = vunpack.c.l.b16 %v194
    %v1909 = vunpack.c.h.b16 %v194
    %v1910 = vunpack.c.l.b16 %v195
    %v1911 = vunpack.c.h.b16 %v195
    %v1912 = vunpack.c.l.b16 %v196
    %v1913 = vunpack.c.h.b16 %v196
    %v1914 = vunpack.c.l.b16 %v197
    %v1915 = vunpack.c.h.b16 %v197
    %v1916 = vunpack.c.l.b16 %v198
    %v1917 = vunpack.c.h.b16 %v198
    %v1918 = vunpack.c.l.b16 %v199
    %v1919 = vunpack.c.h.b16 %v199
    %v1920 = vunpack.c.l.b16 %v200
    %v1921 = vunpack.c.h.b16 %v200
    %v1922 = vunpack.c.l.b16 %v201
    %v1923 = vunpack.c.h.b16 %v201
    %v1924 = vunpack.c.l.b16 %v202
    %v1925 = vunpack.c.h.b16 %v202
    %v1926 = vunpack.c.l.b16 %v203
    %v1927 = vunpack.c.h.b16 %v203
    %v1928 = vunpack.c.l.b16 %v204
    %v1929 = vunpack.c.h.b16 %v204
    %v1930 = vunpack.c.l.b16 %v205
    %v1931 = vunpack.c.h.b16 %v205
    %v1932 = vunpack.c.l.b16 %v206
    %v1933 = vunpack.c.h.b16 %v206
    %v1934 = vunpack.c.l.b16 %v207
    %v1935 = vunpack.c.h.b16 %v207
    %v1936 = vunpack.c.l.b16 %v208
    %v1937 = vunpack.c.h.b16 %v208
    %v1938 = vunpack.c.l.b16 %v209
    %v1939 = vunpack.c.h.b16 %v209
    %v1940 = vunpack.c.l.b16 %v210
    %v1941 = vunpack.c.h.b16 %v210
    %v1942 = vunpack.c.l.b16 %v211
    %v1943 = vunpack.c.h.b16 %v211
    %v1944 = vunpack.c.l.b16 %v212
    %v1945 = vunpack.c.h.b16 %v212
    %v1946 = vunpack.c.l.b16 %v213
    %v1947 = vunpack.c.h.b16 %v213
    %v1948 = vunpack.c.l.b16 %v214
    %v1949 = vunpack.c.h.b16 %v214
    %v1950 = vunpack.c.l.b16 %v215
    %v1951 = vunpack.c.h.b16 %v215
    %v1952 = vunpack.c.l.b16 %v216
    %v1953 = vunpack.c.h.b16 %v216
    %v1954 = vunpack.c.l.b16 %v217
    %v1955 = vunpack.c.h.b16 %v217
    %v1956 = vunpack.c.l.b16 %v218
    %v1957 = vunpack.c.h.b16 %v218
    %v1958 = vunpack.c.l.b16 %v219
    %v1959 = vunpack.c.h.b16 %v219
    %v1960 = vunpack.c.l.b16 %v220
    %v1961 = vunpack.c.h.b16 %v220
    %v1962 = vunpack.c.l.b16 %v221
    %v1963 = vunpack.c.h.b16 %v221
    %v1964 = vunpack.c.l.b16 %v222
    %v1965 = vunpack.c.h.b16 %v222
    %v1966 = vunpack.c.l.b16 %v223
    %v1967 = vunpack.c.h.b16 %v223
    %v1968 = vunpack.c.l.b16 %v224
    %v1969 = vunpack.c.h.b16 %v224
    %v1970 = vunpack.c.l.b16 %v225
    %v1971 = vunpack.c.h.b16 %v225
    %v1972 = vunpack.c.l.b16 %v226
    %v1973 = vunpack.c.h.b16 %v226
    %v1974 = vunpack.c.l.b16 %v227
    %v1975 = vunpack.c.h.b16 %v227
    %v1976 = vunpack.c.l.b16 %v228
    %v1977 = vunpack.c.h.b16 %v228
    %v1978 = vunpack.c.l.b16 %v229
    %v1979 = vunpack.c.h.b16 %v229
    %v1980 = vunpack.c.l.b16 %v230
    %v1981 = vunpack.c.h.b16 %v230
    %v1982 = vunpack.c.l.b16 %v231
    %v1983 = vunpack.c.h.b16 %v231
    %v1984 = vunpack.c.l.b16 %v232
    %v1985 = vunpack.c.h.b16 %v232
    %v1986 = vunpack.c.l.b16 %v233
    %v1987 = vunpack.c.h.b16 %v233
    %v1988 = vunpack.c.l.b16 %v234
    %v1989 = vunpack.c.h.b16 %v234
    %v1990 = vunpack.c.l.b16 %v235
    %v1991 = vunpack.c.h.b16 %v235
    %v1992 = vunpack.c.l.b16 %v236
    %v1993 = vunpack.c.h.b16 %v236
    %v1994 = vunpack.c.l.b16 %v237
    %v1995 = vunpack.c.h.b16 %v237
    %v1996 = vunpack.c.l.b16 %v238
    %v1997 = vunpack.c.h.b16 %v238
    %v1998 = vunpack.c.l.b16 %v239
    %v1999 = vunpack.c.h.b16 %v239
    %v2000 = vunpack.c.l.b16 %v240
    %v2001 = vunpack.c.h.b16 %v240
    %v2002 = vunpack.c.l.b16 %v241
    %v2003 = vunpack.c.h.b16 %v241
    %v2004 = vunpack.c.l.b16 %v242
    %v2005 = vunpack.c.h.b16 %v242
    %v2006 = vunpack.c.l.b16 %v243
    %v2007 = vunpack.c.h.b16 %v243
    %v2008 = vunpack.c.l.b16 %v244
    %v2009 = vunpack.c.h.b16 %v244
    %v2010 = vunpack.c.l.b16 %v245
    %v2011 = vunpack.c.h.b16 %v245
    %v2012 = vunpack.c.l.b16 %v246
    %v2013 = vunpack.c.h.b16 %v246
    %v2014 = vunpack.c.l.b16 %v247
    %v2015 = vunpack.c.h.b16 %v247
    %v2016 = vunpack.c.l.b16 %v248
    %v2017 = vunpack.c.h.b16 %v248
    %v2018 = vunpack.c.l.b16 %v249
    %v2019 = vunpack.c.h.b16 %v249
    %v2020 = vunpack.c.l.b16 %v250
    %v2021 = vunpack.c.h.b16 %v250
    %v2022 = vunpack.c.l.b16 %v251
    %v2023 = vunpack.c.h.b16 %v251
    %v2024 = vunpack.c.l.b16 %v252
    %v2025 = vunpack.c.h.b16 %v252
    %v2026 = vunpack.c.l.b16 %v253
    %v2027 = vunpack.c.h.b16 %v253
    %v2028 = vunpack.c.l.b16 %v254
    %v2029 = vunpack.c.h.b16 %v254
    %v2030 = vunpack.c.l.b16 %v255
    %v2031 = vunpack.c.h.b16 %v255
    %v2032 = vunpack.c.l.b16 %v256
    %v2033 = vunpack.c.h.b16 %v256
    %v2034 = vunpack.c.l.b16 %v257
    %v2035 = vunpack.c.h.b16 %v257
    %v2036 = vunpack.c.l.b16 %v258
    %v2037 = vunpack.c.h.b16 %v258
    %v2038 = vunpack.c.l.b16 %v259
    %v2039 = vunpack.c.h.b16 %v259
    %v2040 = vunpack.c.l.b16 %v260
    %v2041 = vunpack.c.h.b16 %v260
    %v2042 = vunpack.c.l.b16 %v261
    %v2043 = vunpack.c.h.b16 %v261
    %v2044 = vunpack.c.l.b16 %v262
    %v2045 = vunpack.c.h.b16 %v262
    %v2046 = vunpack.c.l.b16 %v263
    %v2047 = vunpack.c.h.b16 %v263
    %v2048 = vunpack.c.l.b16 %v264
    %v2049 = vunpack.c.h.b16 %v264
    %v2050 = vunpack.c.l.b16 %v265
    %v2051 = vunpack.c.h.b16 %v265
    %v2052 = vunpack.c.l.b16 %v266
    %v2053 = vunpack.c.h.b16 %v266
    %v2054 = vunpack.c.l.b16 %v267
    %v2055 = vunpack.c.h.b16 %v267
    %v2056 = vunpack.c.l.b16 %v268
    %v2057 = vunpack.c.h.b16 %v268
    %v2058 = vunpack.c.l.b16 %v269
    %v2059 = vunpack.c.h.b16 %v269
    %v2060 = vunpack.c.l.b16 %v270
    %v2061 = vunpack.c.h.b16 %v270
    %v2062 = vunpack.c.l.b16 %v271
    %v2063 = vunpack.c.h.b16 %v271
    %v2064 = vunpack.c.l.b16 %v272
    %v2065 = vunpack.c.h.b16 %v272
    %v2066 = vunpack.c.l.b16 %v273
    %v2067 = vunpack.c.h.b16 %v273
    %v2068 = vunpack.c.l.b16 %v274
    %v2069 = vunpack.c.h.b16 %v274
    %v2070 = vunpack.c.l.b16 %v275
    %v2071 = vunpack.c.h.b16 %v275
    %v2072 = vunpack.c.l.b16 %v276
    %v2073 = vunpack.c.h.b16 %v276
    %v2074 = vunpack.c.l.b16 %v277
    %v2075 = vunpack.c.h.b16 %v277
    %v2076 = vunpack.c.l.b16 %v278
    %v2077 = vunpack.c.h.b16 %v278
    %v2078 = vunpack.c.l.b16 %v279
    %v2079 = vunpack.c.h.b16 %v279
    %v2080 = vunpack.c.l.b16 %v280
    %v2081 = vunpack.c.h.b16 %v280
    %v2082 = vunpack.c.l.b16 %v281
    %v2083 = vunpack.c.h.b16 %v281
    %v2084 = vunpack.c.l.b16 %v282
    %v2085 = vunpack.c.h.b16 %v282
    %v2086 = vunpack.c.l.b16 %v283
    %v2087 = vunpack.c.h.b16 %v283
    %v2088 = vunpack.c.l.b16 %v284
    %v2089 = vunpack.c.h.b16 %v284
    %v2090 = vunpack.c.l.b16 %v285
    %v2091 = vunpack.c.h.b16 %v285
    %v2092 = vunpack.c.l.b16 %v286
    %v2093 = vunpack.c.h.b16 %v286
    %v2094 = vunpack.c.l.b16 %v287
    %v2095 = vunpack.c.h.b16 %v287
    %v2096 = vunpack.c.l.b16 %v288
    %v2097 = vunpack.c.h.b16 %v288
    %v2098 = vunpack.c.l.b16 %v289
    %v2099 = vunpack.c.h.b16 %v289
    %v2100 = vunpack.c.l.b16 %v290
    %v2101 = vunpack.c.h.b16 %v290
    %v2102 = vunpack.c.l.b16 %v291
    %v2103 = vunpack.c.h.b16 %v291
    %v2104 = vunpack.c.l.b16 %v292
    %v2105 = vunpack.c.h.b16 %v292
    %v2106 = vunpack.c.l.b16 %v293
    %v2107 = vunpack.c.h.b16 %v293
    %v2108 = vunpack.c.l.b16 %v294
    %v2109 = vunpack.c.h.b16 %v294
    %v2110 = vunpack.c.l.b16 %v295
    %v2111 = vunpack.c.h.b16 %v295
    %v2112 = vunpack.c.l.b16 %v296
    %v2113 = vunpack.c.h.b16 %v296
    %v2114 = vunpack.c.l.b16 %v297
    %v2115 = vunpack.c.h.b16 %v297
    %v2116 = vunpack.c.l.b16 %v298
    %v2117 = vunpack.c.h.b16 %v298
    %v2118 = vunpack.c.l.b16 %v299
    %v2119 = vunpack.c.h.b16 %v299
    %v2120 = vunpack.c.l.b16 %v300
    %v2121 = vunpack.c.h.b16 %v300
    %v2122 = vunpack.c.l.b16 %v301
    %v2123 = vunpack.c.h.b16 %v301
    %v2124 = vunpack.c.l.b16 %v302
    %v2125 = vunpack.c.h.b16 %v302
    %v2126 = vunpack.c.l.b16 %v303
    %v2127 = vunpack.c.h.b16 %v303
    %v2128 = vunpack.c.l.b16 %v304
    %v2129 = vunpack.c.h.b16 %v304
    %v2130 = vunpack.c.l.b16 %v305
    %v2131 = vunpack.c.h.b16 %v305
    %v2132 = vunpack.c.l.b16 %v306
    %v2133 = vunpack.c.h.b16 %v306
    %v2134 = vunpack.c.l.b16 %v307
    %v2135 = vunpack.c.h.b16 %v307
    %v2136 = vunpack.c.l.b16 %v308
    %v2137 = vunpack.c.h.b16 %v308
    %v2138 = vunpack.c.l.b16 %v309
    %v2139 = vunpack.c.h.b16 %v309
    %v2140 = vunpack.c.l.b16 %v310
    %v2141 = vunpack.c.h.b16 %v310
    %v2142 = vunpack.c.l.b16 %v311
    %v2143 = vunpack.c.h.b16 %v311
    %v2144 = vunpack.c.l.b16 %v312
    %v2145 = vunpack.c.h.b16 %v312
    %v2146 = vunpack.c.l.b16 %v313
    %v2147 = vunpack.c.h.b16 %v313
    %v2148 = vunpack.c.l.b16 %v314
    %v2149 = vunpack.c.h.b16 %v314
    %v2150 = vunpack.c.l.b16 %v315
    %v2151 = vunpack.c.h.b16 %v315
    %v2152 = vunpack.c.l.b16 %v316
    %v2153 = vunpack.c.h.b16 %v316
    %v2154 = vunpack.c.l.b16 %v317
    %v2155 = vunpack.c.h.b16 %v317
    %v2156 = vunpack.c.l.b16 %v318
    %v2157 = vunpack.c.h.b16 %v318
    %v2158 = vunpack.c.l.b16 %v319
    %v2159 = vunpack.c.h.b16 %v319
    %v2160 = vunpack.c.l.b16 %v320
    %v2161 = vunpack.c.h.b16 %v320
    %v2162 = vunpack.c.l.b16 %v321
    %v2163 = vunpack.c.h.b16 %v321
    %v2164 = vunpack.c.l.b16 %v322
    %v2165 = vunpack.c.h.b16 %v322
    %v2166 = vunpack.c.l.b16 %v323
    %v2167 = vunpack.c.h.b16 %v323
    %v2168 = vunpack.c.l.b16 %v324
    %v2169 = vunpack.c.h.b16 %v324
    %v2170 = vunpack.c.l.b16 %v325
    %v2171 = vunpack.c.h.b16 %v325
    %v2172 = vunpack.c.l.b16 %v326
    %v2173 = vunpack.c.h.b16 %v326
    %v2174 = vunpack.c.l.b16 %v327
    %v2175 = vunpack.c.h.b16 %v327
    %v2176 = vunpack.c.l.b16 %v328
    %v2177 = vunpack.c.h.b16 %v328
    %v2178 = vunpack.c.l.b16 %v329
    %v2179 = vunpack.c.h.b16 %v329
    %v2180 = vunpack.c.l.b16 %v330
    %v2181 = vunpack.c.h.b16 %v330
    %v2182 = vunpack.c.l.b16 %v331
    %v2183 = vunpack.c.h.b16 %v331
    %v2184 = vunpack.c.l.b16 %v332
    %v2185 = vunpack.c.h.b16 %v332
    %v2186 = vunpack.c.l.b16 %v333
    %v2187 = vunpack.c.h.b16 %v333
    %v2188 = vunpack.c.l.b16 %v334
    %v2189 = vunpack.c.h.b16 %v334
    %v2190 = vunpack.c.l.b16 %v335
    %v2191 = vunpack.c.h.b16 %v335
    %v2192 = vunpack.c.l.b16 %v336
    %v2193 = vunpack.c.h.b16 %v336
    %v2194 = vunpack.c.l.b16 %v337
    %v2195 = vunpack.c.h.b16 %v337
    %v2196 = vunpack.c.l.b16 %v338
    %v2197 = vunpack.c.h.b16 %v338
    %v2198 = vunpack.c.l.b16 %v339
    %v2199 = vunpack.c.h.b16 %v339
    %v2200 = vunpack.c.l.b16 %v340
    %v2201 = vunpack.c.h.b16 %v340
    %v2202 = vunpack.c.l.b16 %v341
    %v2203 = vunpack.c.h.b16 %v341
    %v2204 = vunpack.c.l.b16 %v342
    %v2205 = vunpack.c.h.b16 %v342
    %v2206 = vunpack.c.l.b16 %v343
    %v2207 = vunpack.c.h.b16 %v343
    %v2208 = vunpack.c.l.b16 %v344
    %v2209 = vunpack.c.h.b16 %v344
    %v2210 = vunpack.c.l.b16 %v345
    %v2211 = vunpack.c.h.b16 %v345
    %v2212 = vunpack.c.l.b16 %v346
    %v2213 = vunpack.c.h.b16 %v346
    %v2214 = vunpack.c.l.b16 %v347
    %v2215 = vunpack.c.h.b16 %v347
    %v2216 = vunpack.c.l.b16 %v348
    %v2217 = vunpack.c.h.b16 %v348
    %v2218 = vunpack.c.l.b16 %v349
    %v2219 = vunpack.c.h.b16 %v349
    %v2220 = vunpack.c.l.b16 %v350
    %v2221 = vunpack.c.h.b16 %v350
    %v2222 = vunpack.c.l.b16 %v351
    %v2223 = vunpack.c.h.b16 %v351
    %v2224 = vunpack.c.l.b16 %v352
    %v2225 = vunpack.c.h.b16 %v352
    %v2226 = vunpack.c.l.b16 %v353
    %v2227 = vunpack.c.h.b16 %v353
    %v2228 = vunpack.c.l.b16 %v354
    %v2229 = vunpack.c.h.b16 %v354
    %v2230 = vunpack.c.l.b16 %v355
    %v2231 = vunpack.c.h.b16 %v355
    %v2232 = vunpack.c.l.b16 %v356
    %v2233 = vunpack.c.h.b16 %v356
    %v2234 = vunpack.c.l.b16 %v357
    %v2235 = vunpack.c.h.b16 %v357
    %v2236 = vunpack.c.l.b16 %v358
    %v2237 = vunpack.c.h.b16 %v358
    %v2238 = vunpack.c.l.b16 %v359
    %v2239 = vunpack.c.h.b16 %v359
    %v2240 = vunpack.c.l.b16 %v360
    %v2241 = vunpack.c.h.b16 %v360
    %v2242 = vunpack.c.l.b16 %v361
    %v2243 = vunpack.c.h.b16 %v361
    %v2244 = vunpack.c.l.b16 %v362
    %v2245 = vunpack.c.h.b16 %v362
    %v2246 = vunpack.c.l.b16 %v363
    %v2247 = vunpack.c.h.b16 %v363
    %v2248 = vunpack.c.l.b16 %v364
    %v2249 = vunpack.c.h.b16 %v364
    %v2250 = vunpack.c.l.b16 %v365
    %v2251 = vunpack.c.h.b16 %v365
    %v2252 = vunpack.c.l.b16 %v366
    %v2253 = vunpack.c.h.b16 %v366
    %v2254 = vunpack.c.l.b16 %v367
    %v2255 = vunpack.c.h.b16 %v367
    %v2256 = vunpack.c.l.b16 %v368
    %v2257 = vunpack.c.h.b16 %v368
    %v2258 = vunpack.c.l.b16 %v369
    %v2259 = vunpack.c.h.b16 %v369
    %v2260 = vunpack.c.l.b16 %v370
    %v2261 = vunpack.c.h.b16 %v370
    %v2262 = vunpack.c.l.b16 %v371
    %v2263 = vunpack.c.h.b16 %v371
    %v2264 = vunpack.c.l.b16 %v372
    %v2265 = vunpack.c.h.b16 %v372
    %v2266 = vunpack.c.l.b16 %v373
    %v2267 = vunpack.c.h.b16 %v373
    %v2268 = vunpack.c.l.b16 %v374
    %v2269 = vunpack.c.h.b16 %v374
    %v2270 = vunpack.c.l.b16 %v375
    %v2271 = vunpack.c.h.b16 %v375
    %v2272 = vunpack.c.l.b16 %v376
    %v2273 = vunpack.c.h.b16 %v376
    %v2274 = vunpack.c.l.b16 %v377
    %v2275 = vunpack.c.h.b16 %v377
    %v2276 = vunpack.c.l.b16 %v378
    %v2277 = vunpack.c.h.b16 %v378
    %v2278 = vunpack.c.l.b16 %v379
    %v2279 = vunpack.c.h.b16 %v379
    %v2280 = vunpack.c.l.b16 %v380
    %v2281 = vunpack.c.h.b16 %v380
    %v2282 = vunpack.c.l.b16 %v381
    %v2283 = vunpack.c.h.b16 %v381
    %v2284 = vunpack.c.l.b16 %v382
    %v2285 = vunpack.c.h.b16 %v382
    %v2286 = vunpack.c.l.b16 %v383
    %v2287 = vunpack.c.h.b16 %v383
    %v2288 = vunpack.c.l.b16 %v384
    %v2289 = vunpack.c.h.b16 %v384
    %v2290 = vunpack.c.l.b16 %v385
    %v2291 = vunpack.c.h.b16 %v385
    %v2292 = vunpack.c.l.b16 %v386
    %v2293 = vunpack.c.h.b16 %v386
    %v2294 = vunpack.c.l.b16 %v387
    %v2295 = vunpack.c.h.b16 %v387
    %v2296 = vunpack.c.l.b16 %v388
    %v2297 = vunpack.c.h.b16 %v388
    %v2298 = vunpack.c.l.b16 %v389
    %v2299 = vunpack.c.h.b16 %v389
    %v2300 = vunpack.c.l.b16 %v390
    %v2301 = vunpack.c.h.b16 %v390
    %v2302 = vunpack.c.l.b16 %v391
    %v2303 = vunpack.c.h.b16 %v391
    %v2304 = vunpack.c.l.b16 %v392
    %v2305 = vunpack.c.h.b16 %v392
    %v2306 = vunpack.c.l.b16 %v393
    %v2307 = vunpack.c.h.b16 %v393
    %v2308 = vunpack.c.l.b16 %v394
    %v2309 = vunpack.c.h.b16 %v394
    %v2310 = vunpack.c.l.b16 %v395
    %v2311 = vunpack.c.h.b16 %v395
    %v2312 = vunpack.c.l.b16 %v396
    %v2313 = vunpack.c.h.b16 %v396
    %v2314 = vunpack.c.l.b16 %v397
    %v2315 = vunpack.c.h.b16 %v397
    %v2316 = vunpack.c.l.b16 %v398
    %v2317 = vunpack.c.h.b16 %v398
    %v2318 = vunpack.c.l.b16 %v399
    %v2319 = vunpack.c.h.b16 %v399
    %v2320 = vunpack.c.l.b16 %v400
    %v2321 = vunpack.c.h.b16 %v400
    %v2322 = vunpack.c.l.b16 %v401
    %v2323 = vunpack.c.h.b16 %v401
    %v2324 = vunpack.c.l.b16 %v402
    %v2325 = vunpack.c.h.b16 %v402
    %v2326 = vunpack.c.l.b16 %v403
    %v2327 = vunpack.c.h.b16 %v403
    %v2328 = vunpack.c.l.b16 %v404
    %v2329 = vunpack.c.h.b16 %v404
    %v2330 = vunpack.c.l.b16 %v405
    %v2331 = vunpack.c.h.b16 %v405
    %v2332 = vunpack.c.l.b16 %v406
    %v2333 = vunpack.c.h.b16 %v406
    %v2334 = vunpack.c.l.b16 %v407
    %v2335 = vunpack.c.h.b16 %v407
    %v2336 = vunpack.c.l.b16 %v408
    %v2337 = vunpack.c.h.b16 %v408
    %v2338 = vunpack.c.l.b16 %v409
    %v2339 = vunpack.c.h.b16 %v409
    %v2340 = vunpack.c.l.b16 %v410
    %v2341 = vunpack.c.h.b16 %v410
    %v2342 = vunpack.c.l.b16 %v411
    %v2343 = vunpack.c.h.b16 %v411
    %v2344 = vunpack.c.l.b16 %v412
    %v2345 = vunpack.c.h.b16 %v412
    %v2346 = vunpack.c.l.b16 %v413
    %v2347 = vunpack.c.h.b16 %v413
    %v2348 = vunpack.c.l.b16 %v414
    %v2349 = vunpack.c.h.b16 %v414
    %v2350 = vunpack.c.l.b16 %v415
    %v2351 = vunpack.c.h.b16 %v415
    %v2352 = vunpack.c.l.b16 %v416
    %v2353 = vunpack.c.h.b16 %v416
    %v2354 = vunpack.c.l.b16 %v417
    %v2355 = vunpack.c.h.b16 %v417
    %v2356 = vunpack.c.l.b16 %v418
    %v2357 = vunpack.c.h.b16 %v418
    %v2358 = vunpack.c.l.b16 %v419
    %v2359 = vunpack.c.h.b16 %v419
    %v2360 = vunpack.c.l.b16 %v420
    %v2361 = vunpack.c.h.b16 %v420
    %v2362 = vunpack.c.l.b16 %v421
    %v2363 = vunpack.c.h.b16 %v421
    %v2364 = vunpack.c.l.b16 %v422
    %v2365 = vunpack.c.h.b16 %v422
    %v2366 = vunpack.c.l.b16 %v423
    %v2367 = vunpack.c.h.b16 %v423
    %v2368 = vunpack.c.l.b16 %v424
    %v2369 = vunpack.c.h.b16 %v424
    %v2370 = vunpack.c.l.b16 %v425
    %v2371 = vunpack.c.h.b16 %v425
    %v2372 = vunpack.c.l.b16 %v426
    %v2373 = vunpack.c.h.b16 %v426
    %v2374 = vunpack.c.l.b16 %v427
    %v2375 = vunpack.c.h.b16 %v427
    %v2376 = vunpack.c.l.b16 %v428
    %v2377 = vunpack.c.h.b16 %v428
    %v2378 = vunpack.c.l.b16 %v429
    %v2379 = vunpack.c.h.b16 %v429
    %v2380 = vunpack.c.l.b16 %v430
    %v2381 = vunpack.c.h.b16 %v430
    %v2382 = vunpack.c.l.b16 %v431
    %v2383 = vunpack.c.h.b16 %v431
    %v2384 = vunpack.c.l.b16 %v432
    %v2385 = vunpack.c.h.b16 %v432
    %v2386 = vunpack.c.l.b16 %v433
    %v2387 = vunpack.c.h.b16 %v433
    %v2388 = vunpack.c.l.b16 %v434
    %v2389 = vunpack.c.h.b16 %v434
    %v2390 = vunpack.c.l.b16 %v435
    %v2391 = vunpack.c.h.b16 %v435
    %v2392 = vunpack.c.l.b16 %v436
    %v2393 = vunpack.c.h.b16 %v436
    %v2394 = vunpack.c.l.b16 %v437
    %v2395 = vunpack.c.h.b16 %v437
    %v2396 = vunpack.c.l.b16 %v438
    %v2397 = vunpack.c.h.b16 %v438
    %v2398 = vunpack.c.l.b16 %v439
    %v2399 = vunpack.c.h.b16 %v439
    %v2400 = vunpack.c.l.b16 %v440
    %v2401 = vunpack.c.h.b16 %v440
    %v2402 = vunpack.c.l.b16 %v441
    %v2403 = vunpack.c.h.b16 %v441
    %v2404 = vunpack.c.l.b16 %v442
    %v2405 = vunpack.c.h.b16 %v442
    %v2406 = vunpack.c.l.b16 %v443
    %v2407 = vunpack.c.h.b16 %v443
    %v2408 = vunpack.c.l.b16 %v444
    %v2409 = vunpack.c.h.b16 %v444
    %v2410 = vunpack.c.l.b16 %v445
    %v2411 = vunpack.c.h.b16 %v445
    %v2412 = vunpack.c.l.b16 %v446
    %v2413 = vunpack.c.h.b16 %v446
    %v2414 = vunpack.c.l.b16 %v447
    %v2415 = vunpack.c.h.b16 %v447
    %v2416 = vunpack.c.l.b16 %v448
    %v2417 = vunpack.c.h.b16 %v448
    %v2418 = vunpack.c.l.b16 %v449
    %v2419 = vunpack.c.h.b16 %v449
    %v2420 = vunpack.c.l.b16 %v450
    %v2421 = vunpack.c.h.b16 %v450
    %v2422 = vunpack.c.l.b16 %v451
    %v2423 = vunpack.c.h.b16 %v451
    %v2424 = vunpack.c.l.b16 %v452
    %v2425 = vunpack.c.h.b16 %v452
    %v2426 = vunpack.c.l.b16 %v453
    %v2427 = vunpack.c.h.b16 %v453
    %v2428 = vunpack.c.l.b16 %v454
    %v2429 = vunpack.c.h.b16 %v454
    %v2430 = vunpack.c.l.b16 %v455
    %v2431 = vunpack.c.h.b16 %v455
    %v2432 = vunpack.c.l.b16 %v456
    %v2433 = vunpack.c.h.b16 %v456
    %v2434 = vunpack.c.l.b16 %v457
    %v2435 = vunpack.c.h.b16 %v457
    %v2436 = vunpack.c.l.b16 %v458
    %v2437 = vunpack.c.h.b16 %v458
    %v2438 = vunpack.c.l.b16 %v459
    %v2439 = vunpack.c.h.b16 %v459
    %v2440 = vunpack.c.l.b16 %v460
    %v2441 = vunpack.c.h.b16 %v460
    %v2442 = vunpack.c.l.b16 %v461
    %v2443 = vunpack.c.h.b16 %v461
    %v2444 = vunpack.c.l.b16 %v462
    %v2445 = vunpack.c.h.b16 %v462
    %v2446 = vunpack.c.l.b16 %v463
    %v2447 = vunpack.c.h.b16 %v463
    %v2448 = vunpack.c.l.b16 %v464
    %v2449 = vunpack.c.h.b16 %v464
    %v2450 = vunpack.c.l.b16 %v465
    %v2451 = vunpack.c.h.b16 %v465
    %v2452 = vunpack.c.l.b16 %v466
    %v2453 = vunpack.c.h.b16 %v466
    %v2454 = vunpack.c.l.b16 %v467
    %v2455 = vunpack.c.h.b16 %v467
    %v2456 = vunpack.c.l.b16 %v468
    %v2457 = vunpack.c.h.b16 %v468
    %v2458 = vunpack.c.l.b16 %v469
    %v2459 = vunpack.c.h.b16 %v469
    %v2460 = vunpack.c.l.b16 %v470
    %v2461 = vunpack.c.h.b16 %v470
    %v2462 = vunpack.c.l.b16 %v471
    %v2463 = vunpack.c.h.b16 %v471
    %v2464 = vunpack.c.l.b16 %v472
    %v2465 = vunpack.c.h.b16 %v472
    %v2466 = vunpack.c.l.b16 %v473
    %v2467 = vunpack.c.h.b16 %v473
    %v2468 = vunpack.c.l.b16 %v474
    %v2469 = vunpack.c.h.b16 %v474
    %v2470 = vunpack.c.l.b16 %v475
    %v2471 = vunpack.c.h.b16 %v475
    %v2472 = vunpack.c.l.b16 %v476
    %v2473 = vunpack.c.h.b16 %v476
    %v2474 = vunpack.c.l.b16 %v477
    %v2475 = vunpack.c.h.b16 %v477
    %v2476 = vunpack.c.l.b16 %v478
    %v2477 = vunpack.c.h.b16 %v478
    %v2478 = vunpack.c.l.b16 %v479
    %v2479 = vunpack.c.h.b16 %v479
    %v2480 = vunpack.c.l.b16 %v480
    %v2481 = vunpack.c.h.b16 %v480
    %v2482 = vunpack.c.l.b16 %v481
    %v2483 = vunpack.c.h.b16 %v481
    %v2484 = vunpack.c.l.b16 %v482
    %v2485 = vunpack.c.h.b16 %v482
    %v2486 = vunpack.c.l.b16 %v483
    %v2487 = vunpack.c.h.b16 %v483
    %v2488 = vunpack.c.l.b16 %v484
    %v2489 = vunpack.c.h.b16 %v484
    %v2490 = vunpack.c.l.b16 %v485
    %v2491 = vunpack.c.h.b16 %v485
    %v2492 = vunpack.c.l.b16 %v486
    %v2493 = vunpack.c.h.b16 %v486
    %v2494 = vunpack.c.l.b16 %v487
    %v2495 = vunpack.c.h.b16 %v487
    %v2496 = vunpack.c.l.b16 %v488
    %v2497 = vunpack.c.h.b16 %v488
    %v2498 = vunpack.c.l.b16 %v489
    %v2499 = vunpack.c.h.b16 %v489
    %v2500 = vunpack.c.l.b16 %v490
    %v2501 = vunpack.c.h.b16 %v490
    %v2502 = vunpack.c.l.b16 %v491
    %v2503 = vunpack.c.h.b16 %v491
    %v2504 = vunpack.c.l.b16 %v492
    %v2505 = vunpack.c.h.b16 %v492
    %v2506 = vunpack.c.l.b16 %v493
    %v2507 = vunpack.c.h.b16 %v493
    %v2508 = vunpack.c.l.b16 %v494
    %v2509 = vunpack.c.h.b16 %v494
    %v2510 = vunpack.c.l.b16 %v495
    %v2511 = vunpack.c.h.b16 %v495
    %v2512 = vunpack.c.l.b16 %v496
    %v2513 = vunpack.c.h.b16 %v496
    %v2514 = vunpack.c.l.b16 %v497
    %v2515 = vunpack.c.h.b16 %v497
    %v2516 = vunpack.c.l.b16 %v498
    %v2517 = vunpack.c.h.b16 %v498
    %v2518 = vunpack.c.l.b16 %v499
    %v2519 = vunpack.c.h.b16 %v499
    %v2520 = vunpack.c.l.b16 %v500
    %v2521 = vunpack.c.h.b16 %v500
    %v2522 = vunpack.c.l.b16 %v501
    %v2523 = vunpack.c.h.b16 %v501
    %v2524 = vunpack.c.l.b16 %v502
    %v2525 = vunpack.c.h.b16 %v502
    %v2526 = vunpack.c.l.b16 %v503
    %v2527 = vunpack.c.h.b16 %v503
    %v2528 = vunpack.c.l.b16 %v504
    %v2529 = vunpack.c.h.b16 %v504
    %v2530 = vunpack.c.l.b16 %v505
    %v2531 = vunpack.c.h.b16 %v505
    %v2532 = vunpack.c.l.b16 %v506
    %v2533 = vunpack.c.h.b16 %v506
    %v2534 = vunpack.c.l.b16 %v507
    %v2535 = vunpack.c.h.b16 %v507
    %v2536 = vunpack.c.l.b16 %v508
    %v2537 = vunpack.c.h.b16 %v508
    %v2538 = vunpack.c.l.b16 %v509
    %v2539 = vunpack.c.h.b16 %v509
    %v2540 = vunpack.c.l.b16 %v510
    %v2541 = vunpack.c.h.b16 %v510
    %v2542 = vunpack.c.l.b16 %v511
    %v2543 = vunpack.c.h.b16 %v511
    %v2544 = vunpack.c.l.b16 %v512
    %v2545 = vunpack.c.h.b16 %v512
    %v2546 = vunpack.c.l.b16 %v513
    %v2547 = vunpack.c.h.b16 %v513
    %v2548 = vunpack.c.l.b16 %v514
    %v2549 = vunpack.c.h.b16 %v514
    %v2550 = vunpack.c.l.b16 %v515
    %v2551 = vunpack.c.h.b16 %v515
    %v2552 = vunpack.c.l.b16 %v516
    %v2553 = vunpack.c.h.b16 %v516
    %v2554 = vunpack.c.l.b16 %v517
    %v2555 = vunpack.c.h.b16 %v517
    %v2556 = vunpack.c.l.b16 %v518
    %v2557 = vunpack.c.h.b16 %v518
    %v2558 = vunpack.c.l.b16 %v519
    %v2559 = vunpack.c.h.b16 %v519
    %v2560 = vunpack.c.l.b16 %v520
    %v2561 = vunpack.c.h.b16 %v520
    %v2562 = vunpack.c.l.b16 %v521
    %v2563 = vunpack.c.h.b16 %v521
    %v2564 = vunpack.c.l.b16 %v522
    %v2565 = vunpack.c.h.b16 %v522
    %v2566 = vunpack.c.l.b16 %v523
    %v2567 = vunpack.c.h.b16 %v523
    %v2568 = vunpack.c.l.b16 %v524
    %v2569 = vunpack.c.h.b16 %v524
    %v2570 = vunpack.c.l.b16 %v525
    %v2571 = vunpack.c.h.b16 %v525
    %v2572 = vunpack.c.l.b16 %v526
    %v2573 = vunpack.c.h.b16 %v526
    %v2574 = vunpack.c.l.b16 %v527
    %v2575 = vunpack.c.h.b16 %v527
    %v2576 = vunpack.c.l.b16 %v528
    %v2577 = vunpack.c.h.b16 %v528
    %v2578 = vunpack.c.l.b16 %v529
    %v2579 = vunpack.c.h.b16 %v529
    %v2580 = vunpack.c.l.b16 %v530
    %v2581 = vunpack.c.h.b16 %v530
    %v2582 = vunpack.c.l.b16 %v531
    %v2583 = vunpack.c.h.b16 %v531
    %v2584 = vunpack.c.l.b16 %v532
    %v2585 = vunpack.c.h.b16 %v532
    %v2586 = vunpack.c.l.b16 %v533
    %v2587 = vunpack.c.h.b16 %v533
    %v2588 = vunpack.c.l.b16 %v534
    %v2589 = vunpack.c.h.b16 %v534
    %v2590 = vunpack.c.l.b16 %v535
    %v2591 = vunpack.c.h.b16 %v535
    %v2592 = vunpack.c.l.b16 %v536
    %v2593 = vunpack.c.h.b16 %v536
    %v2594 = vunpack.c.l.b16 %v537
    %v2595 = vunpack.c.h.b16 %v537
    %v2596 = vunpack.c.l.b16 %v538
    %v2597 = vunpack.c.h.b16 %v538
    %v2598 = vunpack.c.l.b16 %v539
    %v2599 = vunpack.c.h.b16 %v539
    %v2600 = vunpack.c.l.b16 %v540
    %v2601 = vunpack.c.h.b16 %v540
    %v2602 = vunpack.c.l.b16 %v541
    %v2603 = vunpack.c.h.b16 %v541
    %v2604 = vunpack.c.l.b16 %v542
    %v2605 = vunpack.c.h.b16 %v542
    %v2606 = vunpack.c.l.b16 %v543
    %v2607 = vunpack.c.h.b16 %v543
    %v2608 = vunpack.c.l.b16 %v544
    %v2609 = vunpack.c.h.b16 %v544
    %v2610 = vunpack.c.l.b16 %v545
    %v2611 = vunpack.c.h.b16 %v545
    %v2612 = vunpack.c.l.b16 %v546
    %v2613 = vunpack.c.h.b16 %v546
    %v2614 = vunpack.c.l.b16 %v547
    %v2615 = vunpack.c.h.b16 %v547
    %v2616 = vunpack.c.l.b16 %v548
    %v2617 = vunpack.c.h.b16 %v548
    %v2618 = vunpack.c.l.b16 %v549
    %v2619 = vunpack.c.h.b16 %v549
    %v2620 = vunpack.c.l.b16 %v550
    %v2621 = vunpack.c.h.b16 %v550
    %v2622 = vunpack.c.l.b16 %v551
    %v2623 = vunpack.c.h.b16 %v551
    %v2624 = vunpack.c.l.b16 %v552
    %v2625 = vunpack.c.h.b16 %v552
    %v2626 = vunpack.c.l.b16 %v553
    %v2627 = vunpack.c.h.b16 %v553
    %v2628 = vunpack.c.l.b16 %v554
    %v2629 = vunpack.c.h.b16 %v554
    %v2630 = vunpack.c.l.b16 %v555
    %v2631 = vunpack.c.h.b16 %v555
    %v2632 = vunpack.c.l.b16 %v556
    %v2633 = vunpack.c.h.b16 %v556
    %v2634 = vunpack.c.l.b16 %v557
    %v2635 = vunpack.c.h.b16 %v557
    %v2636 = vunpack.c.l.b16 %v558
    %v2637 = vunpack.c.h.b16 %v558
    %v2638 = vunpack.c.l.b16 %v559
    %v2639 = vunpack.c.h.b16 %v559
    %v2640 = vunpack.c.l.b16 %v560
    %v2641 = vunpack.c.h.b16 %v560
    %v2642 = vunpack.c.l.b16 %v561
    %v2643 = vunpack.c.h.b16 %v561
    %v2644 = vunpack.c.l.b16 %v562
    %v2645 = vunpack.c.h.b16 %v562
    %v2646 = vunpack.c.l.b16 %v563
    %v2647 = vunpack.c.h.b16 %v563
    %v2648 = vunpack.c.l.b16 %v564
    %v2649 = vunpack.c.h.b16 %v564
    %v2650 = vunpack.c.l.b16 %v565
    %v2651 = vunpack.c.h.b16 %v565
    %v2652 = vunpack.c.l.b16 %v566
    %v2653 = vunpack.c.h.b16 %v566
    %v2654 = vunpack.c.l.b16 %v567
    %v2655 = vunpack.c.h.b16 %v567
    %v2656 = vunpack.c.l.b16 %v568
    %v2657 = vunpack.c.h.b16 %v568
    %v2658 = vunpack.c.l.b16 %v569
    %v2659 = vunpack.c.h.b16 %v569
    %v2660 = vunpack.c.l.b16 %v570
    %v2661 = vunpack.c.h.b16 %v570
    %v2662 = vunpack.c.l.b16 %v571
    %v2663 = vunpack.c.h.b16 %v571
    %v2664 = vunpack.c.l.b16 %v572
    %v2665 = vunpack.c.h.b16 %v572
    %v2666 = vunpack.c.l.b16 %v573
    %v2667 = vunpack.c.h.b16 %v573
    %v2668 = vunpack.c.l.b16 %v574
    %v2669 = vunpack.c.h.b16 %v574
    %v2670 = vunpack.c.l.b16 %v575
    %v2671 = vunpack.c.h.b16 %v575
    %v2672 = vunpack.c.l.b16 %v576
    %v2673 = vunpack.c.h.b16 %v576
    %v2674 = vunpack.c.l.b16 %v577
    %v2675 = vunpack.c.h.b16 %v577
    %v2676 = vunpack.c.l.b16 %v578
    %v2677 = vunpack.c.h.b16 %v578
    %v2678 = vunpack.c.l.b16 %v579
    %v2679 = vunpack.c.h.b16 %v579
    %v2680 = vunpack.c.l.b16 %v580
    %v2681 = vunpack.c.h.b16 %v580
    %v2682 = vunpack.c.l.b16 %v581
    %v2683 = vunpack.c.h.b16 %v581
    %v2684 = vunpack.c.l.b16 %v582
    %v2685 = vunpack.c.h.b16 %v582
    %v2686 = vunpack.c.l.b16 %v583
    %v2687 = vunpack.c.h.b16 %v583
    %v2688 = vunpack.c.l.b16 %v584
    %v2689 = vunpack.c.h.b16 %v584
    %v2690 = vunpack.c.l.b16 %v585
    %v2691 = vunpack.c.h.b16 %v585
    %v2692 = vunpack.c.l.b16 %v586
    %v2693 = vunpack.c.h.b16 %v586
    %v2694 = vunpack.c.l.b16 %v587
    %v2695 = vunpack.c.h.b16 %v587
    %v2696 = vunpack.c.l.b16 %v588
    %v2697 = vunpack.c.h.b16 %v588
    %v2698 = vunpack.c.l.b16 %v589
    %v2699 = vunpack.c.h.b16 %v589
    %v2700 = vunpack.c.l.b16 %v590
    %v2701 = vunpack.c.h.b16 %v590
    %v2702 = vunpack.c.l.b16 %v591
    %v2703 = vunpack.c.h.b16 %v591
    %v2704 = vunpack.c.l.b16 %v592
    %v2705 = vunpack.c.h.b16 %v592
    %v2706 = vunpack.c.l.b16 %v593
    %v2707 = vunpack.c.h.b16 %v593
    %v2708 = vunpack.c.l.b16 %v594
    %v2709 = vunpack.c.h.b16 %v594
    %v2710 = vunpack.c.l.b16 %v595
    %v2711 = vunpack.c.h.b16 %v595
    %v2712 = vunpack.c.l.b16 %v596
    %v2713 = vunpack.c.h.b16 %v596
    %v2714 = vunpack.c.l.b16 %v597
    %v2715 = vunpack.c.h.b16 %v597
    %v2716 = vunpack.c.l.b16 %v598
    %v2717 = vunpack.c.h.b16 %v598
    %v2718 = vunpack.c.l.b16 %v599
    %v2719 = vunpack.c.h.b16 %v599
    %v2720 = vunpack.c.l.b16 %v600
    %v2721 = vunpack.c.h.b16 %v600
    %v2722 = vunpack.c.l.b16 %v601
    %v2723 = vunpack.c.h.b16 %v601
    %v2724 = vunpack.c.l.b16 %v602
    %v2725 = vunpack.c.h.b16 %v602
    %v2726 = vunpack.c.l.b16 %v603
    %v2727 = vunpack.c.h.b16 %v603
    %v2728 = vunpack.c.l.b16 %v604
    %v2729 = vunpack.c.h.b16 %v604
    %v2730 = vunpack.c.l.b16 %v605
    %v2731 = vunpack.c.h.b16 %v605
    %v2732 = vunpack.c.l.b16 %v606
    %v2733 = vunpack.c.h.b16 %v606
    %v2734 = vunpack.c.l.b16 %v607
    %v2735 = vunpack.c.h.b16 %v607
    %v2736 = vunpack.c.l.b16 %v608
    %v2737 = vunpack.c.h.b16 %v608
    %v2738 = vunpack.c.l.b16 %v609
    %v2739 = vunpack.c.h.b16 %v609
    %v2740 = vunpack.c.l.b16 %v610
    %v2741 = vunpack.c.h.b16 %v610
    %v2742 = vunpack.c.l.b16 %v611
    %v2743 = vunpack.c.h.b16 %v611
    %v2744 = vunpack.c.l.b16 %v612
    %v2745 = vunpack.c.h.b16 %v612
    %v2746 = vunpack.c.l.b16 %v613
    %v2747 = vunpack.c.h.b16 %v613
    %v2748 = vunpack.c.l.b16 %v614
    %v2749 = vunpack.c.h.b16 %v614
    %v2750 = vunpack.c.l.b16 %v615
    %v2751 = vunpack.c.h.b16 %v615
    %v2752 = vunpack.c.l.b16 %v616
    %v2753 = vunpack.c.h.b16 %v616
    %v2754 = vunpack.c.l.b16 %v617
    %v2755 = vunpack.c.h.b16 %v617
    %v2756 = vunpack.c.l.b16 %v618
    %v2757 = vunpack.c.h.b16 %v618
    %v2758 = vunpack.c.l.b16 %v619
    %v2759 = vunpack.c.h.b16 %v619
    %v2760 = vunpack.c.l.b16 %v620
    %v2761 = vunpack.c.h.b16 %v620
    %v2762 = vunpack.c.l.b16 %v621
    %v2763 = vunpack.c.h.b16 %v621
    %v2764 = vunpack.c.l.b16 %v622
    %v2765 = vunpack.c.h.b16 %v622
    %v2766 = vunpack.c.l.b16 %v623
    %v2767 = vunpack.c.h.b16 %v623
    %v2768 = vunpack.c.l.b16 %v624
    %v2769 = vunpack.c.h.b16 %v624
    %v2770 = vunpack.c.l.b16 %v625
    %v2771 = vunpack.c.h.b16 %v625
    %v2772 = vunpack.c.l.b16 %v626
    %v2773 = vunpack.c.h.b16 %v626
    %v2774 = vunpack.c.l.b16 %v627
    %v2775 = vunpack.c.h.b16 %v627
    %v2776 = vunpack.c.l.b16 %v628
    %v2777 = vunpack.c.h.b16 %v628
    %v2778 = vunpack.c.l.b16 %v629
    %v2779 = vunpack.c.h.b16 %v629
    %v2780 = vunpack.c.l.b16 %v630
    %v2781 = vunpack.c.h.b16 %v630
    %v2782 = vunpack.c.l.b16 %v631
    %v2783 = vunpack.c.h.b16 %v631
    %v2784 = vunpack.c.l.b16 %v632
    %v2785 = vunpack.c.h.b16 %v632
    %v2786 = vunpack.c.l.b16 %v633
    %v2787 = vunpack.c.h.b16 %v633
    %v2788 = vunpack.c.l.b16 %v634
    %v2789 = vunpack.c.h.b16 %v634
    %v2790 = vunpack.c.l.b16 %v635
    %v2791 = vunpack.c.h.b16 %v635
    %v2792 = vunpack.c.l.b16 %v636
    %v2793 = vunpack.c.h.b16 %v636
    %v2794 = vunpack.c.l.b16 %v637
    %v2795 = vunpack.c.h.b16 %v637
    %v2796 = vunpack.c.l.b16 %v638
    %v2797 = vunpack.c.h.b16 %v638
    %v2798 = vunpack.c.l.b16 %v639
    %v2799 = vunpack.c.h.b16 %v639
    %v2800 = vunpack.c.l.b16 %v640
    %v2801 = vunpack.c.h.b16 %v640
    %v2802 = vunpack.c.l.b16 %v641
    %v2803 = vunpack.c.h.b16 %v641
    %v2804 = vunpack.c.l.b16 %v642
    %v2805 = vunpack.c.h.b16 %v642
    %v2806 = vunpack.c.l.b16 %v643
    %v2807 = vunpack.c.h.b16 %v643
    %v2808 = vunpack.c.l.b16 %v644
    %v2809 = vunpack.c.h.b16 %v644
    %v2810 = vunpack.c.l.b16 %v645
    %v2811 = vunpack.c.h.b16 %v645
    %v2812 = vunpack.c.l.b16 %v646
    %v2813 = vunpack.c.h.b16 %v646
    %v2814 = vunpack.c.l.b16 %v647
    %v2815 = vunpack.c.h.b16 %v647
    %v2816 = vunpack.c.l.b16 %v648
    %v2817 = vunpack.c.h.b16 %v648
    %v2818 = vunpack.c.l.b16 %v649
    %v2819 = vunpack.c.h.b16 %v649
    %v2820 = vunpack.c.l.b16 %v650
    %v2821 = vunpack.c.h.b16 %v650
    %v2822 = vunpack.c.l.b16 %v651
    %v2823 = vunpack.c.h.b16 %v651
    %v2824 = vunpack.c.l.b16 %v652
    %v2825 = vunpack.c.h.b16 %v652
    %v2826 = vunpack.c.l.b16 %v653
    %v2827 = vunpack.c.h.b16 %v653
    %v2828 = vunpack.c.l.b16 %v654
    %v2829 = vunpack.c.h.b16 %v654
    %v2830 = vunpack.c.l.b16 %v655
    %v2831 = vunpack.c.h.b16 %v655
    %v2832 = vunpack.c.l.b16 %v656
    %v2833 = vunpack.c.h.b16 %v656
    %v2834 = vunpack.c.l.b16 %v657
    %v2835 = vunpack.c.h.b16 %v657
    %v2836 = vunpack.c.l.b16 %v658
    %v2837 = vunpack.c.h.b16 %v658
    %v2838 = vunpack.c.l.b16 %v659
    %v2839 = vunpack.c.h.b16 %v659
    %v2840 = vunpack.c.l.b16 %v660
    %v2841 = vunpack.c.h.b16 %v660
    %v2842 = vunpack.c.l.b16 %v661
    %v2843 = vunpack.c.h.b16 %v661
    %v2844 = vunpack.c.l.b16 %v662
    %v2845 = vunpack.c.h.b16 %v662
    %v2846 = vunpack.c.l.b16 %v663
    %v2847 = vunpack.c.h.b16 %v663
    %v2848 = vunpack.c.l.b16 %v664
    %v2849 = vunpack.c.h.b16 %v664
    %v2850 = vunpack.c.l.b16 %v665
    %v2851 = vunpack.c.h.b16 %v665
    %v2852 = vunpack.c.l.b16 %v666
    %v2853 = vunpack.c.h.b16 %v666
    %v2854 = vunpack.c.l.b16 %v667
    %v2855 = vunpack.c.h.b16 %v667
    %v2856 = vunpack.c.l.b16 %v668
    %v2857 = vunpack.c.h.b16 %v668
    %v2858 = vunpack.c.l.b16 %v669
    %v2859 = vunpack.c.h.b16 %v669
    %v2860 = vunpack.c.l.b16 %v670
    %v2861 = vunpack.c.h.b16 %v670
    %v2862 = vunpack.c.l.b16 %v671
    %v2863 = vunpack.c.h.b16 %v671
    %v2864 = vunpack.c.l.b16 %v672
    %v2865 = vunpack.c.h.b16 %v672
    %v2866 = vunpack.c.l.b16 %v673
    %v2867 = vunpack.c.h.b16 %v673
    %v2868 = vunpack.c.l.b16 %v674
    %v2869 = vunpack.c.h.b16 %v674
    %v2870 = vunpack.c.l.b16 %v675
    %v2871 = vunpack.c.h.b16 %v675
    %v2872 = vunpack.c.l.b16 %v676
    %v2873 = vunpack.c.h.b16 %v676
    %v2874 = vunpack.c.l.b16 %v677
    %v2875 = vunpack.c.h.b16 %v677
    %v2876 = vunpack.c.l.b16 %v678
    %v2877 = vunpack.c.h.b16 %v678
    %v2878 = vunpack.c.l.b16 %v679
    %v2879 = vunpack.c.h.b16 %v679
    %v2880 = vunpack.c.l.b16 %v680
    %v2881 = vunpack.c.h.b16 %v680
    %v2882 = vunpack.c.l.b16 %v681
    %v2883 = vunpack.c.h.b16 %v681
    %v2884 = vunpack.c.l.b16 %v682
    %v2885 = vunpack.c.h.b16 %v682
    %v2886 = vunpack.c.l.b16 %v683
    %v2887 = vunpack.c.h.b16 %v683
    %v2888 = vunpack.c.l.b16 %v684
    %v2889 = vunpack.c.h.b16 %v684
    %v2890 = vunpack.c.l.b16 %v685
    %v2891 = vunpack.c.h.b16 %v685
    %v2892 = vunpack.c.l.b16 %v686
    %v2893 = vunpack.c.h.b16 %v686
    %v2894 = vunpack.c.l.b16 %v687
    %v2895 = vunpack.c.h.b16 %v687
    %v2896 = vunpack.c.l.b16 %v688
    %v2897 = vunpack.c.h.b16 %v688
    %v2898 = vunpack.c.l.b16 %v689
    %v2899 = vunpack.c.h.b16 %v689
    %v2900 = vunpack.c.l.b16 %v690
    %v2901 = vunpack.c.h.b16 %v690
    %v2902 = vunpack.c.l.b16 %v691
    %v2903 = vunpack.c.h.b16 %v691
    %v2904 = vunpack.c.l.b16 %v692
    %v2905 = vunpack.c.h.b16 %v692
    %v2906 = vunpack.c.l.b16 %v693
    %v2907 = vunpack.c.h.b16 %v693
    %v2908 = vunpack.c.l.b16 %v694
    %v2909 = vunpack.c.h.b16 %v694
    %v2910 = vunpack.c.l.b16 %v695
    %v2911 = vunpack.c.h.b16 %v695
    %v2912 = vunpack.c.l.b16 %v696
    %v2913 = vunpack.c.h.b16 %v696
    %v2914 = vunpack.c.l.b16 %v697
    %v2915 = vunpack.c.h.b16 %v697
    %v2916 = vunpack.c.l.b16 %v698
    %v2917 = vunpack.c.h.b16 %v698
    %v2918 = vunpack.c.l.b16 %v699
    %v2919 = vunpack.c.h.b16 %v699
    %v2920 = vunpack.c.l.b16 %v700
    %v2921 = vunpack.c.h.b16 %v700
    %v2922 = vunpack.c.l.b16 %v701
    %v2923 = vunpack.c.h.b16 %v701
    %v2924 = vunpack.c.l.b16 %v702
    %v2925 = vunpack.c.h.b16 %v702
    %v2926 = vunpack.c.l.b16 %v703
    %v2927 = vunpack.c.h.b16 %v703
    %v2928 = vunpack.c.l.b16 %v704
    %v2929 = vunpack.c.h.b16 %v704
    %v2930 = vunpack.c.l.b16 %v705
    %v2931 = vunpack.c.h.b16 %v705
    %v2932 = vunpack.c.l.b16 %v706
    %v2933 = vunpack.c.h.b16 %v706
    %v2934 = vunpack.c.l.b16 %v707
    %v2935 = vunpack.c.h.b16 %v707
    %v2936 = vunpack.c.l.b16 %v708
    %v2937 = vunpack.c.h.b16 %v708
    %v2938 = vunpack.c.l.b16 %v709
    %v2939 = vunpack.c.h.b16 %v709
    %v2940 = vunpack.c.l.b16 %v710
    %v2941 = vunpack.c.h.b16 %v710
    %v2942 = vunpack.c.l.b16 %v711
    %v2943 = vunpack.c.h.b16 %v711
    %v2944 = vunpack.c.l.b16 %v712
    %v2945 = vunpack.c.h.b16 %v712
    %v2946 = vunpack.c.l.b16 %v713
    %v2947 = vunpack.c.h.b16 %v713
    %v2948 = vunpack.c.l.b16 %v714
    %v2949 = vunpack.c.h.b16 %v714
    %v2950 = vunpack.c.l.b16 %v715
    %v2951 = vunpack.c.h.b16 %v715
    %v2952 = vunpack.c.l.b16 %v716
    %v2953 = vunpack.c.h.b16 %v716
    %v2954 = vunpack.c.l.b16 %v717
    %v2955 = vunpack.c.h.b16 %v717
    %v2956 = vunpack.c.l.b16 %v718
    %v2957 = vunpack.c.h.b16 %v718
    %v2958 = vunpack.c.l.b16 %v719
    %v2959 = vunpack.c.h.b16 %v719
    %v2960 = vunpack.c.l.b16 %v720
    %v2961 = vunpack.c.h.b16 %v720
    %v2962 = vunpack.c.l.b16 %v721
    %v2963 = vunpack.c.h.b16 %v721
    %v2964 = vunpack.c.l.b16 %v722
    %v2965 = vunpack.c.h.b16 %v722
    %v2966 = vunpack.c.l.b16 %v723
    %v2967 = vunpack.c.h.b16 %v723
    %v2968 = vunpack.c.l.b16 %v724
    %v2969 = vunpack.c.h.b16 %v724
    %v2970 = vunpack.c.l.b16 %v725
    %v2971 = vunpack.c.h.b16 %v725
    %v2972 = vunpack.c.l.b16 %v726
    %v2973 = vunpack.c.h.b16 %v726
    %v2974 = vunpack.c.l.b16 %v727
    %v2975 = vunpack.c.h.b16 %v727
    %v2976 = vunpack.c.l.b16 %v728
    %v2977 = vunpack.c.h.b16 %v728
    %v2978 = vunpack.c.l.b16 %v729
    %v2979 = vunpack.c.h.b16 %v729
    %v2980 = vunpack.c.l.b16 %v730
    %v2981 = vunpack.c.h.b16 %v730
    %v2982 = vunpack.c.l.b16 %v731
    %v2983 = vunpack.c.h.b16 %v731
    %v2984 = vunpack.c.l.b16 %v732
    %v2985 = vunpack.c.h.b16 %v732
    %v2986 = vunpack.c.l.b16 %v733
    %v2987 = vunpack.c.h.b16 %v733
    %v2988 = vunpack.c.l.b16 %v734
    %v2989 = vunpack.c.h.b16 %v734
    %v2990 = vunpack.c.l.b16 %v735
    %v2991 = vunpack.c.h.b16 %v735
    %v2992 = vunpack.c.l.b16 %v736
    %v2993 = vunpack.c.h.b16 %v736
    %v2994 = vunpack.c.l.b16 %v737
    %v2995 = vunpack.c.h.b16 %v737
    %v2996 = vunpack.c.l.b16 %v738
    %v2997 = vunpack.c.h.b16 %v738
    %v2998 = vunpack.c.l.b16 %v739
    %v2999 = vunpack.c.h.b16 %v739
    %v3000 = vunpack.c.l.b16 %v740
    %v3001 = vunpack.c.h.b16 %v740
    %v3002 = vunpack.c.l.b16 %v741
    %v3003 = vunpack.c.h.b16 %v741
    %v3004 = vunpack.c.l.b16 %v742
    %v3005 = vunpack.c.h.b16 %v742
    %v3006 = vunpack.c.l.b16 %v743
    %v3007 = vunpack.c.h.b16 %v743
    %v3008 = vunpack.c.l.b16 %v744
    %v3009 = vunpack.c.h.b16 %v744
    %v3010 = vunpack.c.l.b16 %v745
    %v3011 = vunpack.c.h.b16 %v745
    %v3012 = vunpack.c.l.b16 %v746
    %v3013 = vunpack.c.h.b16 %v746
    %v3014 = vunpack.c.l.b16 %v747
    %v3015 = vunpack.c.h.b16 %v747
    %v3016 = vunpack.c.l.b16 %v748
    %v3017 = vunpack.c.h.b16 %v748
    %v3018 = vunpack.c.l.b16 %v749
    %v3019 = vunpack.c.h.b16 %v749
    %v3020 = vunpack.c.l.b16 %v750
    %v3021 = vunpack.c.h.b16 %v750
    %v3022 = vunpack.c.l.b16 %v751
    %v3023 = vunpack.c.h.b16 %v751
    %v3024 = vunpack.c.l.b16 %v752
    %v3025 = vunpack.c.h.b16 %v752
    %v3026 = vunpack.c.l.b16 %v753
    %v3027 = vunpack.c.h.b16 %v753
    %v3028 = vunpack.c.l.b16 %v754
    %v3029 = vunpack.c.h.b16 %v754
    %v3030 = vunpack.c.l.b16 %v755
    %v3031 = vunpack.c.h.b16 %v755
    %v3032 = vunpack.c.l.b16 %v756
    %v3033 = vunpack.c.h.b16 %v756
    %v3034 = vunpack.c.l.b16 %v757
    %v3035 = vunpack.c.h.b16 %v757
    %v3036 = vunpack.c.l.b16 %v758
    %v3037 = vunpack.c.h.b16 %v758
    %v3038 = vunpack.c.l.b16 %v759
    %v3039 = vunpack.c.h.b16 %v759
    %v3040 = vunpack.c.l.b16 %v760
    %v3041 = vunpack.c.h.b16 %v760
    %v3042 = vunpack.c.l.b16 %v761
    %v3043 = vunpack.c.h.b16 %v761
    %v3044 = vunpack.c.l.b16 %v762
    %v3045 = vunpack.c.h.b16 %v762
    %v3046 = vunpack.c.l.b16 %v763
    %v3047 = vunpack.c.h.b16 %v763
    %v3048 = vunpack.c.l.b16 %v764
    %v3049 = vunpack.c.h.b16 %v764
    %v3050 = vunpack.c.l.b16 %v765
    %v3051 = vunpack.c.h.b16 %v765
    %v3052 = vunpack.c.l.b16 %v766
    %v3053 = vunpack.c.h.b16 %v766
    %v3054 = vunpack.c.l.b16 %v767
    %v3055 = vunpack.c.h.b16 %v767
    %v3056 = vunpack.c.l.b16 %v768
    %v3057 = vunpack.c.h.b16 %v768
    %v3058 = vunpack.c.l.b16 %v769
    %v3059 = vunpack.c.h.b16 %v769
    %v3060 = vunpack.c.l.b16 %v770
    %v3061 = vunpack.c.h.b16 %v770
    %v3062 = vunpack.c.l.b16 %v771
    %v3063 = vunpack.c.h.b16 %v771
    %v3064 = vunpack.c.l.b16 %v772
    %v3065 = vunpack.c.h.b16 %v772
    %v3066 = vunpack.c.l.b16 %v773
    %v3067 = vunpack.c.h.b16 %v773
    %v3068 = vunpack.c.l.b16 %v774
    %v3069 = vunpack.c.h.b16 %v774
    %v3070 = vunpack.c.l.b16 %v775
    %v3071 = vunpack.c.h.b16 %v775
    %v3072 = vunpack.c.l.b16 %v776
    %v3073 = vunpack.c.h.b16 %v776
    %v3074 = vunpack.c.l.b16 %v777
    %v3075 = vunpack.c.h.b16 %v777
    %v3076 = vunpack.c.l.b16 %v778
    %v3077 = vunpack.c.h.b16 %v778
    %v3078 = vunpack.c.l.b16 %v779
    %v3079 = vunpack.c.h.b16 %v779
    %v3080 = vunpack.c.l.b16 %v780
    %v3081 = vunpack.c.h.b16 %v780
    %v3082 = vunpack.c.l.b16 %v781
    %v3083 = vunpack.c.h.b16 %v781
    %v3084 = vunpack.c.l.b16 %v782
    %v3085 = vunpack.c.h.b16 %v782
    %v3086 = vunpack.c.l.b16 %v783
    %v3087 = vunpack.c.h.b16 %v783
    %v3088 = vunpack.c.l.b16 %v784
    %v3089 = vunpack.c.h.b16 %v784
    %v3090 = vunpack.c.l.b16 %v785
    %v3091 = vunpack.c.h.b16 %v785
    %v3092 = vunpack.c.l.b16 %v786
    %v3093 = vunpack.c.h.b16 %v786
    %v3094 = vunpack.c.l.b16 %v787
    %v3095 = vunpack.c.h.b16 %v787
    %v3096 = vunpack.c.l.b16 %v788
    %v3097 = vunpack.c.h.b16 %v788
    %v3098 = vunpack.c.l.b16 %v789
    %v3099 = vunpack.c.h.b16 %v789
    %v3100 = vunpack.c.l.b16 %v790
    %v3101 = vunpack.c.h.b16 %v790
    %v3102 = vunpack.c.l.b16 %v791
    %v3103 = vunpack.c.h.b16 %v791
    %v3104 = vunpack.c.l.b16 %v792
    %v3105 = vunpack.c.h.b16 %v792
    %v3106 = vunpack.c.l.b16 %v793
    %v3107 = vunpack.c.h.b16 %v793
    %v3108 = vunpack.c.l.b16 %v794
    %v3109 = vunpack.c.h.b16 %v794
    %v3110 = vunpack.c.l.b16 %v795
    %v3111 = vunpack.c.h.b16 %v795
    %v3112 = vunpack.c.l.b16 %v796
    %v3113 = vunpack.c.h.b16 %v796
    %v3114 = vunpack.c.l.b16 %v797
    %v3115 = vunpack.c.h.b16 %v797
    %v3116 = vunpack.c.l.b16 %v798
    %v3117 = vunpack.c.h.b16 %v798
    %v3118 = vunpack.c.l.b16 %v799
    %v3119 = vunpack.c.h.b16 %v799
    %v3120 = vunpack.c.l.b16 %v800
    %v3121 = vunpack.c.h.b16 %v800
    %v3122 = vunpack.c.l.b16 %v801
    %v3123 = vunpack.c.h.b16 %v801
    %v3124 = vunpack.c.l.b16 %v802
    %v3125 = vunpack.c.h.b16 %v802
    %v3126 = vunpack.c.l.b16 %v803
    %v3127 = vunpack.c.h.b16 %v803
    %v3128 = vunpack.c.l.b16 %v804
    %v3129 = vunpack.c.h.b16 %v804
    %v3130 = vunpack.c.l.b16 %v805
    %v3131 = vunpack.c.h.b16 %v805
    %v3132 = vunpack.c.l.b16 %v806
    %v3133 = vunpack.c.h.b16 %v806
    %v3134 = vunpack.c.l.b16 %v807
    %v3135 = vunpack.c.h.b16 %v807
    %v3136 = vunpack.c.l.b16 %v808
    %v3137 = vunpack.c.h.b16 %v808
    %v3138 = vunpack.c.l.b16 %v809
    %v3139 = vunpack.c.h.b16 %v809
    %v3140 = vunpack.c.l.b16 %v810
    %v3141 = vunpack.c.h.b16 %v810
    %v3142 = vunpack.c.l.b16 %v811
    %v3143 = vunpack.c.h.b16 %v811
    %v3144 = vunpack.c.l.b16 %v812
    %v3145 = vunpack.c.h.b16 %v812
    %v3146 = vunpack.c.l.b16 %v813
    %v3147 = vunpack.c.h.b16 %v813
    %v3148 = vunpack.c.l.b16 %v814
    %v3149 = vunpack.c.h.b16 %v814
    %v3150 = vunpack.c.l.b16 %v815
    %v3151 = vunpack.c.h.b16 %v815
    %v3152 = vunpack.c.l.b16 %v816
    %v3153 = vunpack.c.h.b16 %v816
    %v3154 = vunpack.c.l.b16 %v817
    %v3155 = vunpack.c.h.b16 %v817
    %v3156 = vunpack.c.l.b16 %v818
    %v3157 = vunpack.c.h.b16 %v818
    %v3158 = vunpack.c.l.b16 %v819
    %v3159 = vunpack.c.h.b16 %v819
    %v3160 = vunpack.c.l.b16 %v820
    %v3161 = vunpack.c.h.b16 %v820
    %v3162 = vunpack.c.l.b16 %v821
    %v3163 = vunpack.c.h.b16 %v821
    %v3164 = vunpack.c.l.b16 %v822
    %v3165 = vunpack.c.h.b16 %v822
    %v3166 = vunpack.c.l.b16 %v823
    %v3167 = vunpack.c.h.b16 %v823
    %v3168 = vunpack.c.l.b16 %v824
    %v3169 = vunpack.c.h.b16 %v824
    %v3170 = vunpack.c.l.b16 %v825
    %v3171 = vunpack.c.h.b16 %v825
    %v3172 = vunpack.c.l.b16 %v826
    %v3173 = vunpack.c.h.b16 %v826
    %v3174 = vunpack.c.l.b16 %v827
    %v3175 = vunpack.c.h.b16 %v827
    %v3176 = vunpack.c.l.b16 %v828
    %v3177 = vunpack.c.h.b16 %v828
    %v3178 = vunpack.c.l.b16 %v829
    %v3179 = vunpack.c.h.b16 %v829
    %v3180 = vunpack.c.l.b16 %v830
    %v3181 = vunpack.c.h.b16 %v830
    %v3182 = vunpack.c.l.b16 %v831
    %v3183 = vunpack.c.h.b16 %v831
    %v3184 = vunpack.c.l.b16 %v832
    %v3185 = vunpack.c.h.b16 %v832
    %v3186 = vunpack.c.l.b16 %v833
    %v3187 = vunpack.c.h.b16 %v833
    %v3188 = vunpack.c.l.b16 %v834
    %v3189 = vunpack.c.h.b16 %v834
    %v3190 = vunpack.c.l.b16 %v835
    %v3191 = vunpack.c.h.b16 %v835
    %v3192 = vunpack.c.l.b16 %v836
    %v3193 = vunpack.c.h.b16 %v836
    %v3194 = vunpack.c.l.b16 %v837
    %v3195 = vunpack.c.h.b16 %v837
    %v3196 = vunpack.c.l.b16 %v838
    %v3197 = vunpack.c.h.b16 %v838
    %v3198 = vunpack.c.l.b16 %v839
    %v3199 = vunpack.c.h.b16 %v839
    %v3200 = vunpack.c.l.b16 %v840
    %v3201 = vunpack.c.h.b16 %v840
    %v3202 = vunpack.c.l.b16 %v841
    %v3203 = vunpack.c.h.b16 %v841
    %v3204 = vunpack.c.l.b16 %v842
    %v3205 = vunpack.c.h.b16 %v842
    %v3206 = vunpack.c.l.b16 %v843
    %v3207 = vunpack.c.h.b16 %v843
    %v3208 = vunpack.c.l.b16 %v844
    %v3209 = vunpack.c.h.b16 %v844
    %v3210 = vunpack.c.l.b16 %v845
    %v3211 = vunpack.c.h.b16 %v845
    %v3212 = vunpack.c.l.b16 %v846
    %v3213 = vunpack.c.h.b16 %v846
    %v3214 = vunpack.c.l.b16 %v847
    %v3215 = vunpack.c.h.b16 %v847
    %v3216 = vunpack.c.l.b16 %v848
    %v3217 = vunpack.c.h.b16 %v848
    %v3218 = vunpack.c.l.b16 %v849
    %v3219 = vunpack.c.h.b16 %v849
    %v3220 = vunpack.c.l.b16 %v850
    %v3221 = vunpack.c.h.b16 %v850
    %v3222 = vunpack.c.l.b16 %v851
    %v3223 = vunpack.c.h.b16 %v851
    %v3224 = vunpack.c.l.b16 %v852
    %v3225 = vunpack.c.h.b16 %v852
    %v3226 = vunpack.c.l.b16 %v853
    %v3227 = vunpack.c.h.b16 %v853
    %v3228 = vunpack.c.l.b16 %v854
    %v3229 = vunpack.c.h.b16 %v854
    %v3230 = vunpack.c.l.b16 %v855
    %v3231 = vunpack.c.h.b16 %v855
    %v3232 = vunpack.c.l.b16 %v856
    %v3233 = vunpack.c.h.b16 %v856
    %v3234 = vunpack.c.l.b16 %v857
    %v3235 = vunpack.c.h.b16 %v857
    %v3236 = vunpack.c.l.b16 %v858
    %v3237 = vunpack.c.h.b16 %v858
    %v3238 = vunpack.c.l.b16 %v859
    %v3239 = vunpack.c.h.b16 %v859
    %v3240 = vunpack.c.l.b16 %v860
    %v3241 = vunpack.c.h.b16 %v860
    %v3242 = vunpack.c.l.b16 %v861
    %v3243 = vunpack.c.h.b16 %v861
    %v3244 = vunpack.c.l.b16 %v862
    %v3245 = vunpack.c.h.b16 %v862
    %v3246 = vunpack.c.l.b16 %v863
    %v3247 = vunpack.c.h.b16 %v863
    %v3248 = vunpack.c.l.b16 %v864
    %v3249 = vunpack.c.h.b16 %v864
    %v3250 = vunpack.c.l.b16 %v865
    %v3251 = vunpack.c.h.b16 %v865
    %v3252 = vunpack.c.l.b16 %v866
    %v3253 = vunpack.c.h.b16 %v866
    %v3254 = vunpack.c.l.b16 %v867
    %v3255 = vunpack.c.h.b16 %v867
    %v3256 = vunpack.c.l.b16 %v868
    %v3257 = vunpack.c.h.b16 %v868
    %v3258 = vunpack.c.l.b16 %v869
    %v3259 = vunpack.c.h.b16 %v869
    %v3260 = vunpack.c.l.b16 %v870
    %v3261 = vunpack.c.h.b16 %v870
    %v3262 = vunpack.c.l.b16 %v871
    %v3263 = vunpack.c.h.b16 %v871
    %v3264 = vunpack.c.l.b16 %v872
    %v3265 = vunpack.c.h.b16 %v872
    %v3266 = vunpack.c.l.b16 %v873
    %v3267 = vunpack.c.h.b16 %v873
    %v3268 = vunpack.c.l.b16 %v874
    %v3269 = vunpack.c.h.b16 %v874
    %v3270 = vunpack.c.l.b16 %v875
    %v3271 = vunpack.c.h.b16 %v875
    %v3272 = vunpack.c.l.b16 %v876
    %v3273 = vunpack.c.h.b16 %v876
    %v3274 = vunpack.c.l.b16 %v877
    %v3275 = vunpack.c.h.b16 %v877
    %v3276 = vunpack.c.l.b16 %v878
    %v3277 = vunpack.c.h.b16 %v878
    %v3278 = vunpack.c.l.b16 %v879
    %v3279 = vunpack.c.h.b16 %v879
    %v3280 = vunpack.c.l.b16 %v880
    %v3281 = vunpack.c.h.b16 %v880
    %v3282 = vunpack.c.l.b16 %v881
    %v3283 = vunpack.c.h.b16 %v881
    %v3284 = vunpack.c.l.b16 %v882
    %v3285 = vunpack.c.h.b16 %v882
    %v3286 = vunpack.c.l.b16 %v883
    %v3287 = vunpack.c.h.b16 %v883
    %v3288 = vunpack.c.l.b16 %v884
    %v3289 = vunpack.c.h.b16 %v884
    %v3290 = vunpack.c.l.b16 %v885
    %v3291 = vunpack.c.h.b16 %v885
    %v3292 = vunpack.c.l.b16 %v886
    %v3293 = vunpack.c.h.b16 %v886
    %v3294 = vunpack.c.l.b16 %v887
    %v3295 = vunpack.c.h.b16 %v887
    %v3296 = vunpack.c.l.b16 %v888
    %v3297 = vunpack.c.h.b16 %v888
    %v3298 = vunpack.c.l.b16 %v889
    %v3299 = vunpack.c.h.b16 %v889
    %v3300 = vunpack.c.l.b16 %v890
    %v3301 = vunpack.c.h.b16 %v890
    %v3302 = vunpack.c.l.b16 %v891
    %v3303 = vunpack.c.h.b16 %v891
    %v3304 = vunpack.c.l.b16 %v892
    %v3305 = vunpack.c.h.b16 %v892
    %v3306 = vunpack.c.l.b16 %v893
    %v3307 = vunpack.c.h.b16 %v893
    %v3308 = vunpack.c.l.b16 %v894
    %v3309 = vunpack.c.h.b16 %v894
    %v3310 = vunpack.c.l.b16 %v895
    %v3311 = vunpack.c.h.b16 %v895
    %v3312 = vunpack.c.l.b16 %v896
    %v3313 = vunpack.c.h.b16 %v896
    %v3314 = vunpack.c.l.b16 %v897
    %v3315 = vunpack.c.h.b16 %v897
    %v3316 = vunpack.c.l.b16 %v898
    %v3317 = vunpack.c.h.b16 %v898
    %v3318 = vunpack.c.l.b16 %v899
    %v3319 = vunpack.c.h.b16 %v899
    %v3320 = vunpack.c.l.b16 %v900
    %v3321 = vunpack.c.h.b16 %v900
    %v3322 = vunpack.c.l.b16 %v901
    %v3323 = vunpack.c.h.b16 %v901
    %v3324 = vunpack.c.l.b16 %v902
    %v3325 = vunpack.c.h.b16 %v902
    %v3326 = vunpack.c.l.b16 %v903
    %v3327 = vunpack.c.h.b16 %v903
    %v3328 = vunpack.c.l.b16 %v904
    %v3329 = vunpack.c.h.b16 %v904
    %v3330 = vunpack.c.l.b16 %v905
    %v3331 = vunpack.c.h.b16 %v905
    %v3332 = vunpack.c.l.b16 %v906
    %v3333 = vunpack.c.h.b16 %v906
    %v3334 = vunpack.c.l.b16 %v907
    %v3335 = vunpack.c.h.b16 %v907
    %v3336 = vunpack.c.l.b16 %v908
    %v3337 = vunpack.c.h.b16 %v908
    %v3338 = vunpack.c.l.b16 %v909
    %v3339 = vunpack.c.h.b16 %v909
    %v3340 = vunpack.c.l.b16 %v910
    %v3341 = vunpack.c.h.b16 %v910
    %v3342 = vunpack.c.l.b16 %v911
    %v3343 = vunpack.c.h.b16 %v911
    %v3344 = vunpack.c.l.b16 %v912
    %v3345 = vunpack.c.h.b16 %v912
    %v3346 = vunpack.c.l.b16 %v913
    %v3347 = vunpack.c.h.b16 %v913
    %v3348 = vunpack.c.l.b16 %v914
    %v3349 = vunpack.c.h.b16 %v914
    %v3350 = vunpack.c.l.b16 %v915
    %v3351 = vunpack.c.h.b16 %v915
    %v3352 = vunpack.c.l.b16 %v916
    %v3353 = vunpack.c.h.b16 %v916
    %v3354 = vunpack.c.l.b16 %v917
    %v3355 = vunpack.c.h.b16 %v917
    %v3356 = vunpack.c.l.b16 %v918
    %v3357 = vunpack.c.h.b16 %v918
    %v3358 = vunpack.c.l.b16 %v919
    %v3359 = vunpack.c.h.b16 %v919
    %v3360 = vunpack.c.l.b16 %v920
    %v3361 = vunpack.c.h.b16 %v920
    %v3362 = vunpack.c.l.b16 %v921
    %v3363 = vunpack.c.h.b16 %v921
    %v3364 = vunpack.c.l.b16 %v922
    %v3365 = vunpack.c.h.b16 %v922
    %v3366 = vunpack.c.l.b16 %v923
    %v3367 = vunpack.c.h.b16 %v923
    %v3368 = vunpack.c.l.b16 %v924
    %v3369 = vunpack.c.h.b16 %v924
    %v3370 = vunpack.c.l.b16 %v925
    %v3371 = vunpack.c.h.b16 %v925
    %v3372 = vpack.c.b16 %v1840, %v1836
    %v3373 = vpack.c.b16 %v1841, %v1837
    %v3374 = vpack.c.b16 %v1842, %v1838
    %v3375 = vpack.c.b16 %v1843, %v1839
    %v3376 = vpack.c.b16 %v1848, %v1844
    %v3377 = vpack.c.b16 %v1849, %v1845
    %v3378 = vpack.c.b16 %v1850, %v1846
    %v3379 = vpack.c.b16 %v1851, %v1847
    %v3380 = vpack.c.b16 %v1856, %v1852
    %v3381 = vpack.c.b16 %v1857, %v1853
    %v3382 = vpack.c.b16 %v1858, %v1854
    %v3383 = vpack.c.b16 %v1859, %v1855
    %v3384 = vpack.c.b16 %v1864, %v1860
    %v3385 = vpack.c.b16 %v1865, %v1861
    %v3386 = vpack.c.b16 %v1866, %v1862
    %v3387 = vpack.c.b16 %v1867, %v1863
    %v3388 = vpack.c.b16 %v1872, %v1868
    %v3389 = vpack.c.b16 %v1873, %v1869
    %v3390 = vpack.c.b16 %v1874, %v1870
    %v3391 = vpack.c.b16 %v1875, %v1871
    %v3392 = vpack.c.b16 %v1880, %v1876
    %v3393 = vpack.c.b16 %v1881, %v1877
    %v3394 = vpack.c.b16 %v1882, %v1878
    %v3395 = vpack.c.b16 %v1883, %v1879
    %v3396 = vpack.c.b16 %v1888, %v1884
    %v3397 = vpack.c.b16 %v1889, %v1885
    %v3398 = vpack.c.b16 %v1890, %v1886
    %v3399 = vpack.c.b16 %v1891, %v1887
    %v3400 = vpack.c.b16 %v1896, %v1892
    %v3401 = vpack.c.b16 %v1897, %v1893
    %v3402 = vpack.c.b16 %v1898, %v1894
    %v3403 = vpack.c.b16 %v1899, %v1895
    %v3404 = vpack.c.b16 %v1904, %v1900
    %v3405 = vpack.c.b16 %v1905, %v1901
    %v3406 = vpack.c.b16 %v1906, %v1902
    %v3407 = vpack.c.b16 %v1907, %v1903
    %v3408 = vpack.c.b16 %v1912, %v1908
    %v3409 = vpack.c.b16 %v1913, %v1909
    %v3410 = vpack.c.b16 %v1914, %v1910
    %v3411 = vpack.c.b16 %v1915, %v1911
    %v3412 = vpack.c.b16 %v1920, %v1916
    %v3413 = vpack.c.b16 %v1921, %v1917
    %v3414 = vpack.c.b16 %v1922, %v1918
    %v3415 = vpack.c.b16 %v1923, %v1919
    %v3416 = vpack.c.b16 %v1928, %v1924
    %v3417 = vpack.c.b16 %v1929, %v1925
    %v3418 = vpack.c.b16 %v1930, %v1926
    %v3419 = vpack.c.b16 %v1931, %v1927
    %v3420 = vpack.c.b16 %v1936, %v1932
    %v3421 = vpack.c.b16 %v1937, %v1933
    %v3422 = vpack.c.b16 %v1938, %v1934
    %v3423 = vpack.c.b16 %v1939, %v1935
    %v3424 = vpack.c.b16 %v1944, %v1940
    %v3425 = vpack.c.b16 %v1945, %v1941
    %v3426 = vpack.c.b16 %v1946, %v1942
    %v3427 = vpack.c.b16 %v1947, %v1943
    %v3428 = vpack.c.b16 %v1952, %v1948
    %v3429 = vpack.c.b16 %v1953, %v1949
    %v3430 = vpack.c.b16 %v1954, %v1950
    %v3431 = vpack.c.b16 %v1955, %v1951
    %v3432 = vpack.c.b16 %v1960, %v1956
    %v3433 = vpack.c.b16 %v1961, %v1957
    %v3434 = vpack.c.b16 %v1962, %v1958
    %v3435 = vpack.c.b16 %v1963, %v1959
    %v3436 = vpack.c.b16 %v1968, %v1964
    %v3437 = vpack.c.b16 %v1969, %v1965
    %v3438 = vpack.c.b16 %v1970, %v1966
    %v3439 = vpack.c.b16 %v1971, %v1967
    %v3440 = vpack.c.b16 %v1976, %v1972
    %v3441 = vpack.c.b16 %v1977, %v1973
    %v3442 = vpack.c.b16 %v1978, %v1974
    %v3443 = vpack.c.b16 %v1979, %v1975
    %v3444 = vpack.c.b16 %v1984, %v1980
    %v3445 = vpack.c.b16 %v1985, %v1981
    %v3446 = vpack.c.b16 %v1986, %v1982
    %v3447 = vpack.c.b16 %v1987, %v1983
    %v3448 = vpack.c.b16 %v1992, %v1988
    %v3449 = vpack.c.b16 %v1993, %v1989
    %v3450 = vpack.c.b16 %v1994, %v1990
    %v3451 = vpack.c.b16 %v1995, %v1991
    %v3452 = vpack.c.b16 %v2000, %v1996
    %v3453 = vpack.c.b16 %v2001, %v1997
    %v3454 = vpack.c.b16 %v2002, %v1998
    %v3455 = vpack.c.b16 %v2003, %v1999
    %v3456 = vpack.c.b16 %v2008, %v2004
    %v3457 = vpack.c.b16 %v2009, %v2005
    %v3458 = vpack.c.b16 %v2010, %v2006
    %v3459 = vpack.c.b16 %v2011, %v2007
    %v3460 = vpack.c.b16 %v2016, %v2012
    %v3461 = vpack.c.b16 %v2017, %v2013
    %v3462 = vpack.c.b16 %v2018, %v2014
    %v3463 = vpack.c.b16 %v2019, %v2015
    %v3464 = vpack.c.b16 %v2024, %v2020
    %v3465 = vpack.c.b16 %v2025, %v2021
    %v3466 = vpack.c.b16 %v2026, %v2022
    %v3467 = vpack.c.b16 %v2027, %v2023
    %v3468 = vpack.c.b16 %v2032, %v2028
    %v3469 = vpack.c.b16 %v2033, %v2029
    %v3470 = vpack.c.b16 %v2034, %v2030
    %v3471 = vpack.c.b16 %v2035, %v2031
    %v3472 = vpack.c.b16 %v2040, %v2036
    %v3473 = vpack.c.b16 %v2041, %v2037
    %v3474 = vpack.c.b16 %v2042, %v2038
    %v3475 = vpack.c.b16 %v2043, %v2039
    %v3476 = vpack.c.b16 %v2048, %v2044
    %v3477 = vpack.c.b16 %v2049, %v2045
    %v3478 = vpack.c.b16 %v2050, %v2046
    %v3479 = vpack.c.b16 %v2051, %v2047
    %v3480 = vpack.c.b16 %v2056, %v2052
    %v3481 = vpack.c.b16 %v2057, %v2053
    %v3482 = vpack.c.b16 %v2058, %v2054
    %v3483 = vpack.c.b16 %v2059, %v2055
    %v3484 = vpack.c.b16 %v2064, %v2060
    %v3485 = vpack.c.b16 %v2065, %v2061
    %v3486 = vpack.c.b16 %v2066, %v2062
    %v3487 = vpack.c.b16 %v2067, %v2063
    %v3488 = vpack.c.b16 %v2072, %v2068
    %v3489 = vpack.c.b16 %v2073, %v2069
    %v3490 = vpack.c.b16 %v2074, %v2070
    %v3491 = vpack.c.b16 %v2075, %v2071
    %v3492 = vpack.c.b16 %v2080, %v2076
    %v3493 = vpack.c.b16 %v2081, %v2077
    %v3494 = vpack.c.b16 %v2082, %v2078
    %v3495 = vpack.c.b16 %v2083, %v2079
    %v3496 = vpack.c.b16 %v2088, %v2084
    %v3497 = vpack.c.b16 %v2089, %v2085
    %v3498 = vpack.c.b16 %v2090, %v2086
    %v3499 = vpack.c.b16 %v2091, %v2087
    %v3500 = vpack.c.b16 %v2096, %v2092
    %v3501 = vpack.c.b16 %v2097, %v2093
    %v3502 = vpack.c.b16 %v2098, %v2094
    %v3503 = vpack.c.b16 %v2099, %v2095
    %v3504 = vpack.c.b16 %v2104, %v2100
    %v3505 = vpack.c.b16 %v2105, %v2101
    %v3506 = vpack.c.b16 %v2106, %v2102
    %v3507 = vpack.c.b16 %v2107, %v2103
    %v3508 = vpack.c.b16 %v2112, %v2108
    %v3509 = vpack.c.b16 %v2113, %v2109
    %v3510 = vpack.c.b16 %v2114, %v2110
    %v3511 = vpack.c.b16 %v2115, %v2111
    %v3512 = vpack.c.b16 %v2120, %v2116
    %v3513 = vpack.c.b16 %v2121, %v2117
    %v3514 = vpack.c.b16 %v2122, %v2118
    %v3515 = vpack.c.b16 %v2123, %v2119
    %v3516 = vpack.c.b16 %v2128, %v2124
    %v3517 = vpack.c.b16 %v2129, %v2125
    %v3518 = vpack.c.b16 %v2130, %v2126
    %v3519 = vpack.c.b16 %v2131, %v2127
    %v3520 = vpack.c.b16 %v2136, %v2132
    %v3521 = vpack.c.b16 %v2137, %v2133
    %v3522 = vpack.c.b16 %v2138, %v2134
    %v3523 = vpack.c.b16 %v2139, %v2135
    %v3524 = vpack.c.b16 %v2144, %v2140
    %v3525 = vpack.c.b16 %v2145, %v2141
    %v3526 = vpack.c.b16 %v2146, %v2142
    %v3527 = vpack.c.b16 %v2147, %v2143
    %v3528 = vpack.c.b16 %v2152, %v2148
    %v3529 = vpack.c.b16 %v2153, %v2149
    %v3530 = vpack.c.b16 %v2154, %v2150
    %v3531 = vpack.c.b16 %v2155, %v2151
    %v3532 = vpack.c.b16 %v2160, %v2156
    %v3533 = vpack.c.b16 %v2161, %v2157
    %v3534 = vpack.c.b16 %v2162, %v2158
    %v3535 = vpack.c.b16 %v2163, %v2159
    %v3536 = vpack.c.b16 %v2168, %v2164
    %v3537 = vpack.c.b16 %v2169, %v2165
    %v3538 = vpack.c.b16 %v2170, %v2166
    %v3539 = vpack.c.b16 %v2171, %v2167
    %v3540 = vpack.c.b16 %v2176, %v2172
    %v3541 = vpack.c.b16 %v2177, %v2173
    %v3542 = vpack.c.b16 %v2178, %v2174
    %v3543 = vpack.c.b16 %v2179, %v2175
    %v3544 = vpack.c.b16 %v2184, %v2180
    %v3545 = vpack.c.b16 %v2185, %v2181
    %v3546 = vpack.c.b16 %v2186, %v2182
    %v3547 = vpack.c.b16 %v2187, %v2183
    %v3548 = vpack.c.b16 %v2192, %v2188
    %v3549 = vpack.c.b16 %v2193, %v2189
    %v3550 = vpack.c.b16 %v2194, %v2190
    %v3551 = vpack.c.b16 %v2195, %v2191
    %v3552 = vpack.c.b16 %v2200, %v2196
    %v3553 = vpack.c.b16 %v2201, %v2197
    %v3554 = vpack.c.b16 %v2202, %v2198
    %v3555 = vpack.c.b16 %v2203, %v2199
    %v3556 = vpack.c.b16 %v2208, %v2204
    %v3557 = vpack.c.b16 %v2209, %v2205
    %v3558 = vpack.c.b16 %v2210, %v2206
    %v3559 = vpack.c.b16 %v2211, %v2207
    %v3560 = vpack.c.b16 %v2216, %v2212
    %v3561 = vpack.c.b16 %v2217, %v2213
    %v3562 = vpack.c.b16 %v2218, %v2214
    %v3563 = vpack.c.b16 %v2219, %v2215
    %v3564 = vpack.c.b16 %v2224, %v2220
    %v3565 = vpack.c.b16 %v2225, %v2221
    %v3566 = vpack.c.b16 %v2226, %v2222
    %v3567 = vpack.c.b16 %v2227, %v2223
    %v3568 = vpack.c.b16 %v2232, %v2228
    %v3569 = vpack.c.b16 %v2233, %v2229
    %v3570 = vpack.c.b16 %v2234, %v2230
    %v3571 = vpack.c.b16 %v2235, %v2231
    %v3572 = vpack.c.b16 %v2240, %v2236
    %v3573 = vpack.c.b16 %v2241, %v2237
    %v3574 = vpack.c.b16 %v2242, %v2238
    %v3575 = vpack.c.b16 %v2243, %v2239
    %v3576 = vpack.c.b16 %v2248, %v2244
    %v3577 = vpack.c.b16 %v2249, %v2245
    %v3578 = vpack.c.b16 %v2250, %v2246
    %v3579 = vpack.c.b16 %v2251, %v2247
    %v3580 = vpack.c.b16 %v2256, %v2252
    %v3581 = vpack.c.b16 %v2257, %v2253
    %v3582 = vpack.c.b16 %v2258, %v2254
    %v3583 = vpack.c.b16 %v2259, %v2255
    %v3584 = vpack.c.b16 %v2264, %v2260
    %v3585 = vpack.c.b16 %v2265, %v2261
    %v3586 = vpack.c.b16 %v2266, %v2262
    %v3587 = vpack.c.b16 %v2267, %v2263
    %v3588 = vpack.c.b16 %v2272, %v2268
    %v3589 = vpack.c.b16 %v2273, %v2269
    %v3590 = vpack.c.b16 %v2274, %v2270
    %v3591 = vpack.c.b16 %v2275, %v2271
    %v3592 = vpack.c.b16 %v2280, %v2276
    %v3593 = vpack.c.b16 %v2281, %v2277
    %v3594 = vpack.c.b16 %v2282, %v2278
    %v3595 = vpack.c.b16 %v2283, %v2279
    %v3596 = vpack.c.b16 %v2288, %v2284
    %v3597 = vpack.c.b16 %v2289, %v2285
    %v3598 = vpack.c.b16 %v2290, %v2286
    %v3599 = vpack.c.b16 %v2291, %v2287
    %v3600 = vpack.c.b16 %v2296, %v2292
    %v3601 = vpack.c.b16 %v2297, %v2293
    %v3602 = vpack.c.b16 %v2298, %v2294
    %v3603 = vpack.c.b16 %v2299, %v2295
    %v3604 = vpack.c.b16 %v2304, %v2300
    %v3605 = vpack.c.b16 %v2305, %v2301
    %v3606 = vpack.c.b16 %v2306, %v2302
    %v3607 = vpack.c.b16 %v2307, %v2303
    %v3608 = vpack.c.b16 %v2312, %v2308
    %v3609 = vpack.c.b16 %v2313, %v2309
    %v3610 = vpack.c.b16 %v2314, %v2310
    %v3611 = vpack.c.b16 %v2315, %v2311
    %v3612 = vpack.c.b16 %v2320, %v2316
    %v3613 = vpack.c.b16 %v2321, %v2317
    %v3614 = vpack.c.b16 %v2322, %v2318
    %v3615 = vpack.c.b16 %v2323, %v2319
    %v3616 = vpack.c.b16 %v2328, %v2324
    %v3617 = vpack.c.b16 %v2329, %v2325
    %v3618 = vpack.c.b16 %v2330, %v2326
    %v3619 = vpack.c.b16 %v2331, %v2327
    %v3620 = vpack.c.b16 %v2336, %v2332
    %v3621 = vpack.c.b16 %v2337, %v2333
    %v3622 = vpack.c.b16 %v2338, %v2334
    %v3623 = vpack.c.b16 %v2339, %v2335
    %v3624 = vpack.c.b16 %v2344, %v2340
    %v3625 = vpack.c.b16 %v2345, %v2341
    %v3626 = vpack.c.b16 %v2346, %v2342
    %v3627 = vpack.c.b16 %v2347, %v2343
    %v3628 = vpack.c.b16 %v2352, %v2348
    %v3629 = vpack.c.b16 %v2353, %v2349
    %v3630 = vpack.c.b16 %v2354, %v2350
    %v3631 = vpack.c.b16 %v2355, %v2351
    %v3632 = vpack.c.b16 %v2360, %v2356
    %v3633 = vpack.c.b16 %v2361, %v2357
    %v3634 = vpack.c.b16 %v2362, %v2358
    %v3635 = vpack.c.b16 %v2363, %v2359
    %v3636 = vpack.c.b16 %v2368, %v2364
    %v3637 = vpack.c.b16 %v2369, %v2365
    %v3638 = vpack.c.b16 %v2370, %v2366
    %v3639 = vpack.c.b16 %v2371, %v2367
    %v3640 = vpack.c.b16 %v2376, %v2372
    %v3641 = vpack.c.b16 %v2377, %v2373
    %v3642 = vpack.c.b16 %v2378, %v2374
    %v3643 = vpack.c.b16 %v2379, %v2375
    %v3644 = vpack.c.b16 %v2384, %v2380
    %v3645 = vpack.c.b16 %v2385, %v2381
    %v3646 = vpack.c.b16 %v2386, %v2382
    %v3647 = vpack.c.b16 %v2387, %v2383
    %v3648 = vpack.c.b16 %v2392, %v2388
    %v3649 = vpack.c.b16 %v2393, %v2389
    %v3650 = vpack.c.b16 %v2394, %v2390
    %v3651 = vpack.c.b16 %v2395, %v2391
    %v3652 = vpack.c.b16 %v2400, %v2396
    %v3653 = vpack.c.b16 %v2401, %v2397
    %v3654 = vpack.c.b16 %v2402, %v2398
    %v3655 = vpack.c.b16 %v2403, %v2399
    %v3656 = vpack.c.b16 %v2408, %v2404
    %v3657 = vpack.c.b16 %v2409, %v2405
    %v3658 = vpack.c.b16 %v2410, %v2406
    %v3659 = vpack.c.b16 %v2411, %v2407
    %v3660 = vpack.c.b16 %v2416, %v2412
    %v3661 = vpack.c.b16 %v2417, %v2413
    %v3662 = vpack.c.b16 %v2418, %v2414
    %v3663 = vpack.c.b16 %v2419, %v2415
    %v3664 = vpack.c.b16 %v2424, %v2420
    %v3665 = vpack.c.b16 %v2425, %v2421
    %v3666 = vpack.c.b16 %v2426, %v2422
    %v3667 = vpack.c.b16 %v2427, %v2423
    %v3668 = vpack.c.b16 %v2432, %v2428
    %v3669 = vpack.c.b16 %v2433, %v2429
    %v3670 = vpack.c.b16 %v2434, %v2430
    %v3671 = vpack.c.b16 %v2435, %v2431
    %v3672 = vpack.c.b16 %v2440, %v2436
    %v3673 = vpack.c.b16 %v2441, %v2437
    %v3674 = vpack.c.b16 %v2442, %v2438
    %v3675 = vpack.c.b16 %v2443, %v2439
    %v3676 = vpack.c.b16 %v2448, %v2444
    %v3677 = vpack.c.b16 %v2449, %v2445
    %v3678 = vpack.c.b16 %v2450, %v2446
    %v3679 = vpack.c.b16 %v2451, %v2447
    %v3680 = vpack.c.b16 %v2456, %v2452
    %v3681 = vpack.c.b16 %v2457, %v2453
    %v3682 = vpack.c.b16 %v2458, %v2454
    %v3683 = vpack.c.b16 %v2459, %v2455
    %v3684 = vpack.c.b16 %v2464, %v2460
    %v3685 = vpack.c.b16 %v2465, %v2461
    %v3686 = vpack.c.b16 %v2466, %v2462
    %v3687 = vpack.c.b16 %v2467, %v2463
    %v3688 = vpack.c.b16 %v2472, %v2468
    %v3689 = vpack.c.b16 %v2473, %v2469
    %v3690 = vpack.c.b16 %v2474, %v2470
    %v3691 = vpack.c.b16 %v2475, %v2471
    %v3692 = vpack.c.b16 %v2480, %v2476
    %v3693 = vpack.c.b16 %v2481, %v2477
    %v3694 = vpack.c.b16 %v2482, %v2478
    %v3695 = vpack.c.b16 %v2483, %v2479
    %v3696 = vpack.c.b16 %v2488, %v2484
    %v3697 = vpack.c.b16 %v2489, %v2485
    %v3698 = vpack.c.b16 %v2490, %v2486
    %v3699 = vpack.c.b16 %v2491, %v2487
    %v3700 = vpack.c.b16 %v2496, %v2492
    %v3701 = vpack.c.b16 %v2497, %v2493
    %v3702 = vpack.c.b16 %v2498, %v2494
    %v3703 = vpack.c.b16 %v2499, %v2495
    %v3704 = vpack.c.b16 %v2504, %v2500
    %v3705 = vpack.c.b16 %v2505, %v2501
    %v3706 = vpack.c.b16 %v2506, %v2502
    %v3707 = vpack.c.b16 %v2507, %v2503
    %v3708 = vpack.c.b16 %v2512, %v2508
    %v3709 = vpack.c.b16 %v2513, %v2509
    %v3710 = vpack.c.b16 %v2514, %v2510
    %v3711 = vpack.c.b16 %v2515, %v2511
    %v3712 = vpack.c.b16 %v2520, %v2516
    %v3713 = vpack.c.b16 %v2521, %v2517
    %v3714 = vpack.c.b16 %v2522, %v2518
    %v3715 = vpack.c.b16 %v2523, %v2519
    %v3716 = vpack.c.b16 %v2528, %v2524
    %v3717 = vpack.c.b16 %v2529, %v2525
    %v3718 = vpack.c.b16 %v2530, %v2526
    %v3719 = vpack.c.b16 %v2531, %v2527
    %v3720 = vpack.c.b16 %v2536, %v2532
    %v3721 = vpack.c.b16 %v2537, %v2533
    %v3722 = vpack.c.b16 %v2538, %v2534
    %v3723 = vpack.c.b16 %v2539, %v2535
    %v3724 = vpack.c.b16 %v2544, %v2540
    %v3725 = vpack.c.b16 %v2545, %v2541
    %v3726 = vpack.c.b16 %v2546, %v2542
    %v3727 = vpack.c.b16 %v2547, %v2543
    %v3728 = vpack.c.b16 %v2552, %v2548
    %v3729 = vpack.c.b16 %v2553, %v2549
    %v3730 = vpack.c.b16 %v2554, %v2550
    %v3731 = vpack.c.b16 %v2555, %v2551
    %v3732 = vpack.c.b16 %v2560, %v2556
    %v3733 = vpack.c.b16 %v2561, %v2557
    %v3734 = vpack.c.b16 %v2562, %v2558
    %v3735 = vpack.c.b16 %v2563, %v2559
    %v3736 = vpack.c.b16 %v2568, %v2564
    %v3737 = vpack.c.b16 %v2569, %v2565
    %v3738 = vpack.c.b16 %v2570, %v2566
    %v3739 = vpack.c.b16 %v2571, %v2567
    %v3740 = vpack.c.b16 %v2576, %v2572
    %v3741 = vpack.c.b16 %v2577, %v2573
    %v3742 = vpack.c.b16 %v2578, %v2574
    %v3743 = vpack.c.b16 %v2579, %v2575
    %v3744 = vpack.c.b16 %v2584, %v2580
    %v3745 = vpack.c.b16 %v2585, %v2581
    %v3746 = vpack.c.b16 %v2586, %v2582
    %v3747 = vpack.c.b16 %v2587, %v2583
    %v3748 = vpack.c.b16 %v2592, %v2588
    %v3749 = vpack.c.b16 %v2593, %v2589
    %v3750 = vpack.c.b16 %v2594, %v2590
    %v3751 = vpack.c.b16 %v2595, %v2591
    %v3752 = vpack.c.b16 %v2600, %v2596
    %v3753 = vpack.c.b16 %v2601, %v2597
    %v3754 = vpack.c.b16 %v2602, %v2598
    %v3755 = vpack.c.b16 %v2603, %v2599
    %v3756 = vpack.c.b16 %v2608, %v2604
    %v3757 = vpack.c.b16 %v2609, %v2605
    %v3758 = vpack.c.b16 %v2610, %v2606
    %v3759 = vpack.c.b16 %v2611, %v2607
    %v3760 = vpack.c.b16 %v2616, %v2612
    %v3761 = vpack.c.b16 %v2617, %v2613
    %v3762 = vpack.c.b16 %v2618, %v2614
    %v3763 = vpack.c.b16 %v2619, %v2615
    %v3764 = vpack.c.b16 %v2624, %v2620
    %v3765 = vpack.c.b16 %v2625, %v2621
    %v3766 = vpack.c.b16 %v2626, %v2622
    %v3767 = vpack.c.b16 %v2627, %v2623
    %v3768 = vpack.c.b16 %v2632, %v2628
    %v3769 = vpack.c.b16 %v2633, %v2629
    %v3770 = vpack.c.b16 %v2634, %v2630
    %v3771 = vpack.c.b16 %v2635, %v2631
    %v3772 = vpack.c.b16 %v2640, %v2636
    %v3773 = vpack.c.b16 %v2641, %v2637
    %v3774 = vpack.c.b16 %v2642, %v2638
    %v3775 = vpack.c.b16 %v2643, %v2639
    %v3776 = vpack.c.b16 %v2648, %v2644
    %v3777 = vpack.c.b16 %v2649, %v2645
    %v3778 = vpack.c.b16 %v2650, %v2646
    %v3779 = vpack.c.b16 %v2651, %v2647
    %v3780 = vpack.c.b16 %v2656, %v2652
    %v3781 = vpack.c.b16 %v2657, %v2653
    %v3782 = vpack.c.b16 %v2658, %v2654
    %v3783 = vpack.c.b16 %v2659, %v2655
    %v3784 = vpack.c.b16 %v2664, %v2660
    %v3785 = vpack.c.b16 %v2665, %v2661
    %v3786 = vpack.c.b16 %v2666, %v2662
    %v3787 = vpack.c.b16 %v2667, %v2663
    %v3788 = vpack.c.b16 %v2672, %v2668
    %v3789 = vpack.c.b16 %v2673, %v2669
    %v3790 = vpack.c.b16 %v2674, %v2670
    %v3791 = vpack.c.b16 %v2675, %v2671
    %v3792 = vpack.c.b16 %v2680, %v2676
    %v3793 = vpack.c.b16 %v2681, %v2677
    %v3794 = vpack.c.b16 %v2682, %v2678
    %v3795 = vpack.c.b16 %v2683, %v2679
    %v3796 = vpack.c.b16 %v2688, %v2684
    %v3797 = vpack.c.b16 %v2689, %v2685
    %v3798 = vpack.c.b16 %v2690, %v2686
    %v3799 = vpack.c.b16 %v2691, %v2687
    %v3800 = vpack.c.b16 %v2696, %v2692
    %v3801 = vpack.c.b16 %v2697, %v2693
    %v3802 = vpack.c.b16 %v2698, %v2694
    %v3803 = vpack.c.b16 %v2699, %v2695
    %v3804 = vpack.c.b16 %v2704, %v2700
    %v3805 = vpack.c.b16 %v2705, %v2701
    %v3806 = vpack.c.b16 %v2706, %v2702
    %v3807 = vpack.c.b16 %v2707, %v2703
    %v3808 = vpack.c.b16 %v2712, %v2708
    %v3809 = vpack.c.b16 %v2713, %v2709
    %v3810 = vpack.c.b16 %v2714, %v2710
    %v3811 = vpack.c.b16 %v2715, %v2711
    %v3812 = vpack.c.b16 %v2720, %v2716
    %v3813 = vpack.c.b16 %v2721, %v2717
    %v3814 = vpack.c.b16 %v2722, %v2718
    %v3815 = vpack.c.b16 %v2723, %v2719
    %v3816 = vpack.c.b16 %v2728, %v2724
    %v3817 = vpack.c.b16 %v2729, %v2725
    %v3818 = vpack.c.b16 %v2730, %v2726
    %v3819 = vpack.c.b16 %v2731, %v2727
    %v3820 = vpack.c.b16 %v2736, %v2732
    %v3821 = vpack.c.b16 %v2737, %v2733
    %v3822 = vpack.c.b16 %v2738, %v2734
    %v3823 = vpack.c.b16 %v2739, %v2735
    %v3824 = vpack.c.b16 %v2744, %v2740
    %v3825 = vpack.c.b16 %v2745, %v2741
    %v3826 = vpack.c.b16 %v2746, %v2742
    %v3827 = vpack.c.b16 %v2747, %v2743
    %v3828 = vpack.c.b16 %v2752, %v2748
    %v3829 = vpack.c.b16 %v2753, %v2749
    %v3830 = vpack.c.b16 %v2754, %v2750
    %v3831 = vpack.c.b16 %v2755, %v2751
    %v3832 = vpack.c.b16 %v2760, %v2756
    %v3833 = vpack.c.b16 %v2761, %v2757
    %v3834 = vpack.c.b16 %v2762, %v2758
    %v3835 = vpack.c.b16 %v2763, %v2759
    %v3836 = vpack.c.b16 %v2768, %v2764
    %v3837 = vpack.c.b16 %v2769, %v2765
    %v3838 = vpack.c.b16 %v2770, %v2766
    %v3839 = vpack.c.b16 %v2771, %v2767
    %v3840 = vpack.c.b16 %v2776, %v2772
    %v3841 = vpack.c.b16 %v2777, %v2773
    %v3842 = vpack.c.b16 %v2778, %v2774
    %v3843 = vpack.c.b16 %v2779, %v2775
    %v3844 = vpack.c.b16 %v2784, %v2780
    %v3845 = vpack.c.b16 %v2785, %v2781
    %v3846 = vpack.c.b16 %v2786, %v2782
    %v3847 = vpack.c.b16 %v2787, %v2783
    %v3848 = vpack.c.b16 %v2792, %v2788
    %v3849 = vpack.c.b16 %v2793, %v2789
    %v3850 = vpack.c.b16 %v2794, %v2790
    %v3851 = vpack.c.b16 %v2795, %v2791
    %v3852 = vpack.c.b16 %v2800, %v2796
    %v3853 = vpack.c.b16 %v2801, %v2797
    %v3854 = vpack.c.b16 %v2802, %v2798
    %v3855 = vpack.c.b16 %v2803, %v2799
    %v3856 = vpack.c.b16 %v2808, %v2804
    %v3857 = vpack.c.b16 %v2809, %v2805
    %v3858 = vpack.c.b16 %v2810, %v2806
    %v3859 = vpack.c.b16 %v2811, %v2807
    %v3860 = vpack.c.b16 %v2816, %v2812
    %v3861 = vpack.c.b16 %v2817, %v2813
    %v3862 = vpack.c.b16 %v2818, %v2814
    %v3863 = vpack.c.b16 %v2819, %v2815
    %v3864 = vpack.c.b16 %v2824, %v2820
    %v3865 = vpack.c.b16 %v2825, %v2821
    %v3866 = vpack.c.b16 %v2826, %v2822
    %v3867 = vpack.c.b16 %v2827, %v2823
    %v3868 = vpack.c.b16 %v2832, %v2828
    %v3869 = vpack.c.b16 %v2833, %v2829
    %v3870 = vpack.c.b16 %v2834, %v2830
    %v3871 = vpack.c.b16 %v2835, %v2831
    %v3872 = vpack.c.b16 %v2840, %v2836
    %v3873 = vpack.c.b16 %v2841, %v2837
    %v3874 = vpack.c.b16 %v2842, %v2838
    %v3875 = vpack.c.b16 %v2843, %v2839
    %v3876 = vpack.c.b16 %v2848, %v2844
    %v3877 = vpack.c.b16 %v2849, %v2845
    %v3878 = vpack.c.b16 %v2850, %v2846
    %v3879 = vpack.c.b16 %v2851, %v2847
    %v3880 = vpack.c.b16 %v2856, %v2852
    %v3881 = vpack.c.b16 %v2857, %v2853
    %v3882 = vpack.c.b16 %v2858, %v2854
    %v3883 = vpack.c.b16 %v2859, %v2855
    %v3884 = vpack.c.b16 %v2864, %v2860
    %v3885 = vpack.c.b16 %v2865, %v2861
    %v3886 = vpack.c.b16 %v2866, %v2862
    %v3887 = vpack.c.b16 %v2867, %v2863
    %v3888 = vpack.c.b16 %v2872, %v2868
    %v3889 = vpack.c.b16 %v2873, %v2869
    %v3890 = vpack.c.b16 %v2874, %v2870
    %v3891 = vpack.c.b16 %v2875, %v2871
    %v3892 = vpack.c.b16 %v2880, %v2876
    %v3893 = vpack.c.b16 %v2881, %v2877
    %v3894 = vpack.c.b16 %v2882, %v2878
    %v3895 = vpack.c.b16 %v2883, %v2879
    %v3896 = vpack.c.b16 %v2888, %v2884
    %v3897 = vpack.c.b16 %v2889, %v2885
    %v3898 = vpack.c.b16 %v2890, %v2886
    %v3899 = vpack.c.b16 %v2891, %v2887
    %v3900 = vpack.c.b16 %v2896, %v2892
    %v3901 = vpack.c.b16 %v2897, %v2893
    %v3902 = vpack.c.b16 %v2898, %v2894
    %v3903 = vpack.c.b16 %v2899, %v2895
    %v3904 = vpack.c.b16 %v2904, %v2900
    %v3905 = vpack.c.b16 %v2905, %v2901
    %v3906 = vpack.c.b16 %v2906, %v2902
    %v3907 = vpack.c.b16 %v2907, %v2903
    %v3908 = vpack.c.b16 %v2912, %v2908
    %v3909 = vpack.c.b16 %v2913, %v2909
    %v3910 = vpack.c.b16 %v2914, %v2910
    %v3911 = vpack.c.b16 %v2915, %v2911
    %v3912 = vpack.c.b16 %v2920, %v2916
    %v3913 = vpack.c.b16 %v2921, %v2917
    %v3914 = vpack.c.b16 %v2922, %v2918
    %v3915 = vpack.c.b16 %v2923, %v2919
    %v3916 = vpack.c.b16 %v2928, %v2924
    %v3917 = vpack.c.b16 %v2929, %v2925
    %v3918 = vpack.c.b16 %v2930, %v2926
    %v3919 = vpack.c.b16 %v2931, %v2927
    %v3920 = vpack.c.b16 %v2936, %v2932
    %v3921 = vpack.c.b16 %v2937, %v2933
    %v3922 = vpack.c.b16 %v2938, %v2934
    %v3923 = vpack.c.b16 %v2939, %v2935
    %v3924 = vpack.c.b16 %v2944, %v2940
    %v3925 = vpack.c.b16 %v2945, %v2941
    %v3926 = vpack.c.b16 %v2946, %v2942
    %v3927 = vpack.c.b16 %v2947, %v2943
    %v3928 = vpack.c.b16 %v2952, %v2948
    %v3929 = vpack.c.b16 %v2953, %v2949
    %v3930 = vpack.c.b16 %v2954, %v2950
    %v3931 = vpack.c.b16 %v2955, %v2951
    %v3932 = vpack.c.b16 %v2960, %v2956
    %v3933 = vpack.c.b16 %v2961, %v2957
    %v3934 = vpack.c.b16 %v2962, %v2958
    %v3935 = vpack.c.b16 %v2963, %v2959
    %v3936 = vpack.c.b16 %v2968, %v2964
    %v3937 = vpack.c.b16 %v2969, %v2965
    %v3938 = vpack.c.b16 %v2970, %v2966
    %v3939 = vpack.c.b16 %v2971, %v2967
    %v3940 = vpack.c.b16 %v2976, %v2972
    %v3941 = vpack.c.b16 %v2977, %v2973
    %v3942 = vpack.c.b16 %v2978, %v2974
    %v3943 = vpack.c.b16 %v2979, %v2975
    %v3944 = vpack.c.b16 %v2984, %v2980
    %v3945 = vpack.c.b16 %v2985, %v2981
    %v3946 = vpack.c.b16 %v2986, %v2982
    %v3947 = vpack.c.b16 %v2987, %v2983
    %v3948 = vpack.c.b16 %v2992, %v2988
    %v3949 = vpack.c.b16 %v2993, %v2989
    %v3950 = vpack.c.b16 %v2994, %v2990
    %v3951 = vpack.c.b16 %v2995, %v2991
    %v3952 = vpack.c.b16 %v3000, %v2996
    %v3953 = vpack.c.b16 %v3001, %v2997
    %v3954 = vpack.c.b16 %v3002, %v2998
    %v3955 = vpack.c.b16 %v3003, %v2999
    %v3956 = vpack.c.b16 %v3008, %v3004
    %v3957 = vpack.c.b16 %v3009, %v3005
    %v3958 = vpack.c.b16 %v3010, %v3006
    %v3959 = vpack.c.b16 %v3011, %v3007
    %v3960 = vpack.c.b16 %v3016, %v3012
    %v3961 = vpack.c.b16 %v3017, %v3013
    %v3962 = vpack.c.b16 %v3018, %v3014
    %v3963 = vpack.c.b16 %v3019, %v3015
    %v3964 = vpack.c.b16 %v3024, %v3020
    %v3965 = vpack.c.b16 %v3025, %v3021
    %v3966 = vpack.c.b16 %v3026, %v3022
    %v3967 = vpack.c.b16 %v3027, %v3023
    %v3968 = vpack.c.b16 %v3032, %v3028
    %v3969 = vpack.c.b16 %v3033, %v3029
    %v3970 = vpack.c.b16 %v3034, %v3030
    %v3971 = vpack.c.b16 %v3035, %v3031
    %v3972 = vpack.c.b16 %v3040, %v3036
    %v3973 = vpack.c.b16 %v3041, %v3037
    %v3974 = vpack.c.b16 %v3042, %v3038
    %v3975 = vpack.c.b16 %v3043, %v3039
    %v3976 = vpack.c.b16 %v3048, %v3044
    %v3977 = vpack.c.b16 %v3049, %v3045
    %v3978 = vpack.c.b16 %v3050, %v3046
    %v3979 = vpack.c.b16 %v3051, %v3047
    %v3980 = vpack.c.b16 %v3056, %v3052
    %v3981 = vpack.c.b16 %v3057, %v3053
    %v3982 = vpack.c.b16 %v3058, %v3054
    %v3983 = vpack.c.b16 %v3059, %v3055
    %v3984 = vpack.c.b16 %v3064, %v3060
    %v3985 = vpack.c.b16 %v3065, %v3061
    %v3986 = vpack.c.b16 %v3066, %v3062
    %v3987 = vpack.c.b16 %v3067, %v3063
    %v3988 = vpack.c.b16 %v3072, %v3068
    %v3989 = vpack.c.b16 %v3073, %v3069
    %v3990 = vpack.c.b16 %v3074, %v3070
    %v3991 = vpack.c.b16 %v3075, %v3071
    %v3992 = vpack.c.b16 %v3080, %v3076
    %v3993 = vpack.c.b16 %v3081, %v3077
    %v3994 = vpack.c.b16 %v3082, %v3078
    %v3995 = vpack.c.b16 %v3083, %v3079
    %v3996 = vpack.c.b16 %v3088, %v3084
    %v3997 = vpack.c.b16 %v3089, %v3085
    %v3998 = vpack.c.b16 %v3090, %v3086
    %v3999 = vpack.c.b16 %v3091, %v3087
    %v4000 = vpack.c.b16 %v3096, %v3092
    %v4001 = vpack.c.b16 %v3097, %v3093
    %v4002 = vpack.c.b16 %v3098, %v3094
    %v4003 = vpack.c.b16 %v3099, %v3095
    %v4004 = vpack.c.b16 %v3104, %v3100
    %v4005 = vpack.c.b16 %v3105, %v3101
    %v4006 = vpack.c.b16 %v3106, %v3102
    %v4007 = vpack.c.b16 %v3107, %v3103
    %v4008 = vpack.c.b16 %v3112, %v3108
    %v4009 = vpack.c.b16 %v3113, %v3109
    %v4010 = vpack.c.b16 %v3114, %v3110
    %v4011 = vpack.c.b16 %v3115, %v3111
    %v4012 = vpack.c.b16 %v3120, %v3116
    %v4013 = vpack.c.b16 %v3121, %v3117
    %v4014 = vpack.c.b16 %v3122, %v3118
    %v4015 = vpack.c.b16 %v3123, %v3119
    %v4016 = vpack.c.b16 %v3128, %v3124
    %v4017 = vpack.c.b16 %v3129, %v3125
    %v4018 = vpack.c.b16 %v3130, %v3126
    %v4019 = vpack.c.b16 %v3131, %v3127
    %v4020 = vpack.c.b16 %v3136, %v3132
    %v4021 = vpack.c.b16 %v3137, %v3133
    %v4022 = vpack.c.b16 %v3138, %v3134
    %v4023 = vpack.c.b16 %v3139, %v3135
    %v4024 = vpack.c.b16 %v3144, %v3140
    %v4025 = vpack.c.b16 %v3145, %v3141
    %v4026 = vpack.c.b16 %v3146, %v3142
    %v4027 = vpack.c.b16 %v3147, %v3143
    %v4028 = vpack.c.b16 %v3152, %v3148
    %v4029 = vpack.c.b16 %v3153, %v3149
    %v4030 = vpack.c.b16 %v3154, %v3150
    %v4031 = vpack.c.b16 %v3155, %v3151
    %v4032 = vpack.c.b16 %v3160, %v3156
    %v4033 = vpack.c.b16 %v3161, %v3157
    %v4034 = vpack.c.b16 %v3162, %v3158
    %v4035 = vpack.c.b16 %v3163, %v3159
    %v4036 = vpack.c.b16 %v3168, %v3164
    %v4037 = vpack.c.b16 %v3169, %v3165
    %v4038 = vpack.c.b16 %v3170, %v3166
    %v4039 = vpack.c.b16 %v3171, %v3167
    %v4040 = vpack.c.b16 %v3176, %v3172
    %v4041 = vpack.c.b16 %v3177, %v3173
    %v4042 = vpack.c.b16 %v3178, %v3174
    %v4043 = vpack.c.b16 %v3179, %v3175
    %v4044 = vpack.c.b16 %v3184, %v3180
    %v4045 = vpack.c.b16 %v3185, %v3181
    %v4046 = vpack.c.b16 %v3186, %v3182
    %v4047 = vpack.c.b16 %v3187, %v3183
    %v4048 = vpack.c.b16 %v3192, %v3188
    %v4049 = vpack.c.b16 %v3193, %v3189
    %v4050 = vpack.c.b16 %v3194, %v3190
    %v4051 = vpack.c.b16 %v3195, %v3191
    %v4052 = vpack.c.b16 %v3200, %v3196
    %v4053 = vpack.c.b16 %v3201, %v3197
    %v4054 = vpack.c.b16 %v3202, %v3198
    %v4055 = vpack.c.b16 %v3203, %v3199
    %v4056 = vpack.c.b16 %v3208, %v3204
    %v4057 = vpack.c.b16 %v3209, %v3205
    %v4058 = vpack.c.b16 %v3210, %v3206
    %v4059 = vpack.c.b16 %v3211, %v3207
    %v4060 = vpack.c.b16 %v3216, %v3212
    %v4061 = vpack.c.b16 %v3217, %v3213
    %v4062 = vpack.c.b16 %v3218, %v3214
    %v4063 = vpack.c.b16 %v3219, %v3215
    %v4064 = vpack.c.b16 %v3224, %v3220
    %v4065 = vpack.c.b16 %v3225, %v3221
    %v4066 = vpack.c.b16 %v3226, %v3222
    %v4067 = vpack.c.b16 %v3227, %v3223
    %v4068 = vpack.c.b16 %v3232, %v3228
    %v4069 = vpack.c.b16 %v3233, %v3229
    %v4070 = vpack.c.b16 %v3234, %v3230
    %v4071 = vpack.c.b16 %v3235, %v3231
    %v4072 = vpack.c.b16 %v3240, %v3236
    %v4073 = vpack.c.b16 %v3241, %v3237
    %v4074 = vpack.c.b16 %v3242, %v3238
    %v4075 = vpack.c.b16 %v3243, %v3239
    %v4076 = vpack.c.b16 %v3248, %v3244
    %v4077 = vpack.c.b16 %v3249, %v3245
    %v4078 = vpack.c.b16 %v3250, %v3246
    %v4079 = vpack.c.b16 %v3251, %v3247
    %v4080 = vpack.c.b16 %v3256, %v3252
    %v4081 = vpack.c.b16 %v3257, %v3253
    %v4082 = vpack.c.b16 %v3258, %v3254
    %v4083 = vpack.c.b16 %v3259, %v3255
    %v4084 = vpack.c.b16 %v3264, %v3260
    %v4085 = vpack.c.b16 %v3265, %v3261
    %v4086 = vpack.c.b16 %v3266, %v3262
    %v4087 = vpack.c.b16 %v3267, %v3263
    %v4088 = vpack.c.b16 %v3272, %v3268
    %v4089 = vpack.c.b16 %v3273, %v3269
    %v4090 = vpack.c.b16 %v3274, %v3270
    %v4091 = vpack.c.b16 %v3275, %v3271
    %v4092 = vpack.c.b16 %v3280, %v3276
    %v4093 = vpack.c.b16 %v3281, %v3277
    %v4094 = vpack.c.b16 %v3282, %v3278
    %v4095 = vpack.c.b16 %v3283, %v3279
    %v4096 = vpack.c.b16 %v3288, %v3284
    %v4097 = vpack.c.b16 %v3289, %v3285
    %v4098 = vpack.c.b16 %v3290, %v3286
    %v4099 = vpack.c.b16 %v3291, %v3287
    %v4100 = vpack.c.b16 %v3296, %v3292
    %v4101 = vpack.c.b16 %v3297, %v3293
    %v4102 = vpack.c.b16 %v3298, %v3294
    %v4103 = vpack.c.b16 %v3299, %v3295
    %v4104 = vpack.c.b16 %v3304, %v3300
    %v4105 = vpack.c.b16 %v3305, %v3301
    %v4106 = vpack.c.b16 %v3306, %v3302
    %v4107 = vpack.c.b16 %v3307, %v3303
    %v4108 = vpack.c.b16 %v3312, %v3308
    %v4109 = vpack.c.b16 %v3313, %v3309
    %v4110 = vpack.c.b16 %v3314, %v3310
    %v4111 = vpack.c.b16 %v3315, %v3311
    %v4112 = vpack.c.b16 %v3320, %v3316
    %v4113 = vpack.c.b16 %v3321, %v3317
    %v4114 = vpack.c.b16 %v3322, %v3318
    %v4115 = vpack.c.b16 %v3323, %v3319
    %v4116 = vpack.c.b16 %v3328, %v3324
    %v4117 = vpack.c.b16 %v3329, %v3325
    %v4118 = vpack.c.b16 %v3330, %v3326
    %v4119 = vpack.c.b16 %v3331, %v3327
    %v4120 = vpack.c.b16 %v3336, %v3332
    %v4121 = vpack.c.b16 %v3337, %v3333
    %v4122 = vpack.c.b16 %v3338, %v3334
    %v4123 = vpack.c.b16 %v3339, %v3335
    %v4124 = vpack.c.b16 %v3344, %v3340
    %v4125 = vpack.c.b16 %v3345, %v3341
    %v4126 = vpack.c.b16 %v3346, %v3342
    %v4127 = vpack.c.b16 %v3347, %v3343
    %v4128 = vpack.c.b16 %v3352, %v3348
    %v4129 = vpack.c.b16 %v3353, %v3349
    %v4130 = vpack.c.b16 %v3354, %v3350
    %v4131 = vpack.c.b16 %v3355, %v3351
    %v4132 = vpack.c.b16 %v3360, %v3356
    %v4133 = vpack.c.b16 %v3361, %v3357
    %v4134 = vpack.c.b16 %v3362, %v3358
    %v4135 = vpack.c.b16 %v3363, %v3359
    %v4136 = vpack.c.b16 %v3368, %v3364
    %v4137 = vpack.c.b16 %v3369, %v3365
    %v4138 = vpack.c.b16 %v3370, %v3366
    %v4139 = vpack.c.b16 %v3371, %v3367
    %4908 = vmatprep.subr.bf16.mxu0 %v3373
    %4909 = vmatpush1.bf16.msra.mxu0 %v3372
    %4910 = vmatprep.subr.bf16.mxu0 %v3377
    %4911 = vmatpush1.bf16.msra.mxu0 %v3376
    %4912 = vmatprep.subr.bf16.mxu0 %v3381
    %4913 = vmatpush1.bf16.msra.mxu0 %v3380
    %4914 = vmatprep.subr.bf16.mxu0 %v3385
    %4915 = vmatpush1.bf16.msra.mxu0 %v3384
    %4916 = vmatprep.subr.bf16.mxu0 %v3389
    %4917 = vmatpush1.bf16.msra.mxu0 %v3388
    %4918 = vmatprep.subr.bf16.mxu0 %v3393
    %4919 = vmatpush1.bf16.msra.mxu0 %v3392
    %4920 = vmatprep.subr.bf16.mxu0 %v3397
    %4921 = vmatpush1.bf16.msra.mxu0 %v3396
    %4922 = vmatprep.subr.bf16.mxu0 %v3401
    %4923 = vmatpush1.bf16.msra.mxu0 %v3400
    %4924 = vmatprep.subr.bf16.mxu0 %v3405
    %4925 = vmatpush1.bf16.msra.mxu0 %v3404
    %4926 = vmatprep.subr.bf16.mxu0 %v3409
    %4927 = vmatpush1.bf16.msra.mxu0 %v3408
    %4928 = vmatprep.subr.bf16.mxu0 %v3413
    %4929 = vmatpush1.bf16.msra.mxu0 %v3412
    %4930 = vmatprep.subr.bf16.mxu0 %v3417
    %4931 = vmatpush1.bf16.msra.mxu0 %v3416
    %4932 = vmatprep.subr.bf16.mxu0 %v3421
    %4933 = vmatpush1.bf16.msra.mxu0 %v3420
    %4934 = vmatprep.subr.bf16.mxu0 %v3425
    %4935 = vmatpush1.bf16.msra.mxu0 %v3424
    %4936 = vmatprep.subr.bf16.mxu0 %v3429
    %4937 = vmatpush1.bf16.msra.mxu0 %v3428
    %4938 = vmatprep.subr.bf16.mxu0 %v3433
    %4939 = vmatpush1.bf16.msra.mxu0 %v3432
    %4940 = vmatprep.mubr.bf16.mxu0 %v1021
    %4941 = vmatmul.mubr.bf16.gmra.mrb[0].mxu0 %v1020
    %v4942 = vpop.f32.mrb[0].mxu0
    %v4943 = vadd.f32 %v931, %v4942
    %v4944 = vpop.f32.mrb[0].mxu0
    %v4945 = vadd.f32 %v935, %v4944
    %v4946 = vpop.f32.mrb[0].mxu0
    %v4947 = vadd.f32 %v931, %v4946
    %v4948 = vpop.f32.mrb[0].mxu0
    %v4949 = vadd.f32 %v935, %v4948
    %4950 = vdwg.mxu0
    %4951 = vmatprep.subr.bf16.mxu0 %v3437
    %4952 = vmatpush1.bf16.msra.mxu0 %v3436
    %4953 = vmatprep.subr.bf16.mxu0 %v3441
    %4954 = vmatpush1.bf16.msra.mxu0 %v3440
    %4955 = vmatprep.subr.bf16.mxu0 %v3445
    %4956 = vmatpush1.bf16.msra.mxu0 %v3444
    %4957 = vmatprep.subr.bf16.mxu0 %v3449
    %4958 = vmatpush1.bf16.msra.mxu0 %v3448
    %4959 = vmatprep.subr.bf16.mxu0 %v3453
    %4960 = vmatpush1.bf16.msra.mxu0 %v3452
    %4961 = vmatprep.subr.bf16.mxu0 %v3457
    %4962 = vmatpush1.bf16.msra.mxu0 %v3456
    %4963 = vmatprep.subr.bf16.mxu0 %v3461
    %4964 = vmatpush1.bf16.msra.mxu0 %v3460
    %4965 = vmatprep.subr.bf16.mxu0 %v3465
    %4966 = vmatpush1.bf16.msra.mxu0 %v3464
    %4967 = vmatprep.subr.bf16.mxu0 %v3469
    %4968 = vmatpush1.bf16.msra.mxu0 %v3468
    %4969 = vmatprep.subr.bf16.mxu0 %v3473
    %4970 = vmatpush1.bf16.msra.mxu0 %v3472
    %4971 = vmatprep.subr.bf16.mxu0 %v3477
    %4972 = vmatpush1.bf16.msra.mxu0 %v3476
    %4973 = vmatprep.subr.bf16.mxu0 %v3481
    %4974 = vmatpush1.bf16.msra.mxu0 %v3480
    %4975 = vmatprep.subr.bf16.mxu0 %v3485
    %4976 = vmatpush1.bf16.msra.mxu0 %v3484
    %4977 = vmatprep.subr.bf16.mxu0 %v3489
    %4978 = vmatpush1.bf16.msra.mxu0 %v3488
    %4979 = vmatprep.subr.bf16.mxu0 %v3493
    %4980 = vmatpush1.bf16.msra.mxu0 %v3492
    %4981 = vmatprep.subr.bf16.mxu0 %v3497
    %4982 = vmatpush1.bf16.msra.mxu0 %v3496
    %4983 = vmatprep.mubr.bf16.mxu0 %v1023
    %4984 = vmatmul.mubr.bf16.gmra.mrb[0].mxu0 %v1022
    %v4985 = vpop.f32.mrb[0].mxu0
    %v4986 = vadd.f32 %v4943, %v4985
    %v4987 = vpop.f32.mrb[0].mxu0
    %v4988 = vadd.f32 %v4945, %v4987
    %v4989 = vpop.f32.mrb[0].mxu0
    %v4990 = vadd.f32 %v4947, %v4989
    %v4991 = vpop.f32.mrb[0].mxu0
    %v4992 = vadd.f32 %v4949, %v4991
    %4993 = vdwg.mxu0
    %4994 = vmatprep.subr.bf16.mxu0 %v3501
    %4995 = vmatpush1.bf16.msra.mxu0 %v3500
    %4996 = vmatprep.subr.bf16.mxu0 %v3505
    %4997 = vmatpush1.bf16.msra.mxu0 %v3504
    %4998 = vmatprep.subr.bf16.mxu0 %v3509
    %4999 = vmatpush1.bf16.msra.mxu0 %v3508
    %5000 = vmatprep.subr.bf16.mxu0 %v3513
    %5001 = vmatpush1.bf16.msra.mxu0 %v3512
    %5002 = vmatprep.subr.bf16.mxu0 %v3517
    %5003 = vmatpush1.bf16.msra.mxu0 %v3516
    %5004 = vmatprep.subr.bf16.mxu0 %v3521
    %5005 = vmatpush1.bf16.msra.mxu0 %v3520
    %5006 = vmatprep.subr.bf16.mxu0 %v3525
    %5007 = vmatpush1.bf16.msra.mxu0 %v3524
    %5008 = vmatprep.subr.bf16.mxu0 %v3529
    %5009 = vmatpush1.bf16.msra.mxu0 %v3528
    %5010 = vmatprep.subr.bf16.mxu0 %v3533
    %5011 = vmatpush1.bf16.msra.mxu0 %v3532
    %5012 = vmatprep.subr.bf16.mxu0 %v3537
    %5013 = vmatpush1.bf16.msra.mxu0 %v3536
    %5014 = vmatprep.subr.bf16.mxu0 %v3541
    %5015 = vmatpush1.bf16.msra.mxu0 %v3540
    %5016 = vmatprep.subr.bf16.mxu0 %v3545
    %5017 = vmatpush1.bf16.msra.mxu0 %v3544
    %5018 = vmatprep.subr.bf16.mxu0 %v3549
    %5019 = vmatpush1.bf16.msra.mxu0 %v3548
    %5020 = vmatprep.subr.bf16.mxu0 %v3553
    %5021 = vmatpush1.bf16.msra.mxu0 %v3552
    %5022 = vmatprep.subr.bf16.mxu0 %v3557
    %5023 = vmatpush1.bf16.msra.mxu0 %v3556
    %5024 = vmatprep.subr.bf16.mxu0 %v3561
    %5025 = vmatpush1.bf16.msra.mxu0 %v3560
    %5026 = vmatprep.mubr.bf16.mxu0 %v1025
    %5027 = vmatmul.mubr.bf16.gmra.mrb[0].mxu0 %v1024
    %v5028 = vpop.f32.mrb[0].mxu0
    %v5029 = vadd.f32 %v4986, %v5028
    %v5030 = vpop.f32.mrb[0].mxu0
    %v5031 = vadd.f32 %v4988, %v5030
    %v5032 = vpop.f32.mrb[0].mxu0
    %v5033 = vadd.f32 %v4990, %v5032
    %v5034 = vpop.f32.mrb[0].mxu0
    %v5035 = vadd.f32 %v4992, %v5034
    %5036 = vdwg.mxu0
    %5037 = vmatprep.subr.bf16.mxu0 %v3565
    %5038 = vmatpush1.bf16.msra.mxu0 %v3564
    %5039 = vmatprep.subr.bf16.mxu0 %v3569
    %5040 = vmatpush1.bf16.msra.mxu0 %v3568
    %5041 = vmatprep.subr.bf16.mxu0 %v3573
    %5042 = vmatpush1.bf16.msra.mxu0 %v3572
    %5043 = vmatprep.subr.bf16.mxu0 %v3577
    %5044 = vmatpush1.bf16.msra.mxu0 %v3576
    %5045 = vmatprep.subr.bf16.mxu0 %v3581
    %5046 = vmatpush1.bf16.msra.mxu0 %v3580
    %5047 = vmatprep.subr.bf16.mxu0 %v3585
    %5048 = vmatpush1.bf16.msra.mxu0 %v3584
    %5049 = vmatprep.subr.bf16.mxu0 %v3589
    %5050 = vmatpush1.bf16.msra.mxu0 %v3588
    %5051 = vmatprep.subr.bf16.mxu0 %v3593
    %5052 = vmatpush1.bf16.msra.mxu0 %v3592
    %5053 = vmatprep.subr.bf16.mxu0 %v3597
    %5054 = vmatpush1.bf16.msra.mxu0 %v3596
    %5055 = vmatprep.subr.bf16.mxu0 %v3601
    %5056 = vmatpush1.bf16.msra.mxu0 %v3600
    %5057 = vmatprep.subr.bf16.mxu0 %v3605
    %5058 = vmatpush1.bf16.msra.mxu0 %v3604
    %5059 = vmatprep.subr.bf16.mxu0 %v3609
    %5060 = vmatpush1.bf16.msra.mxu0 %v3608
    %5061 = vmatprep.subr.bf16.mxu0 %v3613
    %5062 = vmatpush1.bf16.msra.mxu0 %v3612
    %5063 = vmatprep.subr.bf16.mxu0 %v3617
    %5064 = vmatpush1.bf16.msra.mxu0 %v3616
    %5065 = vmatprep.subr.bf16.mxu0 %v3621
    %5066 = vmatpush1.bf16.msra.mxu0 %v3620
    %5067 = vmatprep.subr.bf16.mxu0 %v3625
    %5068 = vmatpush1.bf16.msra.mxu0 %v3624
    %5069 = vmatprep.mubr.bf16.mxu0 %v1027
    %5070 = vmatmul.mubr.bf16.gmra.mrb[0].mxu0 %v1026
    %v5071 = vpop.f32.mrb[0].mxu0
    %v5072 = vadd.f32 %v5029, %v5071
    %v5073 = vpop.f32.mrb[0].mxu0
    %v5074 = vadd.f32 %v5031, %v5073
    %v5075 = vpop.f32.mrb[0].mxu0
    %v5076 = vadd.f32 %v5033, %v5075
    %v5077 = vpop.f32.mrb[0].mxu0
    %v5078 = vadd.f32 %v5035, %v5077
    %5079 = vdwg.mxu0
    %5080 = vmatprep.subr.bf16.mxu0 %v3629
    %5081 = vmatpush1.bf16.msra.mxu0 %v3628
    %5082 = vmatprep.subr.bf16.mxu0 %v3633
    %5083 = vmatpush1.bf16.msra.mxu0 %v3632
    %5084 = vmatprep.subr.bf16.mxu0 %v3637
    %5085 = vmatpush1.bf16.msra.mxu0 %v3636
    %5086 = vmatprep.subr.bf16.mxu0 %v3641
    %5087 = vmatpush1.bf16.msra.mxu0 %v3640
    %5088 = vmatprep.subr.bf16.mxu0 %v3645
    %5089 = vmatpush1.bf16.msra.mxu0 %v3644
    %5090 = vmatprep.subr.bf16.mxu0 %v3649
    %5091 = vmatpush1.bf16.msra.mxu0 %v3648
    %5092 = vmatprep.subr.bf16.mxu0 %v3653
    %5093 = vmatpush1.bf16.msra.mxu0 %v3652
    %5094 = vmatprep.subr.bf16.mxu0 %v3657
    %5095 = vmatpush1.bf16.msra.mxu0 %v3656
    %5096 = vmatprep.subr.bf16.mxu0 %v3661
    %5097 = vmatpush1.bf16.msra.mxu0 %v3660
    %5098 = vmatprep.subr.bf16.mxu0 %v3665
    %5099 = vmatpush1.bf16.msra.mxu0 %v3664
    %5100 = vmatprep.subr.bf16.mxu0 %v3669
    %5101 = vmatpush1.bf16.msra.mxu0 %v3668
    %5102 = vmatprep.subr.bf16.mxu0 %v3673
    %5103 = vmatpush1.bf16.msra.mxu0 %v3672
    %5104 = vmatprep.subr.bf16.mxu0 %v3677
    %5105 = vmatpush1.bf16.msra.mxu0 %v3676
    %5106 = vmatprep.subr.bf16.mxu0 %v3681
    %5107 = vmatpush1.bf16.msra.mxu0 %v3680
    %5108 = vmatprep.subr.bf16.mxu0 %v3685
    %5109 = vmatpush1.bf16.msra.mxu0 %v3684
    %5110 = vmatprep.subr.bf16.mxu0 %v3689
    %5111 = vmatpush1.bf16.msra.mxu0 %v3688
    %5112 = vmatprep.mubr.bf16.mxu0 %v1029
    %5113 = vmatmul.mubr.bf16.gmra.mrb[0].mxu0 %v1028
    %v5114 = vpop.f32.mrb[0].mxu0
    %v5115 = vadd.f32 %v5072, %v5114
    %v5116 = vpop.f32.mrb[0].mxu0
    %v5117 = vadd.f32 %v5074, %v5116
    %v5118 = vpop.f32.mrb[0].mxu0
    %v5119 = vadd.f32 %v5076, %v5118
    %v5120 = vpop.f32.mrb[0].mxu0
    %v5121 = vadd.f32 %v5078, %v5120
    %5122 = vdwg.mxu0
    %5123 = vmatprep.subr.bf16.mxu0 %v3693
    %5124 = vmatpush1.bf16.msra.mxu0 %v3692
    %5125 = vmatprep.subr.bf16.mxu0 %v3697
    %5126 = vmatpush1.bf16.msra.mxu0 %v3696
    %5127 = vmatprep.subr.bf16.mxu0 %v3701
    %5128 = vmatpush1.bf16.msra.mxu0 %v3700
    %5129 = vmatprep.subr.bf16.mxu0 %v3705
    %5130 = vmatpush1.bf16.msra.mxu0 %v3704
    %5131 = vmatprep.subr.bf16.mxu0 %v3709
    %5132 = vmatpush1.bf16.msra.mxu0 %v3708
    %5133 = vmatprep.subr.bf16.mxu0 %v3713
    %5134 = vmatpush1.bf16.msra.mxu0 %v3712
    %5135 = vmatprep.subr.bf16.mxu0 %v3717
    %5136 = vmatpush1.bf16.msra.mxu0 %v3716
    %5137 = vmatprep.subr.bf16.mxu0 %v3721
    %5138 = vmatpush1.bf16.msra.mxu0 %v3720
    %5139 = vmatprep.subr.bf16.mxu0 %v3725
    %5140 = vmatpush1.bf16.msra.mxu0 %v3724
    %5141 = vmatprep.subr.bf16.mxu0 %v3729
    %5142 = vmatpush1.bf16.msra.mxu0 %v3728
    %5143 = vmatprep.subr.bf16.mxu0 %v3733
    %5144 = vmatpush1.bf16.msra.mxu0 %v3732
    %5145 = vmatprep.subr.bf16.mxu0 %v3737
    %5146 = vmatpush1.bf16.msra.mxu0 %v3736
    %5147 = vmatprep.subr.bf16.mxu0 %v3741
    %5148 = vmatpush1.bf16.msra.mxu0 %v3740
    %5149 = vmatprep.subr.bf16.mxu0 %v3745
    %5150 = vmatpush1.bf16.msra.mxu0 %v3744
    %5151 = vmatprep.subr.bf16.mxu0 %v3749
    %5152 = vmatpush1.bf16.msra.mxu0 %v3748
    %5153 = vmatprep.subr.bf16.mxu0 %v3753
    %5154 = vmatpush1.bf16.msra.mxu0 %v3752
    %5155 = vmatprep.mubr.bf16.mxu0 %v1031
    %5156 = vmatmul.mubr.bf16.gmra.mrb[0].mxu0 %v1030
    %v5157 = vpop.f32.mrb[0].mxu0
    %v5158 = vadd.f32 %v5115, %v5157
    %v5159 = vpop.f32.mrb[0].mxu0
    %v5160 = vadd.f32 %v5117, %v5159
    %v5161 = vpop.f32.mrb[0].mxu0
    %v5162 = vadd.f32 %v5119, %v5161
    %v5163 = vpop.f32.mrb[0].mxu0
    %v5164 = vadd.f32 %v5121, %v5163
    %5165 = vdwg.mxu0
    %5166 = vmatprep.subr.bf16.mxu0 %v3757
    %5167 = vmatpush1.bf16.msra.mxu0 %v3756
    %5168 = vmatprep.subr.bf16.mxu0 %v3761
    %5169 = vmatpush1.bf16.msra.mxu0 %v3760
    %5170 = vmatprep.subr.bf16.mxu0 %v3765
    %5171 = vmatpush1.bf16.msra.mxu0 %v3764
    %5172 = vmatprep.subr.bf16.mxu0 %v3769
    %5173 = vmatpush1.bf16.msra.mxu0 %v3768
    %5174 = vmatprep.subr.bf16.mxu0 %v3773
    %5175 = vmatpush1.bf16.msra.mxu0 %v3772
    %5176 = vmatprep.subr.bf16.mxu0 %v3777
    %5177 = vmatpush1.bf16.msra.mxu0 %v3776
    %5178 = vmatprep.subr.bf16.mxu0 %v3781
    %5179 = vmatpush1.bf16.msra.mxu0 %v3780
    %5180 = vmatprep.subr.bf16.mxu0 %v3785
    %5181 = vmatpush1.bf16.msra.mxu0 %v3784
    %5182 = vmatprep.subr.bf16.mxu0 %v3789
    %5183 = vmatpush1.bf16.msra.mxu0 %v3788
    %5184 = vmatprep.subr.bf16.mxu0 %v3793
    %5185 = vmatpush1.bf16.msra.mxu0 %v3792
    %5186 = vmatprep.subr.bf16.mxu0 %v3797
    %5187 = vmatpush1.bf16.msra.mxu0 %v3796
    %5188 = vmatprep.subr.bf16.mxu0 %v3801
    %5189 = vmatpush1.bf16.msra.mxu0 %v3800
    %5190 = vmatprep.subr.bf16.mxu0 %v3805
    %5191 = vmatpush1.bf16.msra.mxu0 %v3804
    %5192 = vmatprep.subr.bf16.mxu0 %v3809
    %5193 = vmatpush1.bf16.msra.mxu0 %v3808
    %5194 = vmatprep.subr.bf16.mxu0 %v3813
    %5195 = vmatpush1.bf16.msra.mxu0 %v3812
    %5196 = vmatprep.subr.bf16.mxu0 %v3817
    %5197 = vmatpush1.bf16.msra.mxu0 %v3816
    %5198 = vmatprep.mubr.bf16.mxu0 %v1033
    %5199 = vmatmul.mubr.bf16.gmra.mrb[0].mxu0 %v1032
    %v5200 = vpop.f32.mrb[0].mxu0
    %v5201 = vadd.f32 %v5158, %v5200
    %v5202 = vpop.f32.mrb[0].mxu0
    %v5203 = vadd.f32 %v5160, %v5202
    %v5204 = vpop.f32.mrb[0].mxu0
    %v5205 = vadd.f32 %v5162, %v5204
    %v5206 = vpop.f32.mrb[0].mxu0
    %v5207 = vadd.f32 %v5164, %v5206
    %5208 = vdwg.mxu0
    %5209 = vmatprep.subr.bf16.mxu0 %v3821
    %5210 = vmatpush1.bf16.msra.mxu0 %v3820
    %5211 = vmatprep.subr.bf16.mxu0 %v3825
    %5212 = vmatpush1.bf16.msra.mxu0 %v3824
    %5213 = vmatprep.subr.bf16.mxu0 %v3829
    %5214 = vmatpush1.bf16.msra.mxu0 %v3828
    %5215 = vmatprep.subr.bf16.mxu0 %v3833
    %5216 = vmatpush1.bf16.msra.mxu0 %v3832
    %5217 = vmatprep.subr.bf16.mxu0 %v3837
    %5218 = vmatpush1.bf16.msra.mxu0 %v3836
    %5219 = vmatprep.subr.bf16.mxu0 %v3841
    %5220 = vmatpush1.bf16.msra.mxu0 %v3840
    %5221 = vmatprep.subr.bf16.mxu0 %v3845
    %5222 = vmatpush1.bf16.msra.mxu0 %v3844
    %5223 = vmatprep.subr.bf16.mxu0 %v3849
    %5224 = vmatpush1.bf16.msra.mxu0 %v3848
    %5225 = vmatprep.subr.bf16.mxu0 %v3853
    %5226 = vmatpush1.bf16.msra.mxu0 %v3852
    %5227 = vmatprep.subr.bf16.mxu0 %v3857
    %5228 = vmatpush1.bf16.msra.mxu0 %v3856
    %5229 = vmatprep.subr.bf16.mxu0 %v3861
    %5230 = vmatpush1.bf16.msra.mxu0 %v3860
    %5231 = vmatprep.subr.bf16.mxu0 %v3865
    %5232 = vmatpush1.bf16.msra.mxu0 %v3864
    %5233 = vmatprep.subr.bf16.mxu0 %v3869
    %5234 = vmatpush1.bf16.msra.mxu0 %v3868
    %5235 = vmatprep.subr.bf16.mxu0 %v3873
    %5236 = vmatpush1.bf16.msra.mxu0 %v3872
    %5237 = vmatprep.subr.bf16.mxu0 %v3877
    %5238 = vmatpush1.bf16.msra.mxu0 %v3876
    %5239 = vmatprep.subr.bf16.mxu0 %v3881
    %5240 = vmatpush1.bf16.msra.mxu0 %v3880
    %5241 = vmatprep.mubr.bf16.mxu0 %v1035
    %5242 = vmatmul.mubr.bf16.gmra.mrb[0].mxu0 %v1034
    %v5243 = vpop.f32.mrb[0].mxu0
    %v5244 = vadd.f32 %v5201, %v5243
    %v5245 = vpop.f32.mrb[0].mxu0
    %v5246 = vadd.f32 %v5203, %v5245
    %v5247 = vpop.f32.mrb[0].mxu0
    %v5248 = vadd.f32 %v5205, %v5247
    %v5249 = vpop.f32.mrb[0].mxu0
    %v5250 = vadd.f32 %v5207, %v5249
    %5251 = vdwg.mxu0
    %5252 = vmatprep.subr.bf16.mxu0 %v3885
    %5253 = vmatpush1.bf16.msra.mxu0 %v3884
    %5254 = vmatprep.subr.bf16.mxu0 %v3889
    %5255 = vmatpush1.bf16.msra.mxu0 %v3888
    %5256 = vmatprep.subr.bf16.mxu0 %v3893
    %5257 = vmatpush1.bf16.msra.mxu0 %v3892
    %5258 = vmatprep.subr.bf16.mxu0 %v3897
    %5259 = vmatpush1.bf16.msra.mxu0 %v3896
    %5260 = vmatprep.subr.bf16.mxu0 %v3901
    %5261 = vmatpush1.bf16.msra.mxu0 %v3900
    %5262 = vmatprep.subr.bf16.mxu0 %v3905
    %5263 = vmatpush1.bf16.msra.mxu0 %v3904
    %5264 = vmatprep.subr.bf16.mxu0 %v3909
    %5265 = vmatpush1.bf16.msra.mxu0 %v3908
    %5266 = vmatprep.subr.bf16.mxu0 %v3913
    %5267 = vmatpush1.bf16.msra.mxu0 %v3912
    %5268 = vmatprep.subr.bf16.mxu0 %v3917
    %5269 = vmatpush1.bf16.msra.mxu0 %v3916
    %5270 = vmatprep.subr.bf16.mxu0 %v3921
    %5271 = vmatpush1.bf16.msra.mxu0 %v3920
    %5272 = vmatprep.subr.bf16.mxu0 %v3925
    %5273 = vmatpush1.bf16.msra.mxu0 %v3924
    %5274 = vmatprep.subr.bf16.mxu0 %v3929
    %5275 = vmatpush1.bf16.msra.mxu0 %v3928
    %5276 = vmatprep.subr.bf16.mxu0 %v3933
    %5277 = vmatpush1.bf16.msra.mxu0 %v3932
    %5278 = vmatprep.subr.bf16.mxu0 %v3937
    %5279 = vmatpush1.bf16.msra.mxu0 %v3936
    %5280 = vmatprep.subr.bf16.mxu0 %v3941
    %5281 = vmatpush1.bf16.msra.mxu0 %v3940
    %5282 = vmatprep.subr.bf16.mxu0 %v3945
    %5283 = vmatpush1.bf16.msra.mxu0 %v3944
    %5284 = vmatprep.mubr.bf16.mxu0 %v1037
    %5285 = vmatmul.mubr.bf16.gmra.mrb[0].mxu0 %v1036
    %v5286 = vpop.f32.mrb[0].mxu0
    %v5287 = vadd.f32 %v5244, %v5286
    %v5288 = vpop.f32.mrb[0].mxu0
    %v5289 = vadd.f32 %v5246, %v5288
    %v5290 = vpop.f32.mrb[0].mxu0
    %v5291 = vadd.f32 %v5248, %v5290
    %v5292 = vpop.f32.mrb[0].mxu0
    %v5293 = vadd.f32 %v5250, %v5292
    %5294 = vdwg.mxu0
    %5295 = vmatprep.subr.bf16.mxu0 %v3949
    %5296 = vmatpush1.bf16.msra.mxu0 %v3948
    %5297 = vmatprep.subr.bf16.mxu0 %v3953
    %5298 = vmatpush1.bf16.msra.mxu0 %v3952
    %5299 = vmatprep.subr.bf16.mxu0 %v3957
    %5300 = vmatpush1.bf16.msra.mxu0 %v3956
    %5301 = vmatprep.subr.bf16.mxu0 %v3961
    %5302 = vmatpush1.bf16.msra.mxu0 %v3960
    %5303 = vmatprep.subr.bf16.mxu0 %v3965
    %5304 = vmatpush1.bf16.msra.mxu0 %v3964
    %5305 = vmatprep.subr.bf16.mxu0 %v3969
    %5306 = vmatpush1.bf16.msra.mxu0 %v3968
    %5307 = vmatprep.subr.bf16.mxu0 %v3973
    %5308 = vmatpush1.bf16.msra.mxu0 %v3972
    %5309 = vmatprep.subr.bf16.mxu0 %v3977
    %5310 = vmatpush1.bf16.msra.mxu0 %v3976
    %5311 = vmatprep.subr.bf16.mxu0 %v3981
    %5312 = vmatpush1.bf16.msra.mxu0 %v3980
    %5313 = vmatprep.subr.bf16.mxu0 %v3985
    %5314 = vmatpush1.bf16.msra.mxu0 %v3984
    %5315 = vmatprep.subr.bf16.mxu0 %v3989
    %5316 = vmatpush1.bf16.msra.mxu0 %v3988
    %5317 = vmatprep.subr.bf16.mxu0 %v3993
    %5318 = vmatpush1.bf16.msra.mxu0 %v3992
    %5319 = vmatprep.subr.bf16.mxu0 %v3997
    %5320 = vmatpush1.bf16.msra.mxu0 %v3996
    %5321 = vmatprep.subr.bf16.mxu0 %v4001
    %5322 = vmatpush1.bf16.msra.mxu0 %v4000
    %5323 = vmatprep.subr.bf16.mxu0 %v4005
    %5324 = vmatpush1.bf16.msra.mxu0 %v4004
    %5325 = vmatprep.subr.bf16.mxu0 %v4009
    %5326 = vmatpush1.bf16.msra.mxu0 %v4008
    %5327 = vmatprep.mubr.bf16.mxu0 %v1039
    %5328 = vmatmul.mubr.bf16.gmra.mrb[0].mxu0 %v1038
    %v5329 = vpop.f32.mrb[0].mxu0
    %v5330 = vadd.f32 %v5287, %v5329
    %v5331 = vpop.f32.mrb[0].mxu0
    %v5332 = vadd.f32 %v5289, %v5331
    %v5333 = vpop.f32.mrb[0].mxu0
    %v5334 = vadd.f32 %v5291, %v5333
    %v5335 = vpop.f32.mrb[0].mxu0
    %v5336 = vadd.f32 %v5293, %v5335
    %5337 = vdwg.mxu0
    %5338 = vmatprep.subr.bf16.mxu0 %v4013
    %5339 = vmatpush1.bf16.msra.mxu0 %v4012
    %5340 = vmatprep.subr.bf16.mxu0 %v4017
    %5341 = vmatpush1.bf16.msra.mxu0 %v4016
    %5342 = vmatprep.subr.bf16.mxu0 %v4021
    %5343 = vmatpush1.bf16.msra.mxu0 %v4020
    %5344 = vmatprep.subr.bf16.mxu0 %v4025
    %5345 = vmatpush1.bf16.msra.mxu0 %v4024
    %5346 = vmatprep.subr.bf16.mxu0 %v4029
    %5347 = vmatpush1.bf16.msra.mxu0 %v4028
    %5348 = vmatprep.subr.bf16.mxu0 %v4033
    %5349 = vmatpush1.bf16.msra.mxu0 %v4032
    %5350 = vmatprep.subr.bf16.mxu0 %v4037
    %5351 = vmatpush1.bf16.msra.mxu0 %v4036
    %5352 = vmatprep.subr.bf16.mxu0 %v4041
    %5353 = vmatpush1.bf16.msra.mxu0 %v4040
    %5354 = vmatprep.subr.bf16.mxu0 %v4045
    %5355 = vmatpush1.bf16.msra.mxu0 %v4044
    %5356 = vmatprep.subr.bf16.mxu0 %v4049
    %5357 = vmatpush1.bf16.msra.mxu0 %v4048
    %5358 = vmatprep.subr.bf16.mxu0 %v4053
    %5359 = vmatpush1.bf16.msra.mxu0 %v4052
    %5360 = vmatprep.subr.bf16.mxu0 %v4057
    %5361 = vmatpush1.bf16.msra.mxu0 %v4056
    %5362 = vmatprep.subr.bf16.mxu0 %v4061
    %5363 = vmatpush1.bf16.msra.mxu0 %v4060
    %5364 = vmatprep.subr.bf16.mxu0 %v4065
    %5365 = vmatpush1.bf16.msra.mxu0 %v4064
    %5366 = vmatprep.subr.bf16.mxu0 %v4069
    %5367 = vmatpush1.bf16.msra.mxu0 %v4068
    %5368 = vmatprep.subr.bf16.mxu0 %v4073
    %5369 = vmatpush1.bf16.msra.mxu0 %v4072
    %5370 = vmatprep.mubr.bf16.mxu0 %v1041
    %5371 = vmatmul.mubr.bf16.gmra.mrb[0].mxu0 %v1040
    %v5372 = vpop.f32.mrb[0].mxu0
    %v5373 = vadd.f32 %v5330, %v5372
    %v5374 = vpop.f32.mrb[0].mxu0
    %v5375 = vadd.f32 %v5332, %v5374
    %v5376 = vpop.f32.mrb[0].mxu0
    %v5377 = vadd.f32 %v5334, %v5376
    %v5378 = vpop.f32.mrb[0].mxu0
    %v5379 = vadd.f32 %v5336, %v5378
    %5380 = vdwg.mxu0
    %5381 = vmatprep.subr.bf16.mxu0 %v4077
    %5382 = vmatpush1.bf16.msra.mxu0 %v4076
    %5383 = vmatprep.subr.bf16.mxu0 %v4081
    %5384 = vmatpush1.bf16.msra.mxu0 %v4080
    %5385 = vmatprep.subr.bf16.mxu0 %v4085
    %5386 = vmatpush1.bf16.msra.mxu0 %v4084
    %5387 = vmatprep.subr.bf16.mxu0 %v4089
    %5388 = vmatpush1.bf16.msra.mxu0 %v4088
    %5389 = vmatprep.subr.bf16.mxu0 %v4093
    %5390 = vmatpush1.bf16.msra.mxu0 %v4092
    %5391 = vmatprep.subr.bf16.mxu0 %v4097
    %5392 = vmatpush1.bf16.msra.mxu0 %v4096
    %5393 = vmatprep.subr.bf16.mxu0 %v4101
    %5394 = vmatpush1.bf16.msra.mxu0 %v4100
    %5395 = vmatprep.subr.bf16.mxu0 %v4105
    %5396 = vmatpush1.bf16.msra.mxu0 %v4104
    %5397 = vmatprep.subr.bf16.mxu0 %v4109
    %5398 = vmatpush1.bf16.msra.mxu0 %v4108
    %5399 = vmatprep.subr.bf16.mxu0 %v4113
    %5400 = vmatpush1.bf16.msra.mxu0 %v4112
    %5401 = vmatprep.subr.bf16.mxu0 %v4117
    %5402 = vmatpush1.bf16.msra.mxu0 %v4116
    %5403 = vmatprep.subr.bf16.mxu0 %v4121
    %5404 = vmatpush1.bf16.msra.mxu0 %v4120
    %5405 = vmatprep.subr.bf16.mxu0 %v4125
    %5406 = vmatpush1.bf16.msra.mxu0 %v4124
    %5407 = vmatprep.subr.bf16.mxu0 %v4129
    %5408 = vmatpush1.bf16.msra.mxu0 %v4128
    %5409 = vmatprep.subr.bf16.mxu0 %v4133
    %5410 = vmatpush1.bf16.msra.mxu0 %v4132
    %5411 = vmatprep.subr.bf16.mxu0 %v4137
    %5412 = vmatpush1.bf16.msra.mxu0 %v4136
    %5413 = vmatprep.mubr.bf16.mxu0 %v1043
    %5414 = vmatmul.mubr.bf16.gmra.mrb[0].mxu0 %v1042
    %v5415 = vpop.f32.mrb[0].mxu0
    %v5416 = vadd.f32 %v5373, %v5415
    %v5417 = vpop.f32.mrb[0].mxu0
    %v5418 = vadd.f32 %v5375, %v5417
    %v5419 = vpop.f32.mrb[0].mxu0
    %v5420 = vadd.f32 %v5377, %v5419
    %v5421 = vpop.f32.mrb[0].mxu0
    %v5422 = vadd.f32 %v5379, %v5421
    %5423 = vdwg.mxu0
    %5424 = vmatprep.subr.bf16.mxu0 %v3375
    %5425 = vmatpush1.bf16.msra.mxu0 %v3374
    %5426 = vmatprep.subr.bf16.mxu0 %v3379
    %5427 = vmatpush1.bf16.msra.mxu0 %v3378
    %5428 = vmatprep.subr.bf16.mxu0 %v3383
    %5429 = vmatpush1.bf16.msra.mxu0 %v3382
    %5430 = vmatprep.subr.bf16.mxu0 %v3387
    %5431 = vmatpush1.bf16.msra.mxu0 %v3386
    %5432 = vmatprep.subr.bf16.mxu0 %v3391
    %5433 = vmatpush1.bf16.msra.mxu0 %v3390
    %5434 = vmatprep.subr.bf16.mxu0 %v3395
    %5435 = vmatpush1.bf16.msra.mxu0 %v3394
    %5436 = vmatprep.subr.bf16.mxu0 %v3399
    %5437 = vmatpush1.bf16.msra.mxu0 %v3398
    %5438 = vmatprep.subr.bf16.mxu0 %v3403
    %5439 = vmatpush1.bf16.msra.mxu0 %v3402
    %5440 = vmatprep.subr.bf16.mxu0 %v3407
    %5441 = vmatpush1.bf16.msra.mxu0 %v3406
    %5442 = vmatprep.subr.bf16.mxu0 %v3411
    %5443 = vmatpush1.bf16.msra.mxu0 %v3410
    %5444 = vmatprep.subr.bf16.mxu0 %v3415
    %5445 = vmatpush1.bf16.msra.mxu0 %v3414
    %5446 = vmatprep.subr.bf16.mxu0 %v3419
    %5447 = vmatpush1.bf16.msra.mxu0 %v3418
    %5448 = vmatprep.subr.bf16.mxu0 %v3423
    %5449 = vmatpush1.bf16.msra.mxu0 %v3422
    %5450 = vmatprep.subr.bf16.mxu0 %v3427
    %5451 = vmatpush1.bf16.msra.mxu0 %v3426
    %5452 = vmatprep.subr.bf16.mxu0 %v3431
    %5453 = vmatpush1.bf16.msra.mxu0 %v3430
    %5454 = vmatprep.subr.bf16.mxu0 %v3435
    %5455 = vmatpush1.bf16.msra.mxu0 %v3434
    %5456 = vmatprep.mubr.bf16.mxu0 %v1021
    %5457 = vmatmul.mubr.bf16.gmra.mrb[0].mxu0 %v1020
    %v5458 = vpop.f32.mrb[0].mxu0
    %v5459 = vadd.f32 %v939, %v5458
    %v5460 = vpop.f32.mrb[0].mxu0
    %v5461 = vadd.f32 %v943, %v5460
    %v5462 = vpop.f32.mrb[0].mxu0
    %v5463 = vadd.f32 %v939, %v5462
    %v5464 = vpop.f32.mrb[0].mxu0
    %v5465 = vadd.f32 %v943, %v5464
    %5466 = vdwg.mxu0
    %5467 = vmatprep.subr.bf16.mxu0 %v3439
    %5468 = vmatpush1.bf16.msra.mxu0 %v3438
    %5469 = vmatprep.subr.bf16.mxu0 %v3443
    %5470 = vmatpush1.bf16.msra.mxu0 %v3442
    %5471 = vmatprep.subr.bf16.mxu0 %v3447
    %5472 = vmatpush1.bf16.msra.mxu0 %v3446
    %5473 = vmatprep.subr.bf16.mxu0 %v3451
    %5474 = vmatpush1.bf16.msra.mxu0 %v3450
    %5475 = vmatprep.subr.bf16.mxu0 %v3455
    %5476 = vmatpush1.bf16.msra.mxu0 %v3454
    %5477 = vmatprep.subr.bf16.mxu0 %v3459
    %5478 = vmatpush1.bf16.msra.mxu0 %v3458
    %5479 = vmatprep.subr.bf16.mxu0 %v3463
    %5480 = vmatpush1.bf16.msra.mxu0 %v3462
    %5481 = vmatprep.subr.bf16.mxu0 %v3467
    %5482 = vmatpush1.bf16.msra.mxu0 %v3466
    %5483 = vmatprep.subr.bf16.mxu0 %v3471
    %5484 = vmatpush1.bf16.msra.mxu0 %v3470
    %5485 = vmatprep.subr.bf16.mxu0 %v3475
    %5486 = vmatpush1.bf16.msra.mxu0 %v3474
    %5487 = vmatprep.subr.bf16.mxu0 %v3479
    %5488 = vmatpush1.bf16.msra.mxu0 %v3478
    %5489 = vmatprep.subr.bf16.mxu0 %v3483
    %5490 = vmatpush1.bf16.msra.mxu0 %v3482
    %5491 = vmatprep.subr.bf16.mxu0 %v3487
    %5492 = vmatpush1.bf16.msra.mxu0 %v3486
    %5493 = vmatprep.subr.bf16.mxu0 %v3491
    %5494 = vmatpush1.bf16.msra.mxu0 %v3490
    %5495 = vmatprep.subr.bf16.mxu0 %v3495
    %5496 = vmatpush1.bf16.msra.mxu0 %v3494
    %5497 = vmatprep.subr.bf16.mxu0 %v3499
    %5498 = vmatpush1.bf16.msra.mxu0 %v3498
    %5499 = vmatprep.mubr.bf16.mxu0 %v1023
    %5500 = vmatmul.mubr.bf16.gmra.mrb[0].mxu0 %v1022
    %v5501 = vpop.f32.mrb[0].mxu0
    %v5502 = vadd.f32 %v5459, %v5501
    %v5503 = vpop.f32.mrb[0].mxu0
    %v5504 = vadd.f32 %v5461, %v5503
    %v5505 = vpop.f32.mrb[0].mxu0
    %v5506 = vadd.f32 %v5463, %v5505
    %v5507 = vpop.f32.mrb[0].mxu0
    %v5508 = vadd.f32 %v5465, %v5507
    %5509 = vdwg.mxu0
    %5510 = vmatprep.subr.bf16.mxu0 %v3503
    %5511 = vmatpush1.bf16.msra.mxu0 %v3502
    %5512 = vmatprep.subr.bf16.mxu0 %v3507
    %5513 = vmatpush1.bf16.msra.mxu0 %v3506
    %5514 = vmatprep.subr.bf16.mxu0 %v3511
    %5515 = vmatpush1.bf16.msra.mxu0 %v3510
    %5516 = vmatprep.subr.bf16.mxu0 %v3515
    %5517 = vmatpush1.bf16.msra.mxu0 %v3514
    %5518 = vmatprep.subr.bf16.mxu0 %v3519
    %5519 = vmatpush1.bf16.msra.mxu0 %v3518
    %5520 = vmatprep.subr.bf16.mxu0 %v3523
    %5521 = vmatpush1.bf16.msra.mxu0 %v3522
    %5522 = vmatprep.subr.bf16.mxu0 %v3527
    %5523 = vmatpush1.bf16.msra.mxu0 %v3526
    %5524 = vmatprep.subr.bf16.mxu0 %v3531
    %5525 = vmatpush1.bf16.msra.mxu0 %v3530
    %5526 = vmatprep.subr.bf16.mxu0 %v3535
    %5527 = vmatpush1.bf16.msra.mxu0 %v3534
    %5528 = vmatprep.subr.bf16.mxu0 %v3539
    %5529 = vmatpush1.bf16.msra.mxu0 %v3538
    %5530 = vmatprep.subr.bf16.mxu0 %v3543
    %5531 = vmatpush1.bf16.msra.mxu0 %v3542
    %5532 = vmatprep.subr.bf16.mxu0 %v3547
    %5533 = vmatpush1.bf16.msra.mxu0 %v3546
    %5534 = vmatprep.subr.bf16.mxu0 %v3551
    %5535 = vmatpush1.bf16.msra.mxu0 %v3550
    %5536 = vmatprep.subr.bf16.mxu0 %v3555
    %5537 = vmatpush1.bf16.msra.mxu0 %v3554
    %5538 = vmatprep.subr.bf16.mxu0 %v3559
    %5539 = vmatpush1.bf16.msra.mxu0 %v3558
    %5540 = vmatprep.subr.bf16.mxu0 %v3563
    %5541 = vmatpush1.bf16.msra.mxu0 %v3562
    %5542 = vmatprep.mubr.bf16.mxu0 %v1025
    %5543 = vmatmul.mubr.bf16.gmra.mrb[0].mxu0 %v1024
    %v5544 = vpop.f32.mrb[0].mxu0
    %v5545 = vadd.f32 %v5502, %v5544
    %v5546 = vpop.f32.mrb[0].mxu0
    %v5547 = vadd.f32 %v5504, %v5546
    %v5548 = vpop.f32.mrb[0].mxu0
    %v5549 = vadd.f32 %v5506, %v5548
    %v5550 = vpop.f32.mrb[0].mxu0
    %v5551 = vadd.f32 %v5508, %v5550
    %5552 = vdwg.mxu0
    %5553 = vmatprep.subr.bf16.mxu0 %v3567
    %5554 = vmatpush1.bf16.msra.mxu0 %v3566
    %5555 = vmatprep.subr.bf16.mxu0 %v3571
    %5556 = vmatpush1.bf16.msra.mxu0 %v3570
    %5557 = vmatprep.subr.bf16.mxu0 %v3575
    %5558 = vmatpush1.bf16.msra.mxu0 %v3574
    %5559 = vmatprep.subr.bf16.mxu0 %v3579
    %5560 = vmatpush1.bf16.msra.mxu0 %v3578
    %5561 = vmatprep.subr.bf16.mxu0 %v3583
    %5562 = vmatpush1.bf16.msra.mxu0 %v3582
    %5563 = vmatprep.subr.bf16.mxu0 %v3587
    %5564 = vmatpush1.bf16.msra.mxu0 %v3586
    %5565 = vmatprep.subr.bf16.mxu0 %v3591
    %5566 = vmatpush1.bf16.msra.mxu0 %v3590
    %5567 = vmatprep.subr.bf16.mxu0 %v3595
    %5568 = vmatpush1.bf16.msra.mxu0 %v3594
    %5569 = vmatprep.subr.bf16.mxu0 %v3599
    %5570 = vmatpush1.bf16.msra.mxu0 %v3598
    %5571 = vmatprep.subr.bf16.mxu0 %v3603
    %5572 = vmatpush1.bf16.msra.mxu0 %v3602
    %5573 = vmatprep.subr.bf16.mxu0 %v3607
    %5574 = vmatpush1.bf16.msra.mxu0 %v3606
    %5575 = vmatprep.subr.bf16.mxu0 %v3611
    %5576 = vmatpush1.bf16.msra.mxu0 %v3610
    %5577 = vmatprep.subr.bf16.mxu0 %v3615
    %5578 = vmatpush1.bf16.msra.mxu0 %v3614
    %5579 = vmatprep.subr.bf16.mxu0 %v3619
    %5580 = vmatpush1.bf16.msra.mxu0 %v3618
    %5581 = vmatprep.subr.bf16.mxu0 %v3623
    %5582 = vmatpush1.bf16.msra.mxu0 %v3622
    %5583 = vmatprep.subr.bf16.mxu0 %v3627
    %5584 = vmatpush1.bf16.msra.mxu0 %v3626
    %5585 = vmatprep.mubr.bf16.mxu0 %v1027
    %5586 = vmatmul.mubr.bf16.gmra.mrb[0].mxu0 %v1026
    %v5587 = vpop.f32.mrb[0].mxu0
    %v5588 = vadd.f32 %v5545, %v5587
    %v5589 = vpop.f32.mrb[0].mxu0
    %v5590 = vadd.f32 %v5547, %v5589
    %v5591 = vpop.f32.mrb[0].mxu0
    %v5592 = vadd.f32 %v5549, %v5591
    %v5593 = vpop.f32.mrb[0].mxu0
    %v5594 = vadd.f32 %v5551, %v5593
    %5595 = vdwg.mxu0
    %5596 = vmatprep.subr.bf16.mxu0 %v3631
    %5597 = vmatpush1.bf16.msra.mxu0 %v3630
    %5598 = vmatprep.subr.bf16.mxu0 %v3635
    %5599 = vmatpush1.bf16.msra.mxu0 %v3634
    %5600 = vmatprep.subr.bf16.mxu0 %v3639
    %5601 = vmatpush1.bf16.msra.mxu0 %v3638
    %5602 = vmatprep.subr.bf16.mxu0 %v3643
    %5603 = vmatpush1.bf16.msra.mxu0 %v3642
    %5604 = vmatprep.subr.bf16.mxu0 %v3647
    %5605 = vmatpush1.bf16.msra.mxu0 %v3646
    %5606 = vmatprep.subr.bf16.mxu0 %v3651
    %5607 = vmatpush1.bf16.msra.mxu0 %v3650
    %5608 = vmatprep.subr.bf16.mxu0 %v3655
    %5609 = vmatpush1.bf16.msra.mxu0 %v3654
    %5610 = vmatprep.subr.bf16.mxu0 %v3659
    %5611 = vmatpush1.bf16.msra.mxu0 %v3658
    %5612 = vmatprep.subr.bf16.mxu0 %v3663
    %5613 = vmatpush1.bf16.msra.mxu0 %v3662
    %5614 = vmatprep.subr.bf16.mxu0 %v3667
    %5615 = vmatpush1.bf16.msra.mxu0 %v3666
    %5616 = vmatprep.subr.bf16.mxu0 %v3671
    %5617 = vmatpush1.bf16.msra.mxu0 %v3670
    %5618 = vmatprep.subr.bf16.mxu0 %v3675
    %5619 = vmatpush1.bf16.msra.mxu0 %v3674
    %5620 = vmatprep.subr.bf16.mxu0 %v3679
    %5621 = vmatpush1.bf16.msra.mxu0 %v3678
    %5622 = vmatprep.subr.bf16.mxu0 %v3683
    %5623 = vmatpush1.bf16.msra.mxu0 %v3682
    %5624 = vmatprep.subr.bf16.mxu0 %v3687
    %5625 = vmatpush1.bf16.msra.mxu0 %v3686
    %5626 = vmatprep.subr.bf16.mxu0 %v3691
    %5627 = vmatpush1.bf16.msra.mxu0 %v3690
    %5628 = vmatprep.mubr.bf16.mxu0 %v1029
    %5629 = vmatmul.mubr.bf16.gmra.mrb[0].mxu0 %v1028
    %v5630 = vpop.f32.mrb[0].mxu0
    %v5631 = vadd.f32 %v5588, %v5630
    %v5632 = vpop.f32.mrb[0].mxu0
    %v5633 = vadd.f32 %v5590, %v5632
    %v5634 = vpop.f32.mrb[0].mxu0
    %v5635 = vadd.f32 %v5592, %v5634
    %v5636 = vpop.f32.mrb[0].mxu0
    %v5637 = vadd.f32 %v5594, %v5636
    %5638 = vdwg.mxu0
    %5639 = vmatprep.subr.bf16.mxu0 %v3695
    %5640 = vmatpush1.bf16.msra.mxu0 %v3694
    %5641 = vmatprep.subr.bf16.mxu0 %v3699
    %5642 = vmatpush1.bf16.msra.mxu0 %v3698
    %5643 = vmatprep.subr.bf16.mxu0 %v3703
    %5644 = vmatpush1.bf16.msra.mxu0 %v3702
    %5645 = vmatprep.subr.bf16.mxu0 %v3707
    %5646 = vmatpush1.bf16.msra.mxu0 %v3706
    %5647 = vmatprep.subr.bf16.mxu0 %v3711
    %5648 = vmatpush1.bf16.msra.mxu0 %v3710
    %5649 = vmatprep.subr.bf16.mxu0 %v3715
    %5650 = vmatpush1.bf16.msra.mxu0 %v3714
    %5651 = vmatprep.subr.bf16.mxu0 %v3719
    %5652 = vmatpush1.bf16.msra.mxu0 %v3718
    %5653 = vmatprep.subr.bf16.mxu0 %v3723
    %5654 = vmatpush1.bf16.msra.mxu0 %v3722
    %5655 = vmatprep.subr.bf16.mxu0 %v3727
    %5656 = vmatpush1.bf16.msra.mxu0 %v3726
    %5657 = vmatprep.subr.bf16.mxu0 %v3731
    %5658 = vmatpush1.bf16.msra.mxu0 %v3730
    %5659 = vmatprep.subr.bf16.mxu0 %v3735
    %5660 = vmatpush1.bf16.msra.mxu0 %v3734
    %5661 = vmatprep.subr.bf16.mxu0 %v3739
    %5662 = vmatpush1.bf16.msra.mxu0 %v3738
    %5663 = vmatprep.subr.bf16.mxu0 %v3743
    %5664 = vmatpush1.bf16.msra.mxu0 %v3742
    %5665 = vmatprep.subr.bf16.mxu0 %v3747
    %5666 = vmatpush1.bf16.msra.mxu0 %v3746
    %5667 = vmatprep.subr.bf16.mxu0 %v3751
    %5668 = vmatpush1.bf16.msra.mxu0 %v3750
    %5669 = vmatprep.subr.bf16.mxu0 %v3755
    %5670 = vmatpush1.bf16.msra.mxu0 %v3754
    %5671 = vmatprep.mubr.bf16.mxu0 %v1031
    %5672 = vmatmul.mubr.bf16.gmra.mrb[0].mxu0 %v1030
    %v5673 = vpop.f32.mrb[0].mxu0
    %v5674 = vadd.f32 %v5631, %v5673
    %v5675 = vpop.f32.mrb[0].mxu0
    %v5676 = vadd.f32 %v5633, %v5675
    %v5677 = vpop.f32.mrb[0].mxu0
    %v5678 = vadd.f32 %v5635, %v5677
    %v5679 = vpop.f32.mrb[0].mxu0
    %v5680 = vadd.f32 %v5637, %v5679
    %5681 = vdwg.mxu0
    %5682 = vmatprep.subr.bf16.mxu0 %v3759
    %5683 = vmatpush1.bf16.msra.mxu0 %v3758
    %5684 = vmatprep.subr.bf16.mxu0 %v3763
    %5685 = vmatpush1.bf16.msra.mxu0 %v3762
    %5686 = vmatprep.subr.bf16.mxu0 %v3767
    %5687 = vmatpush1.bf16.msra.mxu0 %v3766
    %5688 = vmatprep.subr.bf16.mxu0 %v3771
    %5689 = vmatpush1.bf16.msra.mxu0 %v3770
    %5690 = vmatprep.subr.bf16.mxu0 %v3775
    %5691 = vmatpush1.bf16.msra.mxu0 %v3774
    %5692 = vmatprep.subr.bf16.mxu0 %v3779
    %5693 = vmatpush1.bf16.msra.mxu0 %v3778
    %5694 = vmatprep.subr.bf16.mxu0 %v3783
    %5695 = vmatpush1.bf16.msra.mxu0 %v3782
    %5696 = vmatprep.subr.bf16.mxu0 %v3787
    %5697 = vmatpush1.bf16.msra.mxu0 %v3786
    %5698 = vmatprep.subr.bf16.mxu0 %v3791
    %5699 = vmatpush1.bf16.msra.mxu0 %v3790
    %5700 = vmatprep.subr.bf16.mxu0 %v3795
    %5701 = vmatpush1.bf16.msra.mxu0 %v3794
    %5702 = vmatprep.subr.bf16.mxu0 %v3799
    %5703 = vmatpush1.bf16.msra.mxu0 %v3798
    %5704 = vmatprep.subr.bf16.mxu0 %v3803
    %5705 = vmatpush1.bf16.msra.mxu0 %v3802
    %5706 = vmatprep.subr.bf16.mxu0 %v3807
    %5707 = vmatpush1.bf16.msra.mxu0 %v3806
    %5708 = vmatprep.subr.bf16.mxu0 %v3811
    %5709 = vmatpush1.bf16.msra.mxu0 %v3810
    %5710 = vmatprep.subr.bf16.mxu0 %v3815
    %5711 = vmatpush1.bf16.msra.mxu0 %v3814
    %5712 = vmatprep.subr.bf16.mxu0 %v3819
    %5713 = vmatpush1.bf16.msra.mxu0 %v3818
    %5714 = vmatprep.mubr.bf16.mxu0 %v1033
    %5715 = vmatmul.mubr.bf16.gmra.mrb[0].mxu0 %v1032
    %v5716 = vpop.f32.mrb[0].mxu0
    %v5717 = vadd.f32 %v5674, %v5716
    %v5718 = vpop.f32.mrb[0].mxu0
    %v5719 = vadd.f32 %v5676, %v5718
    %v5720 = vpop.f32.mrb[0].mxu0
    %v5721 = vadd.f32 %v5678, %v5720
    %v5722 = vpop.f32.mrb[0].mxu0
    %v5723 = vadd.f32 %v5680, %v5722
    %5724 = vdwg.mxu0
    %5725 = vmatprep.subr.bf16.mxu0 %v3823
    %5726 = vmatpush1.bf16.msra.mxu0 %v3822
    %5727 = vmatprep.subr.bf16.mxu0 %v3827
    %5728 = vmatpush1.bf16.msra.mxu0 %v3826
    %5729 = vmatprep.subr.bf16.mxu0 %v3831
    %5730 = vmatpush1.bf16.msra.mxu0 %v3830
    %5731 = vmatprep.subr.bf16.mxu0 %v3835
    %5732 = vmatpush1.bf16.msra.mxu0 %v3834
    %5733 = vmatprep.subr.bf16.mxu0 %v3839
    %5734 = vmatpush1.bf16.msra.mxu0 %v3838
    %5735 = vmatprep.subr.bf16.mxu0 %v3843
    %5736 = vmatpush1.bf16.msra.mxu0 %v3842
    %5737 = vmatprep.subr.bf16.mxu0 %v3847
    %5738 = vmatpush1.bf16.msra.mxu0 %v3846
    %5739 = vmatprep.subr.bf16.mxu0 %v3851
    %5740 = vmatpush1.bf16.msra.mxu0 %v3850
    %5741 = vmatprep.subr.bf16.mxu0 %v3855
    %5742 = vmatpush1.bf16.msra.mxu0 %v3854
    %5743 = vmatprep.subr.bf16.mxu0 %v3859
    %5744 = vmatpush1.bf16.msra.mxu0 %v3858
    %5745 = vmatprep.subr.bf16.mxu0 %v3863
    %5746 = vmatpush1.bf16.msra.mxu0 %v3862
    %5747 = vmatprep.subr.bf16.mxu0 %v3867
    %5748 = vmatpush1.bf16.msra.mxu0 %v3866
    %5749 = vmatprep.subr.bf16.mxu0 %v3871
    %5750 = vmatpush1.bf16.msra.mxu0 %v3870
    %5751 = vmatprep.subr.bf16.mxu0 %v3875
    %5752 = vmatpush1.bf16.msra.mxu0 %v3874
    %5753 = vmatprep.subr.bf16.mxu0 %v3879
    %5754 = vmatpush1.bf16.msra.mxu0 %v3878
    %5755 = vmatprep.subr.bf16.mxu0 %v3883
    %5756 = vmatpush1.bf16.msra.mxu0 %v3882
    %5757 = vmatprep.mubr.bf16.mxu0 %v1035
    %5758 = vmatmul.mubr.bf16.gmra.mrb[0].mxu0 %v1034
    %v5759 = vpop.f32.mrb[0].mxu0
    %v5760 = vadd.f32 %v5717, %v5759
    %v5761 = vpop.f32.mrb[0].mxu0
    %v5762 = vadd.f32 %v5719, %v5761
    %v5763 = vpop.f32.mrb[0].mxu0
    %v5764 = vadd.f32 %v5721, %v5763
    %v5765 = vpop.f32.mrb[0].mxu0
    %v5766 = vadd.f32 %v5723, %v5765
    %5767 = vdwg.mxu0
    %5768 = vmatprep.subr.bf16.mxu0 %v3887
    %5769 = vmatpush1.bf16.msra.mxu0 %v3886
    %5770 = vmatprep.subr.bf16.mxu0 %v3891
    %5771 = vmatpush1.bf16.msra.mxu0 %v3890
    %5772 = vmatprep.subr.bf16.mxu0 %v3895
    %5773 = vmatpush1.bf16.msra.mxu0 %v3894
    %5774 = vmatprep.subr.bf16.mxu0 %v3899
    %5775 = vmatpush1.bf16.msra.mxu0 %v3898
    %5776 = vmatprep.subr.bf16.mxu0 %v3903
    %5777 = vmatpush1.bf16.msra.mxu0 %v3902
    %5778 = vmatprep.subr.bf16.mxu0 %v3907
    %5779 = vmatpush1.bf16.msra.mxu0 %v3906
    %5780 = vmatprep.subr.bf16.mxu0 %v3911
    %5781 = vmatpush1.bf16.msra.mxu0 %v3910
    %5782 = vmatprep.subr.bf16.mxu0 %v3915
    %5783 = vmatpush1.bf16.msra.mxu0 %v3914
    %5784 = vmatprep.subr.bf16.mxu0 %v3919
    %5785 = vmatpush1.bf16.msra.mxu0 %v3918
    %5786 = vmatprep.subr.bf16.mxu0 %v3923
    %5787 = vmatpush1.bf16.msra.mxu0 %v3922
    %5788 = vmatprep.subr.bf16.mxu0 %v3927
    %5789 = vmatpush1.bf16.msra.mxu0 %v3926
    %5790 = vmatprep.subr.bf16.mxu0 %v3931
    %5791 = vmatpush1.bf16.msra.mxu0 %v3930
    %5792 = vmatprep.subr.bf16.mxu0 %v3935
    %5793 = vmatpush1.bf16.msra.mxu0 %v3934
    %5794 = vmatprep.subr.bf16.mxu0 %v3939
    %5795 = vmatpush1.bf16.msra.mxu0 %v3938
    %5796 = vmatprep.subr.bf16.mxu0 %v3943
    %5797 = vmatpush1.bf16.msra.mxu0 %v3942
    %5798 = vmatprep.subr.bf16.mxu0 %v3947
    %5799 = vmatpush1.bf16.msra.mxu0 %v3946
    %5800 = vmatprep.mubr.bf16.mxu0 %v1037
    %5801 = vmatmul.mubr.bf16.gmra.mrb[0].mxu0 %v1036
    %v5802 = vpop.f32.mrb[0].mxu0
    %v5803 = vadd.f32 %v5760, %v5802
    %v5804 = vpop.f32.mrb[0].mxu0
    %v5805 = vadd.f32 %v5762, %v5804
    %v5806 = vpop.f32.mrb[0].mxu0
    %v5807 = vadd.f32 %v5764, %v5806
    %v5808 = vpop.f32.mrb[0].mxu0
    %v5809 = vadd.f32 %v5766, %v5808
    %5810 = vdwg.mxu0
    %5811 = vmatprep.subr.bf16.mxu0 %v3951
    %5812 = vmatpush1.bf16.msra.mxu0 %v3950
    %5813 = vmatprep.subr.bf16.mxu0 %v3955
    %5814 = vmatpush1.bf16.msra.mxu0 %v3954
    %5815 = vmatprep.subr.bf16.mxu0 %v3959
    %5816 = vmatpush1.bf16.msra.mxu0 %v3958
    %5817 = vmatprep.subr.bf16.mxu0 %v3963
    %5818 = vmatpush1.bf16.msra.mxu0 %v3962
    %5819 = vmatprep.subr.bf16.mxu0 %v3967
    %5820 = vmatpush1.bf16.msra.mxu0 %v3966
    %5821 = vmatprep.subr.bf16.mxu0 %v3971
    %5822 = vmatpush1.bf16.msra.mxu0 %v3970
    %5823 = vmatprep.subr.bf16.mxu0 %v3975
    %5824 = vmatpush1.bf16.msra.mxu0 %v3974
    %5825 = vmatprep.subr.bf16.mxu0 %v3979
    %5826 = vmatpush1.bf16.msra.mxu0 %v3978
    %5827 = vmatprep.subr.bf16.mxu0 %v3983
    %5828 = vmatpush1.bf16.msra.mxu0 %v3982
    %5829 = vmatprep.subr.bf16.mxu0 %v3987
    %5830 = vmatpush1.bf16.msra.mxu0 %v3986
    %5831 = vmatprep.subr.bf16.mxu0 %v3991
    %5832 = vmatpush1.bf16.msra.mxu0 %v3990
    %5833 = vmatprep.subr.bf16.mxu0 %v3995
    %5834 = vmatpush1.bf16.msra.mxu0 %v3994
    %5835 = vmatprep.subr.bf16.mxu0 %v3999
    %5836 = vmatpush1.bf16.msra.mxu0 %v3998
    %5837 = vmatprep.subr.bf16.mxu0 %v4003
    %5838 = vmatpush1.bf16.msra.mxu0 %v4002
    %5839 = vmatprep.subr.bf16.mxu0 %v4007
    %5840 = vmatpush1.bf16.msra.mxu0 %v4006
    %5841 = vmatprep.subr.bf16.mxu0 %v4011
    %5842 = vmatpush1.bf16.msra.mxu0 %v4010
    %5843 = vmatprep.mubr.bf16.mxu0 %v1039
    %5844 = vmatmul.mubr.bf16.gmra.mrb[0].mxu0 %v1038
    %v5845 = vpop.f32.mrb[0].mxu0
    %v5846 = vadd.f32 %v5803, %v5845
    %v5847 = vpop.f32.mrb[0].mxu0
    %v5848 = vadd.f32 %v5805, %v5847
    %v5849 = vpop.f32.mrb[0].mxu0
    %v5850 = vadd.f32 %v5807, %v5849
    %v5851 = vpop.f32.mrb[0].mxu0
    %v5852 = vadd.f32 %v5809, %v5851
    %5853 = vdwg.mxu0
    %5854 = vmatprep.subr.bf16.mxu0 %v4015
    %5855 = vmatpush1.bf16.msra.mxu0 %v4014
    %5856 = vmatprep.subr.bf16.mxu0 %v4019
    %5857 = vmatpush1.bf16.msra.mxu0 %v4018
    %5858 = vmatprep.subr.bf16.mxu0 %v4023
    %5859 = vmatpush1.bf16.msra.mxu0 %v4022
    %5860 = vmatprep.subr.bf16.mxu0 %v4027
    %5861 = vmatpush1.bf16.msra.mxu0 %v4026
    %5862 = vmatprep.subr.bf16.mxu0 %v4031
    %5863 = vmatpush1.bf16.msra.mxu0 %v4030
    %5864 = vmatprep.subr.bf16.mxu0 %v4035
    %5865 = vmatpush1.bf16.msra.mxu0 %v4034
    %5866 = vmatprep.subr.bf16.mxu0 %v4039
    %5867 = vmatpush1.bf16.msra.mxu0 %v4038
    %5868 = vmatprep.subr.bf16.mxu0 %v4043
    %5869 = vmatpush1.bf16.msra.mxu0 %v4042
    %5870 = vmatprep.subr.bf16.mxu0 %v4047
    %5871 = vmatpush1.bf16.msra.mxu0 %v4046
    %5872 = vmatprep.subr.bf16.mxu0 %v4051
    %5873 = vmatpush1.bf16.msra.mxu0 %v4050
    %5874 = vmatprep.subr.bf16.mxu0 %v4055
    %5875 = vmatpush1.bf16.msra.mxu0 %v4054
    %5876 = vmatprep.subr.bf16.mxu0 %v4059
    %5877 = vmatpush1.bf16.msra.mxu0 %v4058
    %5878 = vmatprep.subr.bf16.mxu0 %v4063
    %5879 = vmatpush1.bf16.msra.mxu0 %v4062
    %5880 = vmatprep.subr.bf16.mxu0 %v4067
    %5881 = vmatpush1.bf16.msra.mxu0 %v4066
    %5882 = vmatprep.subr.bf16.mxu0 %v4071
    %5883 = vmatpush1.bf16.msra.mxu0 %v4070
    %5884 = vmatprep.subr.bf16.mxu0 %v4075
    %5885 = vmatpush1.bf16.msra.mxu0 %v4074
    %5886 = vmatprep.mubr.bf16.mxu0 %v1041
    %5887 = vmatmul.mubr.bf16.gmra.mrb[0].mxu0 %v1040
    %v5888 = vpop.f32.mrb[0].mxu0
    %v5889 = vadd.f32 %v5846, %v5888
    %v5890 = vpop.f32.mrb[0].mxu0
    %v5891 = vadd.f32 %v5848, %v5890
    %v5892 = vpop.f32.mrb[0].mxu0
    %v5893 = vadd.f32 %v5850, %v5892
    %v5894 = vpop.f32.mrb[0].mxu0
    %v5895 = vadd.f32 %v5852, %v5894
    %5896 = vdwg.mxu0
    %5897 = vmatprep.subr.bf16.mxu0 %v4079
    %5898 = vmatpush1.bf16.msra.mxu0 %v4078
    %5899 = vmatprep.subr.bf16.mxu0 %v4083
    %5900 = vmatpush1.bf16.msra.mxu0 %v4082
    %5901 = vmatprep.subr.bf16.mxu0 %v4087
    %5902 = vmatpush1.bf16.msra.mxu0 %v4086
    %5903 = vmatprep.subr.bf16.mxu0 %v4091
    %5904 = vmatpush1.bf16.msra.mxu0 %v4090
    %5905 = vmatprep.subr.bf16.mxu0 %v4095
    %5906 = vmatpush1.bf16.msra.mxu0 %v4094
    %5907 = vmatprep.subr.bf16.mxu0 %v4099
    %5908 = vmatpush1.bf16.msra.mxu0 %v4098
    %5909 = vmatprep.subr.bf16.mxu0 %v4103
    %5910 = vmatpush1.bf16.msra.mxu0 %v4102
    %5911 = vmatprep.subr.bf16.mxu0 %v4107
    %5912 = vmatpush1.bf16.msra.mxu0 %v4106
    %5913 = vmatprep.subr.bf16.mxu0 %v4111
    %5914 = vmatpush1.bf16.msra.mxu0 %v4110
    %5915 = vmatprep.subr.bf16.mxu0 %v4115
    %5916 = vmatpush1.bf16.msra.mxu0 %v4114
    %5917 = vmatprep.subr.bf16.mxu0 %v4119
    %5918 = vmatpush1.bf16.msra.mxu0 %v4118
    %5919 = vmatprep.subr.bf16.mxu0 %v4123
    %5920 = vmatpush1.bf16.msra.mxu0 %v4122
    %5921 = vmatprep.subr.bf16.mxu0 %v4127
    %5922 = vmatpush1.bf16.msra.mxu0 %v4126
    %5923 = vmatprep.subr.bf16.mxu0 %v4131
    %5924 = vmatpush1.bf16.msra.mxu0 %v4130
    %5925 = vmatprep.subr.bf16.mxu0 %v4135
    %5926 = vmatpush1.bf16.msra.mxu0 %v4134
    %5927 = vmatprep.subr.bf16.mxu0 %v4139
    %5928 = vmatpush1.bf16.msra.mxu0 %v4138
    %5929 = vmatprep.mubr.bf16.mxu0 %v1043
    %5930 = vmatmul.mubr.bf16.gmra.mrb[0].mxu0 %v1042
    %v5931 = vpop.f32.mrb[0].mxu0
    %v5932 = vadd.f32 %v5889, %v5931
    %v5933 = vpop.f32.mrb[0].mxu0
    %v5934 = vadd.f32 %v5891, %v5933
    %v5935 = vpop.f32.mrb[0].mxu0
    %v5936 = vadd.f32 %v5893, %v5935
    %v5937 = vpop.f32.mrb[0].mxu0
    %v5938 = vadd.f32 %v5895, %v5937
    %5939 = vdwg.mxu0
    %v5940 = vmax.f32 %v5416, 0.0
    %v5941 = vmax.f32 %v5418, 0.0
    %v5942 = vmax.f32 %v5932, 0.0
    %v5943 = vmax.f32 %v5934, 0.0
    %v5944 = vmax.f32 %v5420, 0.0
    %v5945 = vmax.f32 %v5422, 0.0
    %v5946 = vmax.f32 %v5936, 0.0
    %v5947 = vmax.f32 %v5938, 0.0
    %v5948 = vpack.c.bf16 %v5944, %v5940
    %v5949 = vpack.c.bf16 %v5945, %v5941
    %v5950 = vpack.c.bf16 %v5946, %v5942
    %v5951 = vpack.c.bf16 %v5947, %v5943
    %v5952 = vld [vmem:[#allocation6] sm:$0xff]
    %v5953 = vld [vmem:[#allocation6 + $0x8] sm:$0xff]
    %v5954 = vld [vmem:[#allocation6 + $0x10] sm:$0xff]
    %v5955 = vld [vmem:[#allocation6 + $0x18] sm:$0xff]
    %v5956 = vld [vmem:[#allocation6 + $0x20] sm:$0xff]
    %v5957 = vld [vmem:[#allocation6 + $0x28] sm:$0xff]
    %v5958 = vld [vmem:[#allocation6 + $0x30] sm:$0xff]
    %v5959 = vld [vmem:[#allocation6 + $0x38] sm:$0xff]
    %v5960 = vld [vmem:[#allocation6 + $0x40] sm:$0xff]
    %v5961 = vld [vmem:[#allocation6 + $0x48] sm:$0xff]
    %v5962 = vld [vmem:[#allocation6 + $0x50] sm:$0xff]
    %v5963 = vld [vmem:[#allocation6 + $0x58] sm:$0xff]
    %v5964 = vld [vmem:[#allocation6 + $0x60] sm:$0xff]
    %v5965 = vld [vmem:[#allocation6 + $0x68] sm:$0xff]
    %v5966 = vld [vmem:[#allocation6 + $0x70] sm:$0xff]
    %v5967 = vld [vmem:[#allocation6 + $0x78] sm:$0xff]
    %v5968 = vld [vmem:[#allocation6 + $0x80] sm:$0xff]
    %v5969 = vld [vmem:[#allocation6 + $0x88] sm:$0xff]
    %v5970 = vld [vmem:[#allocation6 + $0x90] sm:$0xff]
    %v5971 = vld [vmem:[#allocation6 + $0x98] sm:$0xff]
    %v5972 = vld [vmem:[#allocation6 + $0xa0] sm:$0xff]
    %v5973 = vld [vmem:[#allocation6 + $0xa8] sm:$0xff]
    %v5974 = vld [vmem:[#allocation6 + $0xb0] sm:$0xff]
    %v5975 = vld [vmem:[#allocation6 + $0xb8] sm:$0xff]
    %v5976 = vld [vmem:[#allocation6 + $0xc0] sm:$0xff]
    %v5977 = vld [vmem:[#allocation6 + $0xc8] sm:$0xff]
    %v5978 = vld [vmem:[#allocation6 + $0xd0] sm:$0xff]
    %v5979 = vld [vmem:[#allocation6 + $0xd8] sm:$0xff]
    %v5980 = vld [vmem:[#allocation6 + $0xe0] sm:$0xff]
    %v5981 = vld [vmem:[#allocation6 + $0xe8] sm:$0xff]
    %v5982 = vld [vmem:[#allocation6 + $0xf0] sm:$0xff]
    %v5983 = vld [vmem:[#allocation6 + $0xf8] sm:$0xff]
    %v5984 = vld [vmem:[#allocation6 + $0x100] sm:$0xff]
    %v5985 = vld [vmem:[#allocation6 + $0x108] sm:$0xff]
    %v5986 = vld [vmem:[#allocation6 + $0x110] sm:$0xff]
    %v5987 = vld [vmem:[#allocation6 + $0x118] sm:$0xff]
    %v5988 = vld [vmem:[#allocation6 + $0x120] sm:$0xff]
    %v5989 = vld [vmem:[#allocation6 + $0x128] sm:$0xff]
    %v5990 = vld [vmem:[#allocation6 + $0x130] sm:$0xff]
    %v5991 = vld [vmem:[#allocation6 + $0x138] sm:$0xff]
    %v5992 = vld [vmem:[#allocation6 + $0x140] sm:$0xff]
    %v5993 = vld [vmem:[#allocation6 + $0x148] sm:$0xff]
    %v5994 = vld [vmem:[#allocation6 + $0x150] sm:$0xff]
    %v5995 = vld [vmem:[#allocation6 + $0x158] sm:$0xff]
    %v5996 = vld [vmem:[#allocation6 + $0x160] sm:$0xff]
    %v5997 = vld [vmem:[#allocation6 + $0x168] sm:$0xff]
    %v5998 = vld [vmem:[#allocation6 + $0x170] sm:$0xff]
    %v5999 = vld [vmem:[#allocation6 + $0x178] sm:$0xff]
    %v6000 = vld [vmem:[#allocation6 + $0x180] sm:$0xff]
    %v6001 = vld [vmem:[#allocation6 + $0x188] sm:$0xff]
    %v6002 = vld [vmem:[#allocation6 + $0x190] sm:$0xff]
    %v6003 = vld [vmem:[#allocation6 + $0x198] sm:$0xff]
    %v6004 = vld [vmem:[#allocation6 + $0x1a0] sm:$0xff]
    %v6005 = vld [vmem:[#allocation6 + $0x1a8] sm:$0xff]
    %v6006 = vld [vmem:[#allocation6 + $0x1b0] sm:$0xff]
    %v6007 = vld [vmem:[#allocation6 + $0x1b8] sm:$0xff]
    %v6008 = vld [vmem:[#allocation6 + $0x1c0] sm:$0xff]
    %v6009 = vld [vmem:[#allocation6 + $0x1c8] sm:$0xff]
    %v6010 = vld [vmem:[#allocation6 + $0x1d0] sm:$0xff]
    %v6011 = vld [vmem:[#allocation6 + $0x1d8] sm:$0xff]
    %v6012 = vld [vmem:[#allocation6 + $0x1e0] sm:$0xff]
    %v6013 = vld [vmem:[#allocation6 + $0x1e8] sm:$0xff]
    %v6014 = vld [vmem:[#allocation6 + $0x1f0] sm:$0xff]
    %v6015 = vld [vmem:[#allocation6 + $0x1f8] sm:$0xff]
    %v6016 = vld [vmem:[#allocation7] sm:$0x3]
    %v6018 = vlaneseq
    %v6019 = vshrl.u32 %v6018, 7
    %v6020 = vsub.s32 0, %v6019
    %v6021 = vrot.slane %v6016, %v6020
    %v6022 = vlaneseq
    %v6023 = vshrl.u32 %v6022, 7
    %v6024 = vsub.s32 1, %v6023
    %v6025 = vrot.slane %v6016, %v6024
    %v6092 = vunpack.c.l.b16 %v5952
    %v6093 = vunpack.c.h.b16 %v5952
    %v6094 = vunpack.c.l.b16 %v5953
    %v6095 = vunpack.c.h.b16 %v5953
    %v6096 = vunpack.c.l.b16 %v5954
    %v6097 = vunpack.c.h.b16 %v5954
    %v6098 = vunpack.c.l.b16 %v5955
    %v6099 = vunpack.c.h.b16 %v5955
    %v6100 = vunpack.c.l.b16 %v5956
    %v6101 = vunpack.c.h.b16 %v5956
    %v6102 = vunpack.c.l.b16 %v5957
    %v6103 = vunpack.c.h.b16 %v5957
    %v6104 = vunpack.c.l.b16 %v5958
    %v6105 = vunpack.c.h.b16 %v5958
    %v6106 = vunpack.c.l.b16 %v5959
    %v6107 = vunpack.c.h.b16 %v5959
    %v6108 = vunpack.c.l.b16 %v5960
    %v6109 = vunpack.c.h.b16 %v5960
    %v6110 = vunpack.c.l.b16 %v5961
    %v6111 = vunpack.c.h.b16 %v5961
    %v6112 = vunpack.c.l.b16 %v5962
    %v6113 = vunpack.c.h.b16 %v5962
    %v6114 = vunpack.c.l.b16 %v5963
    %v6115 = vunpack.c.h.b16 %v5963
    %v6116 = vunpack.c.l.b16 %v5964
    %v6117 = vunpack.c.h.b16 %v5964
    %v6118 = vunpack.c.l.b16 %v5965
    %v6119 = vunpack.c.h.b16 %v5965
    %v6120 = vunpack.c.l.b16 %v5966
    %v6121 = vunpack.c.h.b16 %v5966
    %v6122 = vunpack.c.l.b16 %v5967
    %v6123 = vunpack.c.h.b16 %v5967
    %v6124 = vunpack.c.l.b16 %v5968
    %v6125 = vunpack.c.h.b16 %v5968
    %v6126 = vunpack.c.l.b16 %v5969
    %v6127 = vunpack.c.h.b16 %v5969
    %v6128 = vunpack.c.l.b16 %v5970
    %v6129 = vunpack.c.h.b16 %v5970
    %v6130 = vunpack.c.l.b16 %v5971
    %v6131 = vunpack.c.h.b16 %v5971
    %v6132 = vunpack.c.l.b16 %v5972
    %v6133 = vunpack.c.h.b16 %v5972
    %v6134 = vunpack.c.l.b16 %v5973
    %v6135 = vunpack.c.h.b16 %v5973
    %v6136 = vunpack.c.l.b16 %v5974
    %v6137 = vunpack.c.h.b16 %v5974
    %v6138 = vunpack.c.l.b16 %v5975
    %v6139 = vunpack.c.h.b16 %v5975
    %v6140 = vunpack.c.l.b16 %v5976
    %v6141 = vunpack.c.h.b16 %v5976
    %v6142 = vunpack.c.l.b16 %v5977
    %v6143 = vunpack.c.h.b16 %v5977
    %v6144 = vunpack.c.l.b16 %v5978
    %v6145 = vunpack.c.h.b16 %v5978
    %v6146 = vunpack.c.l.b16 %v5979
    %v6147 = vunpack.c.h.b16 %v5979
    %v6148 = vunpack.c.l.b16 %v5980
    %v6149 = vunpack.c.h.b16 %v5980
    %v6150 = vunpack.c.l.b16 %v5981
    %v6151 = vunpack.c.h.b16 %v5981
    %v6152 = vunpack.c.l.b16 %v5982
    %v6153 = vunpack.c.h.b16 %v5982
    %v6154 = vunpack.c.l.b16 %v5983
    %v6155 = vunpack.c.h.b16 %v5983
    %v6156 = vunpack.c.l.b16 %v5984
    %v6157 = vunpack.c.h.b16 %v5984
    %v6158 = vunpack.c.l.b16 %v5985
    %v6159 = vunpack.c.h.b16 %v5985
    %v6160 = vunpack.c.l.b16 %v5986
    %v6161 = vunpack.c.h.b16 %v5986
    %v6162 = vunpack.c.l.b16 %v5987
    %v6163 = vunpack.c.h.b16 %v5987
    %v6164 = vunpack.c.l.b16 %v5988
    %v6165 = vunpack.c.h.b16 %v5988
    %v6166 = vunpack.c.l.b16 %v5989
    %v6167 = vunpack.c.h.b16 %v5989
    %v6168 = vunpack.c.l.b16 %v5990
    %v6169 = vunpack.c.h.b16 %v5990
    %v6170 = vunpack.c.l.b16 %v5991
    %v6171 = vunpack.c.h.b16 %v5991
    %v6172 = vunpack.c.l.b16 %v5992
    %v6173 = vunpack.c.h.b16 %v5992
    %v6174 = vunpack.c.l.b16 %v5993
    %v6175 = vunpack.c.h.b16 %v5993
    %v6176 = vunpack.c.l.b16 %v5994
    %v6177 = vunpack.c.h.b16 %v5994
    %v6178 = vunpack.c.l.b16 %v5995
    %v6179 = vunpack.c.h.b16 %v5995
    %v6180 = vunpack.c.l.b16 %v5996
    %v6181 = vunpack.c.h.b16 %v5996
    %v6182 = vunpack.c.l.b16 %v5997
    %v6183 = vunpack.c.h.b16 %v5997
    %v6184 = vunpack.c.l.b16 %v5998
    %v6185 = vunpack.c.h.b16 %v5998
    %v6186 = vunpack.c.l.b16 %v5999
    %v6187 = vunpack.c.h.b16 %v5999
    %v6188 = vunpack.c.l.b16 %v6000
    %v6189 = vunpack.c.h.b16 %v6000
    %v6190 = vunpack.c.l.b16 %v6001
    %v6191 = vunpack.c.h.b16 %v6001
    %v6192 = vunpack.c.l.b16 %v6002
    %v6193 = vunpack.c.h.b16 %v6002
    %v6194 = vunpack.c.l.b16 %v6003
    %v6195 = vunpack.c.h.b16 %v6003
    %v6196 = vunpack.c.l.b16 %v6004
    %v6197 = vunpack.c.h.b16 %v6004
    %v6198 = vunpack.c.l.b16 %v6005
    %v6199 = vunpack.c.h.b16 %v6005
    %v6200 = vunpack.c.l.b16 %v6006
    %v6201 = vunpack.c.h.b16 %v6006
    %v6202 = vunpack.c.l.b16 %v6007
    %v6203 = vunpack.c.h.b16 %v6007
    %v6204 = vunpack.c.l.b16 %v6008
    %v6205 = vunpack.c.h.b16 %v6008
    %v6206 = vunpack.c.l.b16 %v6009
    %v6207 = vunpack.c.h.b16 %v6009
    %v6208 = vunpack.c.l.b16 %v6010
    %v6209 = vunpack.c.h.b16 %v6010
    %v6210 = vunpack.c.l.b16 %v6011
    %v6211 = vunpack.c.h.b16 %v6011
    %v6212 = vunpack.c.l.b16 %v6012
    %v6213 = vunpack.c.h.b16 %v6012
    %v6214 = vunpack.c.l.b16 %v6013
    %v6215 = vunpack.c.h.b16 %v6013
    %v6216 = vunpack.c.l.b16 %v6014
    %v6217 = vunpack.c.h.b16 %v6014
    %v6218 = vunpack.c.l.b16 %v6015
    %v6219 = vunpack.c.h.b16 %v6015
    %v6220 = vpack.c.b16 %v6094, %v6092
    %v6221 = vpack.c.b16 %v6095, %v6093
    %v6222 = vpack.c.b16 %v6098, %v6096
    %v6223 = vpack.c.b16 %v6099, %v6097
    %v6224 = vpack.c.b16 %v6102, %v6100
    %v6225 = vpack.c.b16 %v6103, %v6101
    %v6226 = vpack.c.b16 %v6106, %v6104
    %v6227 = vpack.c.b16 %v6107, %v6105
    %v6228 = vpack.c.b16 %v6110, %v6108
    %v6229 = vpack.c.b16 %v6111, %v6109
    %v6230 = vpack.c.b16 %v6114, %v6112
    %v6231 = vpack.c.b16 %v6115, %v6113
    %v6232 = vpack.c.b16 %v6118, %v6116
    %v6233 = vpack.c.b16 %v6119, %v6117
    %v6234 = vpack.c.b16 %v6122, %v6120
    %v6235 = vpack.c.b16 %v6123, %v6121
    %v6236 = vpack.c.b16 %v6126, %v6124
    %v6237 = vpack.c.b16 %v6127, %v6125
    %v6238 = vpack.c.b16 %v6130, %v6128
    %v6239 = vpack.c.b16 %v6131, %v6129
    %v6240 = vpack.c.b16 %v6134, %v6132
    %v6241 = vpack.c.b16 %v6135, %v6133
    %v6242 = vpack.c.b16 %v6138, %v6136
    %v6243 = vpack.c.b16 %v6139, %v6137
    %v6244 = vpack.c.b16 %v6142, %v6140
    %v6245 = vpack.c.b16 %v6143, %v6141
    %v6246 = vpack.c.b16 %v6146, %v6144
    %v6247 = vpack.c.b16 %v6147, %v6145
    %v6248 = vpack.c.b16 %v6150, %v6148
    %v6249 = vpack.c.b16 %v6151, %v6149
    %v6250 = vpack.c.b16 %v6154, %v6152
    %v6251 = vpack.c.b16 %v6155, %v6153
    %v6252 = vpack.c.b16 %v6158, %v6156
    %v6253 = vpack.c.b16 %v6159, %v6157
    %v6254 = vpack.c.b16 %v6162, %v6160
    %v6255 = vpack.c.b16 %v6163, %v6161
    %v6256 = vpack.c.b16 %v6166, %v6164
    %v6257 = vpack.c.b16 %v6167, %v6165
    %v6258 = vpack.c.b16 %v6170, %v6168
    %v6259 = vpack.c.b16 %v6171, %v6169
    %v6260 = vpack.c.b16 %v6174, %v6172
    %v6261 = vpack.c.b16 %v6175, %v6173
    %v6262 = vpack.c.b16 %v6178, %v6176
    %v6263 = vpack.c.b16 %v6179, %v6177
    %v6264 = vpack.c.b16 %v6182, %v6180
    %v6265 = vpack.c.b16 %v6183, %v6181
    %v6266 = vpack.c.b16 %v6186, %v6184
    %v6267 = vpack.c.b16 %v6187, %v6185
    %v6268 = vpack.c.b16 %v6190, %v6188
    %v6269 = vpack.c.b16 %v6191, %v6189
    %v6270 = vpack.c.b16 %v6194, %v6192
    %v6271 = vpack.c.b16 %v6195, %v6193
    %v6272 = vpack.c.b16 %v6198, %v6196
    %v6273 = vpack.c.b16 %v6199, %v6197
    %v6274 = vpack.c.b16 %v6202, %v6200
    %v6275 = vpack.c.b16 %v6203, %v6201
    %v6276 = vpack.c.b16 %v6206, %v6204
    %v6277 = vpack.c.b16 %v6207, %v6205
    %v6278 = vpack.c.b16 %v6210, %v6208
    %v6279 = vpack.c.b16 %v6211, %v6209
    %v6280 = vpack.c.b16 %v6214, %v6212
    %v6281 = vpack.c.b16 %v6215, %v6213
    %v6282 = vpack.c.b16 %v6218, %v6216
    %v6283 = vpack.c.b16 %v6219, %v6217
    %6348 = vmatprep.subr.bf16.mxu0 %v6221
    %6349 = vmatpush1.bf16.msra.mxu0 %v6220
    %6350 = vmatprep.subr.bf16.mxu0 %v6223
    %6351 = vmatpush1.bf16.msra.mxu0 %v6222
    %6352 = vmatprep.subr.bf16.mxu0 %v6225
    %6353 = vmatpush1.bf16.msra.mxu0 %v6224
    %6354 = vmatprep.subr.bf16.mxu0 %v6227
    %6355 = vmatpush1.bf16.msra.mxu0 %v6226
    %6356 = vmatprep.subr.bf16.mxu0 %v6229
    %6357 = vmatpush1.bf16.msra.mxu0 %v6228
    %6358 = vmatprep.subr.bf16.mxu0 %v6231
    %6359 = vmatpush1.bf16.msra.mxu0 %v6230
    %6360 = vmatprep.subr.bf16.mxu0 %v6233
    %6361 = vmatpush1.bf16.msra.mxu0 %v6232
    %6362 = vmatprep.subr.bf16.mxu0 %v6235
    %6363 = vmatpush1.bf16.msra.mxu0 %v6234
    %6364 = vmatprep.subr.bf16.mxu0 %v6237
    %6365 = vmatpush1.bf16.msra.mxu0 %v6236
    %6366 = vmatprep.subr.bf16.mxu0 %v6239
    %6367 = vmatpush1.bf16.msra.mxu0 %v6238
    %6368 = vmatprep.subr.bf16.mxu0 %v6241
    %6369 = vmatpush1.bf16.msra.mxu0 %v6240
    %6370 = vmatprep.subr.bf16.mxu0 %v6243
    %6371 = vmatpush1.bf16.msra.mxu0 %v6242
    %6372 = vmatprep.subr.bf16.mxu0 %v6245
    %6373 = vmatpush1.bf16.msra.mxu0 %v6244
    %6374 = vmatprep.subr.bf16.mxu0 %v6247
    %6375 = vmatpush1.bf16.msra.mxu0 %v6246
    %6376 = vmatprep.subr.bf16.mxu0 %v6249
    %6377 = vmatpush1.bf16.msra.mxu0 %v6248
    %6378 = vmatprep.subr.bf16.mxu0 %v6251
    %6379 = vmatpush1.bf16.msra.mxu0 %v6250
    %6380 = vmatprep.mubr.bf16.mxu0 %v5949
    %6381 = vmatmul.mubr.bf16.gmra.mrb[0].mxu0 %v5948
    %v6382 = vpop.f32.mrb[0].mxu0
    %v6383 = vadd.f32 %v6021, %v6382
    %v6384 = vpop.f32.mrb[0].mxu0
    %v6385 = vadd.f32 %v6025, %v6384
    %v6386 = vpop.f32.mrb[0].mxu0
    %v6387 = vadd.f32 %v6021, %v6386
    %v6388 = vpop.f32.mrb[0].mxu0
    %v6389 = vadd.f32 %v6025, %v6388
    %6390 = vdwg.mxu0
    %6391 = vmatprep.subr.bf16.mxu0 %v6253
    %6392 = vmatpush1.bf16.msra.mxu0 %v6252
    %6393 = vmatprep.subr.bf16.mxu0 %v6255
    %6394 = vmatpush1.bf16.msra.mxu0 %v6254
    %6395 = vmatprep.subr.bf16.mxu0 %v6257
    %6396 = vmatpush1.bf16.msra.mxu0 %v6256
    %6397 = vmatprep.subr.bf16.mxu0 %v6259
    %6398 = vmatpush1.bf16.msra.mxu0 %v6258
    %6399 = vmatprep.subr.bf16.mxu0 %v6261
    %6400 = vmatpush1.bf16.msra.mxu0 %v6260
    %6401 = vmatprep.subr.bf16.mxu0 %v6263
    %6402 = vmatpush1.bf16.msra.mxu0 %v6262
    %6403 = vmatprep.subr.bf16.mxu0 %v6265
    %6404 = vmatpush1.bf16.msra.mxu0 %v6264
    %6405 = vmatprep.subr.bf16.mxu0 %v6267
    %6406 = vmatpush1.bf16.msra.mxu0 %v6266
    %6407 = vmatprep.subr.bf16.mxu0 %v6269
    %6408 = vmatpush1.bf16.msra.mxu0 %v6268
    %6409 = vmatprep.subr.bf16.mxu0 %v6271
    %6410 = vmatpush1.bf16.msra.mxu0 %v6270
    %6411 = vmatprep.subr.bf16.mxu0 %v6273
    %6412 = vmatpush1.bf16.msra.mxu0 %v6272
    %6413 = vmatprep.subr.bf16.mxu0 %v6275
    %6414 = vmatpush1.bf16.msra.mxu0 %v6274
    %6415 = vmatprep.subr.bf16.mxu0 %v6277
    %6416 = vmatpush1.bf16.msra.mxu0 %v6276
    %6417 = vmatprep.subr.bf16.mxu0 %v6279
    %6418 = vmatpush1.bf16.msra.mxu0 %v6278
    %6419 = vmatprep.subr.bf16.mxu0 %v6281
    %6420 = vmatpush1.bf16.msra.mxu0 %v6280
    %6421 = vmatprep.subr.bf16.mxu0 %v6283
    %6422 = vmatpush1.bf16.msra.mxu0 %v6282
    %6423 = vmatprep.mubr.bf16.mxu0 %v5951
    %6424 = vmatmul.mubr.bf16.gmra.mrb[0].mxu0 %v5950
    %v6425 = vpop.f32.mrb[0].mxu0
    %v6426 = vadd.f32 %v6383, %v6425
    %v6427 = vpop.f32.mrb[0].mxu0
    %v6428 = vadd.f32 %v6385, %v6427
    %v6429 = vpop.f32.mrb[0].mxu0
    %v6430 = vadd.f32 %v6387, %v6429
    %v6431 = vpop.f32.mrb[0].mxu0
    %v6432 = vadd.f32 %v6389, %v6431
    %6433 = vdwg.mxu0
    %v6434 = vmax.f32 %v6426, 0.0
    %v6435 = vmax.f32 %v6428, 0.0
    %v6436 = vmax.f32 %v6430, 0.0
    %v6437 = vmax.f32 %v6432, 0.0
    %v6438 = vpack.c.bf16 %v6436, %v6434
    %v6439 = vpack.c.bf16 %v6437, %v6435
    %v6440 = vld [vmem:[#allocation9] sm:$0xf]
    %v6441 = vld [vmem:[#allocation9 + $0x4] sm:$0xf]
    %v6442 = vld [vmem:[#allocation9 + $0x8] sm:$0xf]
    %v6443 = vld [vmem:[#allocation9 + $0xc] sm:$0xf]
    %v6444 = vld [vmem:[#allocation9 + $0x10] sm:$0xf]
    %v6445 = vld [vmem:[#allocation9 + $0x14] sm:$0xf]
    %v6446 = vld [vmem:[#allocation9 + $0x18] sm:$0xf]
    %v6447 = vld [vmem:[#allocation9 + $0x1c] sm:$0xf]
    %v6448 = vld [vmem:[#allocation9 + $0x20] sm:$0xf]
    %v6449 = vld [vmem:[#allocation9 + $0x24] sm:$0xf]
    %v6450 = vld [vmem:[#allocation9 + $0x28] sm:$0xf]
    %v6451 = vld [vmem:[#allocation9 + $0x2c] sm:$0xf]
    %v6452 = vld [vmem:[#allocation9 + $0x30] sm:$0xf]
    %v6453 = vld [vmem:[#allocation9 + $0x34] sm:$0xf]
    %v6454 = vld [vmem:[#allocation9 + $0x38] sm:$0xf]
    %v6455 = vld [vmem:[#allocation9 + $0x3c] sm:$0xf]
    %v6456 = vld [vmem:[#allocation9 + $0x40] sm:$0xf]
    %v6457 = vld [vmem:[#allocation9 + $0x44] sm:$0xf]
    %v6458 = vld [vmem:[#allocation9 + $0x48] sm:$0xf]
    %v6459 = vld [vmem:[#allocation9 + $0x4c] sm:$0xf]
    %v6460 = vld [vmem:[#allocation9 + $0x50] sm:$0xf]
    %v6461 = vld [vmem:[#allocation9 + $0x54] sm:$0xf]
    %v6462 = vld [vmem:[#allocation9 + $0x58] sm:$0xf]
    %v6463 = vld [vmem:[#allocation9 + $0x5c] sm:$0xf]
    %v6464 = vld [vmem:[#allocation9 + $0x60] sm:$0xf]
    %v6465 = vld [vmem:[#allocation9 + $0x64] sm:$0xf]
    %v6466 = vld [vmem:[#allocation9 + $0x68] sm:$0xf]
    %v6467 = vld [vmem:[#allocation9 + $0x6c] sm:$0xf]
    %v6468 = vld [vmem:[#allocation9 + $0x70] sm:$0xf]
    %v6469 = vld [vmem:[#allocation9 + $0x74] sm:$0xf]
    %v6470 = vld [vmem:[#allocation9 + $0x78] sm:$0xf]
    %v6471 = vld [vmem:[#allocation9 + $0x7c] sm:$0xf]
    %v6472 = vld [vmem:[#allocation10] sm:$0x1]
    %v6474 = vlaneseq
    %v6475 = vshrl.u32 %v6474, 7
    %v6476 = vsub.s32 0, %v6475
    %v6477 = vrot.slane %v6472, %v6476
    %v6511 = vunpack.c.l.b16 %v6440
    %v6512 = vunpack.c.l.b16 %v6441
    %v6513 = vunpack.c.l.b16 %v6442
    %v6514 = vunpack.c.l.b16 %v6443
    %v6515 = vunpack.c.l.b16 %v6444
    %v6516 = vunpack.c.l.b16 %v6445
    %v6517 = vunpack.c.l.b16 %v6446
    %v6518 = vunpack.c.l.b16 %v6447
    %v6519 = vunpack.c.l.b16 %v6448
    %v6520 = vunpack.c.l.b16 %v6449
    %v6521 = vunpack.c.l.b16 %v6450
    %v6522 = vunpack.c.l.b16 %v6451
    %v6523 = vunpack.c.l.b16 %v6452
    %v6524 = vunpack.c.l.b16 %v6453
    %v6525 = vunpack.c.l.b16 %v6454
    %v6526 = vunpack.c.l.b16 %v6455
    %v6527 = vunpack.c.l.b16 %v6456
    %v6528 = vunpack.c.l.b16 %v6457
    %v6529 = vunpack.c.l.b16 %v6458
    %v6530 = vunpack.c.l.b16 %v6459
    %v6531 = vunpack.c.l.b16 %v6460
    %v6532 = vunpack.c.l.b16 %v6461
    %v6533 = vunpack.c.l.b16 %v6462
    %v6534 = vunpack.c.l.b16 %v6463
    %v6535 = vunpack.c.l.b16 %v6464
    %v6536 = vunpack.c.l.b16 %v6465
    %v6537 = vunpack.c.l.b16 %v6466
    %v6538 = vunpack.c.l.b16 %v6467
    %v6539 = vunpack.c.l.b16 %v6468
    %v6540 = vunpack.c.l.b16 %v6469
    %v6541 = vunpack.c.l.b16 %v6470
    %v6542 = vunpack.c.l.b16 %v6471
    %v6543 = vpack.c.b16 %v6512, %v6511
    %v6544 = vpack.c.b16 %v6514, %v6513
    %v6545 = vpack.c.b16 %v6516, %v6515
    %v6546 = vpack.c.b16 %v6518, %v6517
    %v6547 = vpack.c.b16 %v6520, %v6519
    %v6548 = vpack.c.b16 %v6522, %v6521
    %v6549 = vpack.c.b16 %v6524, %v6523
    %v6550 = vpack.c.b16 %v6526, %v6525
    %v6551 = vpack.c.b16 %v6528, %v6527
    %v6552 = vpack.c.b16 %v6530, %v6529
    %v6553 = vpack.c.b16 %v6532, %v6531
    %v6554 = vpack.c.b16 %v6534, %v6533
    %v6555 = vpack.c.b16 %v6536, %v6535
    %v6556 = vpack.c.b16 %v6538, %v6537
    %v6557 = vpack.c.b16 %v6540, %v6539
    %v6558 = vpack.c.b16 %v6542, %v6541
    %6575 = vmatprep.subr.bf16.mxu0 0
    %6576 = vmatpush1.bf16.msra.mxu0 %v6543
    %6577 = vmatprep.subr.bf16.mxu0 0
    %6578 = vmatpush1.bf16.msra.mxu0 %v6544
    %6579 = vmatprep.subr.bf16.mxu0 0
    %6580 = vmatpush1.bf16.msra.mxu0 %v6545
    %6581 = vmatprep.subr.bf16.mxu0 0
    %6582 = vmatpush1.bf16.msra.mxu0 %v6546
    %6583 = vmatprep.subr.bf16.mxu0 0
    %6584 = vmatpush1.bf16.msra.mxu0 %v6547
    %6585 = vmatprep.subr.bf16.mxu0 0
    %6586 = vmatpush1.bf16.msra.mxu0 %v6548
    %6587 = vmatprep.subr.bf16.mxu0 0
    %6588 = vmatpush1.bf16.msra.mxu0 %v6549
    %6589 = vmatprep.subr.bf16.mxu0 0
    %6590 = vmatpush1.bf16.msra.mxu0 %v6550
    %6591 = vmatprep.subr.bf16.mxu0 0
    %6592 = vmatpush1.bf16.msra.mxu0 %v6551
    %6593 = vmatprep.subr.bf16.mxu0 0
    %6594 = vmatpush1.bf16.msra.mxu0 %v6552
    %6595 = vmatprep.subr.bf16.mxu0 0
    %6596 = vmatpush1.bf16.msra.mxu0 %v6553
    %6597 = vmatprep.subr.bf16.mxu0 0
    %6598 = vmatpush1.bf16.msra.mxu0 %v6554
    %6599 = vmatprep.subr.bf16.mxu0 0
    %6600 = vmatpush1.bf16.msra.mxu0 %v6555
    %6601 = vmatprep.subr.bf16.mxu0 0
    %6602 = vmatpush1.bf16.msra.mxu0 %v6556
    %6603 = vmatprep.subr.bf16.mxu0 0
    %6604 = vmatpush1.bf16.msra.mxu0 %v6557
    %6605 = vmatprep.subr.bf16.mxu0 0
    %6606 = vmatpush1.bf16.msra.mxu0 %v6558
    %6607 = vmatprep.mubr.bf16.mxu0 %v6439
    %6608 = vmatmul.mubr.bf16.gmra.mrb[0].mxu0 %v6438
    %v6609 = vpop.f32.mrb[0].mxu0
    %v6610 = vadd.f32 %v6477, %v6609
    %v6611 = vpop.f32.mrb[0].mxu0
    %v6612 = vpop.f32.mrb[0].mxu0
    %v6613 = vadd.f32 %v6477, %v6612
    %v6614 = vpop.f32.mrb[0].mxu0
    %6615 = vdwg.mxu0
    %v6616 = vmax.f32 %v6610, 0.0
    %v6617 = vmax.f32 %v6613, 0.0
    %v6618 = vpack.c.bf16 %v6617, %v6616
    %v6619 = vld [vmem:[#allocation12] sm:$0xf]
    %v6620 = vld [vmem:[#allocation12 + $0x4] sm:$0xf]
    %v6621 = vld [vmem:[#allocation12 + $0x8] sm:$0xf]
    %v6622 = vld [vmem:[#allocation12 + $0xc] sm:$0xf]
    %v6623 = vld [vmem:[#allocation12 + $0x10] sm:$0xf]
    %v6624 = vld [vmem:[#allocation12 + $0x14] sm:$0xf]
    %v6625 = vld [vmem:[#allocation12 + $0x18] sm:$0xf]
    %v6626 = vld [vmem:[#allocation12 + $0x1c] sm:$0xf]
    %v6627 = vld [vmem:[#allocation12 + $0x20] sm:$0xf]
    %v6628 = vld [vmem:[#allocation12 + $0x24] sm:$0xf]
    %v6629 = vld [vmem:[#allocation12 + $0x28] sm:$0xf]
    %v6630 = vld [vmem:[#allocation12 + $0x2c] sm:$0xf]
    %v6631 = vld [vmem:[#allocation12 + $0x30] sm:$0xf]
    %v6632 = vld [vmem:[#allocation12 + $0x34] sm:$0xf]
    %v6633 = vld [vmem:[#allocation12 + $0x38] sm:$0xf]
    %v6634 = vld [vmem:[#allocation12 + $0x3c] sm:$0xf]
    %v6635 = vld [vmem:[#allocation13] sm:$0x1]
    %v6637 = vlaneseq
    %v6638 = vshrl.u32 %v6637, 7
    %v6639 = vsub.s32 0, %v6638
    %v6640 = vrot.slane %v6635, %v6639
    %v6658 = vunpack.c.l.b16 %v6619
    %v6659 = vunpack.c.l.b16 %v6620
    %v6660 = vunpack.c.l.b16 %v6621
    %v6661 = vunpack.c.l.b16 %v6622
    %v6662 = vunpack.c.l.b16 %v6623
    %v6663 = vunpack.c.l.b16 %v6624
    %v6664 = vunpack.c.l.b16 %v6625
    %v6665 = vunpack.c.l.b16 %v6626
    %v6666 = vunpack.c.l.b16 %v6627
    %v6667 = vunpack.c.l.b16 %v6628
    %v6668 = vunpack.c.l.b16 %v6629
    %v6669 = vunpack.c.l.b16 %v6630
    %v6670 = vunpack.c.l.b16 %v6631
    %v6671 = vunpack.c.l.b16 %v6632
    %v6672 = vunpack.c.l.b16 %v6633
    %v6673 = vunpack.c.l.b16 %v6634
    %v6674 = vpack.c.b16 %v6659, %v6658
    %v6675 = vpack.c.b16 %v6661, %v6660
    %v6676 = vpack.c.b16 %v6663, %v6662
    %v6677 = vpack.c.b16 %v6665, %v6664
    %v6678 = vpack.c.b16 %v6667, %v6666
    %v6679 = vpack.c.b16 %v6669, %v6668
    %v6680 = vpack.c.b16 %v6671, %v6670
    %v6681 = vpack.c.b16 %v6673, %v6672
    %6690 = vmatprep.subr.bf16.mxu0 0
    %6691 = vmatpush1.bf16.msra.mxu0 %v6674
    %6692 = vmatprep.subr.bf16.mxu0 0
    %6693 = vmatpush1.bf16.msra.mxu0 %v6675
    %6694 = vmatprep.subr.bf16.mxu0 0
    %6695 = vmatpush1.bf16.msra.mxu0 %v6676
    %6696 = vmatprep.subr.bf16.mxu0 0
    %6697 = vmatpush1.bf16.msra.mxu0 %v6677
    %6698 = vmatprep.subr.bf16.mxu0 0
    %6699 = vmatpush1.bf16.msra.mxu0 %v6678
    %6700 = vmatprep.subr.bf16.mxu0 0
    %6701 = vmatpush1.bf16.msra.mxu0 %v6679
    %6702 = vmatprep.subr.bf16.mxu0 0
    %6703 = vmatpush1.bf16.msra.mxu0 %v6680
    %6704 = vmatprep.subr.bf16.mxu0 0
    %6705 = vmatpush1.bf16.msra.mxu0 %v6681
    %6706 = vmatprep.subr.bf16.mxu0 0
    %6707 = vmatpush1.bf16.msra.mxu0 0
    %6708 = vmatprep.subr.bf16.mxu0 0
    %6709 = vmatpush1.bf16.msra.mxu0 0
    %6710 = vmatprep.subr.bf16.mxu0 0
    %6711 = vmatpush1.bf16.msra.mxu0 0
    %6712 = vmatprep.subr.bf16.mxu0 0
    %6713 = vmatpush1.bf16.msra.mxu0 0
    %6714 = vmatprep.subr.bf16.mxu0 0
    %6715 = vmatpush1.bf16.msra.mxu0 0
    %6716 = vmatprep.subr.bf16.mxu0 0
    %6717 = vmatpush1.bf16.msra.mxu0 0
    %6718 = vmatprep.subr.bf16.mxu0 0
    %6719 = vmatpush1.bf16.msra.mxu0 0
    %6720 = vmatprep.subr.bf16.mxu0 0
    %6721 = vmatpush1.bf16.msra.mxu0 0
    %6722 = vmatprep.mubr.bf16.mxu0 0
    %6723 = vmatmul.mubr.bf16.gmra.mrb[0].mxu0 %v6618
    %v6724 = vpop.f32.mrb[0].mxu0
    %v6725 = vadd.f32 %v6640, %v6724
    %v6726 = vpop.f32.mrb[0].mxu0
    %v6727 = vpop.f32.mrb[0].mxu0
    %v6728 = vadd.f32 %v6640, %v6727
    %v6729 = vpop.f32.mrb[0].mxu0
    %6730 = vdwg.mxu0
    %6731 = vst [vmem:[%s9] sm:$0xff] %v6725
    %6732 = vst [vmem:[%s9 + $0x8] sm:$0xff] %v6728
    // Predicated region
    $region70: #{mlp_forward.1} parent=1 // pred_check
      _
    $region71: #{mlp_forward.1} parent=1 // pred_check_branch
      %6734 = sbr.rel (0) target = $region73
    $region72: #{mlp_forward.1} parent=1 // pred_region
      _
    $region73: #{mlp_forward.1} parent=1 // pred_fallthru
      _
    // Predicated region
    $region74: #{mlp_forward.1} parent=1 // pred_check
      _
    $region75: #{mlp_forward.1} parent=1 // pred_check_branch
      %6736 = sbr.rel (0) target = $region77
    $region76: #{mlp_forward.1} parent=1 // pred_region
      _
    $region77: #{mlp_forward.1} parent=1 // pred_fallthru
      _
    %6737 = vsyncpa [#allocation3], 1
    %6738 = vsyncpa [#allocation5], 1
    %6739 = vsyncpa [#allocation8], 1
    %6740 = vsyncpa [#allocation11], 1
    %6741 = vsyncpa [#allocation14], 1

</llo_original>
